<compile_context>
chip_gen: v7x
topology: tpu7x:2x2x1
jax: 0.10.0
libtpu: 0.0.40
codegen_flags: <defaults>
</compile_context>

<pallas_src>
import numpy as np
import jax
import jax.numpy as jnp
from jax import lax
from jax.experimental import pallas as pl
from jax.experimental.pallas import tpu as pltpu

NEG_BIG = 1e30       # finite masking sentinel (so 0 * sentinel stays finite)
PAD = 128            # lane-dense width for every feature / message / hidden slab
N_AGG = 5            # sum, mean, std, max, min
N_SCALER = 3         # identity, amplification, attenuation
SRC_BLK = 16         # source-row block for the masked max/min fori_loop
MATMUL_WEIGHTS = ("wfused", "wagg", "wlin")   # stored bf16 for the MXU


# ----------------------------- Pallas kernel -------------------------------

def fused_pna_kernel(x_ref, a_ref, bias_ref, deg_ref, samp_ref, satt_ref,
                     nodew_ref, pool_ref,
                     wfused_ref, bpre_ref, wagg_ref, bpost_ref,
                     wlin_ref, blin_ref, gamma_ref, beta_ref,
                     wout_ref, bout_ref,
                     o_ref,
                     ps_ref, agg_ref):
    """All PNAConv layers + BatchNorm(batch stats) + ReLU + mean-pool + Linear(1)."""
    A = a_ref[...]                       # [N, N] bf16, A[i, j] = 1 iff edge j -> i
    deg = deg_ref[...]                   # [N, 1] in-degree (f32)
    s_amp = samp_ref[...]                # [N, 1] log(clamp(deg,1)+1)/avg_log
    s_att = satt_ref[...]                # [N, 1] avg_log/log(clamp(deg,1)+1)
    node_w = nodew_ref[...]              # [N, 1] 1/n_real for real nodes, 0 for padding

    degc = jnp.maximum(deg, 1.0)
    inv_deg = pl.reciprocal(degc)        # exact: feeds mean/std aggregators (review concern)
    has_nbr = (deg > 0.0).astype(jnp.float32)

    n = A.shape[0]
    num_layers = wfused_ref.shape[0]
    n_blk = n // SRC_BLK

    h = x_ref[...]                       # [N, PAD] f32 lane-dense node features
    for l in range(num_layers):
        hb = h.astype(jnp.bfloat16)

        # one wide bf16 MXU pass: h @ [Wdst | Wsrc | Wx]  -> [N, 3*PAD]
        r = jnp.dot(hb, wfused_ref[l], preferred_element_type=jnp.float32)
        p_dst = r[:, 0:PAD]
        p_src = r[:, PAD:2 * PAD]
        hx = r[:, 2 * PAD:3 * PAD]
        msg_base = p_dst + bpre_ref[l]                       # destination half + pre_nn bias

        # p_src and p_src^2 into the bf16 scratch -> single wide adjacency matmul
        ps_ref[:, 0:PAD] = p_src.astype(jnp.bfloat16)
        ps_ref[:, PAD:2 * PAD] = (p_src * p_src).astype(jnp.bfloat16)
        s = jnp.dot(A, ps_ref[...], preferred_element_type=jnp.float32)      # [N, 2*PAD]
        s_src = s[:, 0:PAD]
        s_src2 = s[:, PAD:2 * PAD]
        mean_src = s_src * inv_deg
        mean_src2 = s_src2 * inv_deg

        sum_agg = deg * msg_base + s_src
        mean_agg = (msg_base + mean_src) * has_nbr
        # E[x^2]-E[x]^2 matches PyG VarAggregation (std of shifted msgs == std of p_src);
        # empty neighbourhoods give sqrt(1e-5), matching PyG StdAggregation.
        var = mean_src2 - mean_src * mean_src
        std_agg = jnp.sqrt(jnp.maximum(var, 0.0) + 1e-5)

        # blocked masked max/min: additive-bias masking (0 / -1e30), bounded fori_loop
        def src_body(jb, carry):
            mx, mn = carry
            j0 = pl.multiple_of(jb * SRC_BLK, SRC_BLK)
            p_blk = ps_ref[pl.ds(j0, SRC_BLK), pl.ds(0, PAD)].astype(jnp.float32)  # [B, PAD]
            b_blk = bias_ref[pl.ds(j0, SRC_BLK), :]                                # [B, N]
            mx = jnp.maximum(mx, jnp.max(p_blk[:, None, :] + b_blk[:, :, None], axis=0))
            mn = jnp.minimum(mn, jnp.min(p_blk[:, None, :] - b_blk[:, :, None], axis=0))
            return mx, mn

        max_src, min_src = lax.fori_loop(
            0, n_blk, src_body,
            (jnp.full((n, PAD), -NEG_BIG, jnp.float32),
             jnp.full((n, PAD), NEG_BIG, jnp.float32)))
        max_agg = (msg_base + max_src) * has_nbr
        min_agg = (msg_base + min_src) * has_nbr

        # five aggregator slabs straight into the [N, 5*PAD] bf16 scratch (no concat copy)
        agg_ref[:, 0 * PAD:1 * PAD] = sum_agg.astype(jnp.bfloat16)
        agg_ref[:, 1 * PAD:2 * PAD] = mean_agg.astype(jnp.bfloat16)
        agg_ref[:, 2 * PAD:3 * PAD] = std_agg.astype(jnp.bfloat16)
        agg_ref[:, 3 * PAD:4 * PAD] = max_agg.astype(jnp.bfloat16)
        agg_ref[:, 4 * PAD:5 * PAD] = min_agg.astype(jnp.bfloat16)

        # post_nn with degree scalers commuted past the matmul (columns = [id | amp | att])
        z = jnp.dot(agg_ref[...], wagg_ref[l], preferred_element_type=jnp.float32)   # [N, 3*PAD]
        post = (hx + z[:, 0:PAD]
                + s_amp * z[:, PAD:2 * PAD]
                + s_att * z[:, 2 * PAD:3 * PAD]
                + bpost_ref[l])

        # PNAConv.lin
        out = jnp.dot(post.astype(jnp.bfloat16), wlin_ref[l],
                      preferred_element_type=jnp.float32) + blin_ref[l]

        # BatchNorm1d (training-mode batch stats, real nodes only, f32) + ReLU
        mu = jnp.sum(out * node_w, axis=0, keepdims=True)
        d = out - mu
        var_bn = jnp.sum(node_w * d * d, axis=0, keepdims=True)
        y = d * lax.rsqrt(var_bn + 1e-5)
        y = y * gamma_ref[l] + beta_ref[l]           # padded gamma cols are 0 -> stay 0
        h = jnp.maximum(y, 0.0)

    # global_mean_pool (pooling-matrix matmul) + final Linear(hidden, 1)
    pooled = jnp.dot(pool_ref[...], h, preferred_element_type=jnp.float32)    # [G, PAD]
    o_ref[...] = (jnp.dot(pooled, wout_ref[...], preferred_element_type=jnp.float32)
                  + bout_ref[...])                                            # [G, 1]


# ----------------------------- wrappers ------------------------------------

def _vmem_specs(k):
    return [pl.BlockSpec(memory_space=pltpu.MemorySpace.VMEM) for _ in range(k)]


def fused_pna_forward(x_pad, A_bf16, bias_t, deg, s_amp, s_att, node_w, pool,
                      stacked, w_out_pad, b_out):
    n = x_pad.shape[0]
    g = pool.shape[0]

    # rough VMEM footprint (inputs + scratch + fori-body temporaries), with headroom
    args = (x_pad, A_bf16, bias_t, deg, s_amp, s_att, node_w, pool, w_out_pad, b_out)
    in_bytes = sum(int(np.prod(a.shape)) * a.dtype.itemsize for a in args)
    in_bytes += sum(int(np.prod(v.shape)) * v.dtype.itemsize for v in stacked.values())
    scratch_bytes = n * 2 * PAD * 2 + n * N_AGG * PAD * 2
    temp_bytes = 4 * SRC_BLK * n * PAD * 4 + 12 * n * PAD * 4
    vmem_limit = int(min(max(2 * (in_bytes + scratch_bytes + temp_bytes) + (2 << 20),
                             8 << 20), 48 << 20))

    # TODO(synk): for graphs where A/bias + activations exceed VMEM (esp. v7x 64 MiB)
    # add a parallel destination-row grid (row tiles of A/bias, two-pass BatchNorm) or
    # switch aggregation to a CSR neighbour gather with scalar-prefetched row pointers;
    # deep stacks should keep per-layer weights in HBM (memory_space=pl.ANY) and
    # double-buffer them.
    return pl.pallas_call(
        fused_pna_kernel,
        out_shape=jax.ShapeDtypeStruct((g, 1), jnp.float32),
        in_specs=_vmem_specs(18),
        out_specs=pl.BlockSpec(memory_space=pltpu.MemorySpace.VMEM),
        scratch_shapes=[pltpu.VMEM((n, 2 * PAD), jnp.bfloat16),       # [p_src | p_src^2]
                        pltpu.VMEM((n, N_AGG * PAD), jnp.bfloat16)],  # 5 aggregator slabs
        compiler_params=pltpu.CompilerParams(vmem_limit_bytes=vmem_limit),
    )(x_pad, A_bf16, bias_t, deg, s_amp, s_att, node_w, pool,
      stacked["wfused"], stacked["bpre"], stacked["wagg"], stacked["bpost"],
      stacked["wlin"], stacked["blin"], stacked["gamma"], stacked["beta"],
      w_out_pad, b_out)


# ----------------------------- parameter glue -------------------------------

def _uniform(key, shape, fan_in):
    bound = 1.0 / np.sqrt(fan_in)
    return np.asarray(jax.random.uniform(key, shape, jnp.float32, -bound, bound))


def init_pna_layer(key, f_in, hidden, towers=3):
    """Per-layer PNAConv + BatchNorm weights packed into a lane-dense (128-padded)
    block-structured layout (pure glue / deterministic init)."""
    f_out = hidden // towers
    in_post = (N_AGG * N_SCALER + 1) * f_in
    keys = jax.random.split(key, 4 * towers + 2)
    ki = 0
    W_pre, b_pre, W_post, b_post = [], [], [], []
    for _ in range(towers):
        W_pre.append(_uniform(keys[ki], (f_in, 2 * f_in), 2 * f_in)); ki += 1
        b_pre.append(_uniform(keys[ki], (f_in,), 2 * f_in)); ki += 1
        W_post.append(_uniform(keys[ki], (f_out, in_post), in_post)); ki += 1
        b_post.append(_uniform(keys[ki], (f_out,), in_post)); ki += 1
    W_lin = _uniform(keys[ki], (hidden, towers * f_out), towers * f_out); ki += 1
    b_lin = _uniform(keys[ki], (hidden,), towers * f_out); ki += 1

    # fused h-side weight: columns = [Wdst | Wsrc | Wx], towers stacked on lanes
    wfused = np.zeros((PAD, 3 * PAD), np.float32)
    bpre = np.zeros((1, PAD), np.float32)
    for t in range(towers):
        wfused[:f_in, 0 * PAD + t * f_in:0 * PAD + (t + 1) * f_in] = W_pre[t][:, :f_in].T
        wfused[:f_in, 1 * PAD + t * f_in:1 * PAD + (t + 1) * f_in] = W_pre[t][:, f_in:].T
        wfused[:f_in, 2 * PAD + t * f_out:2 * PAD + (t + 1) * f_out] = W_post[t][:, :f_in].T
        bpre[0, t * f_in:(t + 1) * f_in] = b_pre[t]

    # post_nn aggregator block per scaler, columns = [identity | amplification | attenuation]
    wagg = np.zeros((N_AGG * PAD, N_SCALER * PAD), np.float32)
    bpost = np.zeros((1, PAD), np.float32)
    for t in range(towers):
        Wp = W_post[t]                       # [f_out, in_post]
        for s in range(N_SCALER):
            for a in range(N_AGG):
                src = f_in + (s * N_AGG + a) * f_in
                wagg[a * PAD + t * f_in: a * PAD + (t + 1) * f_in,
                     s * PAD + t * f_out: s * PAD + (t + 1) * f_out] = Wp[:, src:src + f_in].T
        bpost[0, t * f_out:(t + 1) * f_out] = b_post[t]

    wlin = np.zeros((PAD, PAD), np.float32)
    wlin[:towers * f_out, :hidden] = W_lin.T
    blin = np.zeros((1, PAD), np.float32); blin[0, :hidden] = b_lin
    gamma = np.zeros((1, PAD), np.float32); gamma[0, :hidden] = 1.0   # padded cols forced to 0
    beta = np.zeros((1, PAD), np.float32)

    return dict(wfused=wfused, bpre=bpre, wagg=wagg, bpost=bpost,
                wlin=wlin, blin=blin, gamma=gamma, beta=beta)


def stack_layer_params(layer_params):
    """All layers share padded shapes -> stack along [L, ...]; matmul weights in bf16."""
    stacked = {}
    for k in layer_params[0]:
        arr = np.stack([p[k] for p in layer_params], axis=0)
        dt = jnp.bfloat16 if k in MATMUL_WEIGHTS else jnp.float32
        stacked[k] = jnp.asarray(arr, dtype=dt)
    return stacked


def my_pna_forward(x, edge_index_np, batch_np, num_graphs, stacked, w_out_pad, b_out):
    n_real, f_in = x.shape
    src = edge_index_np[0].astype(np.int64)
    dst = edge_index_np[1].astype(np.int64)

    # pad node count so SRC_BLK tiles the source axis exactly (padded nodes are isolated)
    n = int(np.ceil(n_real / SRC_BLK)) * SRC_BLK

    # dense in-adjacency A[i, j] = 1 iff edge j -> i (graph preprocessing = glue)
    A_np = np.zeros((n, n), np.float32)
    np.add.at(A_np, (dst, src), 1.0)
    deg_np = A_np.sum(axis=1)

    # pre_deg(): degree histogram of the "dataset" (here: this one graph batch)
    # TODO(synk): PNAConv normally receives a dataset-level degree histogram.
    hist = np.bincount(deg_np[:n_real].astype(np.int64))
    bins = np.arange(hist.shape[0], dtype=np.float64)
    avg_log = float((np.log(bins + 1.0) * hist).sum() / hist.sum())

    degc = np.maximum(deg_np, 1.0)
    s_amp_np = (np.log(degc + 1.0) / avg_log).astype(np.float32)
    s_att_np = (avg_log / np.log(degc + 1.0)).astype(np.float32)

    # additive neighbour mask, transposed to [src, dst]: 0 on edges, -1e30 elsewhere.
    # Built once here so the per-layer loop never recomputes any mask math.
    bias_t_np = ((np.minimum(A_np, 1.0).T - 1.0) * NEG_BIG).astype(np.float32)

    # global_mean_pool as a [G, N] pooling matrix (padded node columns stay 0)
    onehot = (batch_np[None, :] == np.arange(num_graphs)[:, None]).astype(np.float32)
    counts = np.maximum(onehot.sum(axis=1, keepdims=True), 1.0)
    pool_np = np.zeros((num_graphs, n), np.float32)
    pool_np[:, :n_real] = onehot / counts

    node_w_np = np.zeros((n, 1), np.float32)
    node_w_np[:n_real, 0] = 1.0 / float(n_real)     # BatchNorm stats over real nodes only

    x_pad = np.zeros((n, PAD), np.float32)
    x_pad[:n_real, :f_in] = np.asarray(x)

    return fused_pna_forward(
        jnp.asarray(x_pad),
        jnp.asarray(A_np, dtype=jnp.bfloat16),       # 0/1 adjacency is exact in bf16
        jnp.asarray(bias_t_np),
        jnp.asarray(deg_np[:, None].astype(np.float32)),
        jnp.asarray(s_amp_np[:, None]),
        jnp.asarray(s_att_np[:, None]),
        jnp.asarray(node_w_np),
        jnp.asarray(pool_np),
        stacked, w_out_pad, b_out)


# ----------------------------- main -----------------------------------------

if __name__ == "__main__":
    key = jax.random.PRNGKey(0)
    N, G = 16, 2
    in_channels, hidden, num_layers, towers = 8, 24, 2, 3   # hidden % towers == 0

    # two graphs of 8 nodes each: bidirectional ring + a few chords (varied degrees)
    edges = []
    for g in range(G):
        off = g * 8
        for i in range(8):
            a, b = off + i, off + (i + 1) % 8
            edges.append((a, b))
            edges.append((b, a))
        edges.append((off + 0, off + 3))
        edges.append((off + 5, off + 1))
        edges.append((off + 2, off + 6))
    edge_index_np = np.array(edges, dtype=np.int32).T          # [2, E] row0=src, row1=dst
    batch_np = np.repeat(np.arange(G, dtype=np.int32), 8)      # [N]

    kx, kp, ko = jax.random.split(key, 3)
    x = jax.random.normal(kx, (N, in_channels), jnp.float32)

    layer_keys = jax.random.split(kp, num_layers)
    layer_params = [init_pna_layer(layer_keys[0], in_channels, hidden, towers)]
    for l in range(1, num_layers):
        layer_params.append(init_pna_layer(layer_keys[l], hidden, hidden, towers))
    stacked = stack_layer_params(layer_params)

    kw, kb = jax.random.split(ko)
    w_out = _uniform(kw, (hidden, 1), hidden)
    b_out = jnp.asarray(_uniform(kb, (1, 1), hidden))
    w_out_pad = jnp.zeros((PAD, 1), jnp.float32).at[:hidden, :].set(jnp.asarray(w_out))

    out = my_pna_forward(x, edge_index_np, batch_np, G, stacked, w_out_pad, b_out)
    out = jax.block_until_ready(out)
    assert out.shape == (G, 1) and bool(jnp.all(jnp.isfinite(out)))
    # TODO(synk): BatchNorm running-stat (momentum) buffers are stateful training
    # bookkeeping and are not part of this forward kernel.
    print("KERNEL_OK")
</pallas_src>

<mosaic_0001>
module attributes {stable_mosaic.version = 11 : i64} {
  func.func @fused_pna_kernel(%arg0: memref<16x128xf32, #tpu.memory_space<vmem>>, %arg1: memref<16x16xbf16, #tpu.memory_space<vmem>>, %arg2: memref<16x16xf32, #tpu.memory_space<vmem>>, %arg3: memref<16x1xf32, #tpu.memory_space<vmem>>, %arg4: memref<16x1xf32, #tpu.memory_space<vmem>>, %arg5: memref<16x1xf32, #tpu.memory_space<vmem>>, %arg6: memref<16x1xf32, #tpu.memory_space<vmem>>, %arg7: memref<2x16xf32, #tpu.memory_space<vmem>>, %arg8: memref<2x128x384xbf16, #tpu.memory_space<vmem>>, %arg9: memref<2x1x128xf32, #tpu.memory_space<vmem>>, %arg10: memref<2x640x384xbf16, #tpu.memory_space<vmem>>, %arg11: memref<2x1x128xf32, #tpu.memory_space<vmem>>, %arg12: memref<2x128x128xbf16, #tpu.memory_space<vmem>>, %arg13: memref<2x1x128xf32, #tpu.memory_space<vmem>>, %arg14: memref<2x1x128xf32, #tpu.memory_space<vmem>>, %arg15: memref<2x1x128xf32, #tpu.memory_space<vmem>>, %arg16: memref<128x1xf32, #tpu.memory_space<vmem>>, %arg17: memref<1x1xf32, #tpu.memory_space<vmem>>, %arg18: memref<2x1xf32, #tpu.memory_space<vmem>>, %arg19: memref<16x256xbf16, #tpu.memory_space<vmem>>, %arg20: memref<16x640xbf16, #tpu.memory_space<vmem>>) attributes {dimension_semantics = [], scalar_prefetch = 0 : i64, scratch_operands = 2 : i64, tpu.core_type = #tpu.core_type<tc>} {
    %c0 = arith.constant 0 : index
    %c0_0 = arith.constant 0 : index
    %0 = vector.load %arg1[%c0, %c0_0] : memref<16x16xbf16, #tpu.memory_space<vmem>>, vector<16x16xbf16>
    %c0_1 = arith.constant 0 : index
    %c0_2 = arith.constant 0 : index
    %1 = vector.load %arg3[%c0_1, %c0_2] : memref<16x1xf32, #tpu.memory_space<vmem>>, vector<16x1xf32>
    %c0_3 = arith.constant 0 : index
    %c0_4 = arith.constant 0 : index
    %2 = vector.load %arg4[%c0_3, %c0_4] : memref<16x1xf32, #tpu.memory_space<vmem>>, vector<16x1xf32>
    %c0_5 = arith.constant 0 : index
    %c0_6 = arith.constant 0 : index
    %3 = vector.load %arg5[%c0_5, %c0_6] : memref<16x1xf32, #tpu.memory_space<vmem>>, vector<16x1xf32>
    %c0_7 = arith.constant 0 : index
    %c0_8 = arith.constant 0 : index
    %4 = vector.load %arg6[%c0_7, %c0_8] : memref<16x1xf32, #tpu.memory_space<vmem>>, vector<16x1xf32>
    %cst = arith.constant 1.000000e+00 : f32
    %5 = vector.broadcast %cst : f32 to vector<16x1xf32>
    %6 = arith.maximumf %1, %5 : vector<16x1xf32>
    %7 = tpu.reciprocal %6 : vector<16x1xf32> -> vector<16x1xf32>
    %cst_9 = arith.constant 0.000000e+00 : f32
    %8 = vector.broadcast %cst_9 : f32 to vector<16x1xf32>
    %9 = arith.cmpf ogt, %1, %8 : vector<16x1xf32>
    %10 = arith.extui %9 : vector<16x1xi1> to vector<16x1xi32>
    %11 = arith.sitofp %10 : vector<16x1xi32> to vector<16x1xf32>
    %c0_10 = arith.constant 0 : index
    %c0_11 = arith.constant 0 : index
    %12 = vector.load %arg0[%c0_10, %c0_11] : memref<16x128xf32, #tpu.memory_space<vmem>>, vector<16x128xf32>
    %13 = arith.truncf %12 : vector<16x128xf32> to vector<16x128xbf16>
    %c0_12 = arith.constant 0 : index
    %c0_13 = arith.constant 0 : index
    %c0_14 = arith.constant 0 : index
    %14 = vector.load %arg8[%c0_12, %c0_13, %c0_14] : memref<2x128x384xbf16, #tpu.memory_space<vmem>>, vector<1x128x384xbf16>
    %15 = vector.shape_cast %14 : vector<1x128x384xbf16> to vector<128x384xbf16>
    %cst_15 = arith.constant dense<0.000000e+00> : vector<16x384xf32>
    %16 = tpu.matmul %13, %15, %cst_15 {dimension_numbers = #tpu.dot_dimension_numbers<[1], [0], [0], [1], [0, 0, 1, 1], [], []>} : vector<16x128xbf16>, vector<128x384xbf16>, vector<16x384xf32> -> vector<16x384xf32>
    %17 = vector.extract_strided_slice %16 {offsets = [0, 0], sizes = [16, 128], strides = [1, 1]} : vector<16x384xf32> to vector<16x128xf32>
    %18 = vector.extract_strided_slice %16 {offsets = [0, 128], sizes = [16, 128], strides = [1, 1]} : vector<16x384xf32> to vector<16x128xf32>
    %19 = vector.extract_strided_slice %16 {offsets = [0, 256], sizes = [16, 128], strides = [1, 1]} : vector<16x384xf32> to vector<16x128xf32>
    %c0_16 = arith.constant 0 : index
    %c0_17 = arith.constant 0 : index
    %c0_18 = arith.constant 0 : index
    %20 = vector.load %arg9[%c0_16, %c0_17, %c0_18] : memref<2x1x128xf32, #tpu.memory_space<vmem>>, vector<1x1x128xf32>
    %21 = vector.shape_cast %20 : vector<1x1x128xf32> to vector<1x128xf32>
    %22 = vector.broadcast %21 : vector<1x128xf32> to vector<16x128xf32>
    %23 = arith.addf %17, %22 : vector<16x128xf32>
    %24 = arith.truncf %18 : vector<16x128xf32> to vector<16x128xbf16>
    %c0_19 = arith.constant 0 : index
    %c0_20 = arith.constant 0 : index
    %25 = vector.load %arg19[%c0_19, %c0_20] : memref<16x256xbf16, #tpu.memory_space<vmem>>, vector<16x128xbf16>
    tpu.vector_store %arg19[%c0_19, %c0_20], %24 {strides = array<i32>} : memref<16x256xbf16, #tpu.memory_space<vmem>>, vector<16x128xbf16>,
    %26 = arith.mulf %18, %18 : vector<16x128xf32>
    %27 = arith.truncf %26 : vector<16x128xf32> to vector<16x128xbf16>
    %c0_21 = arith.constant 0 : index
    %c128 = arith.constant 128 : index
    %28 = vector.load %arg19[%c0_21, %c128] : memref<16x256xbf16, #tpu.memory_space<vmem>>, vector<16x128xbf16>
    tpu.vector_store %arg19[%c0_21, %c128], %27 {strides = array<i32>} : memref<16x256xbf16, #tpu.memory_space<vmem>>, vector<16x128xbf16>,
    %c0_22 = arith.constant 0 : index
    %c0_23 = arith.constant 0 : index
    %29 = vector.load %arg19[%c0_22, %c0_23] : memref<16x256xbf16, #tpu.memory_space<vmem>>, vector<16x256xbf16>
    %cst_24 = arith.constant dense<0.000000e+00> : vector<16x256xf32>
    %30 = tpu.matmul %0, %29, %cst_24 {dimension_numbers = #tpu.dot_dimension_numbers<[1], [0], [0], [1], [0, 0, 1, 1], [], []>} : vector<16x16xbf16>, vector<16x256xbf16>, vector<16x256xf32> -> vector<16x256xf32>
    %31 = vector.extract_strided_slice %30 {offsets = [0, 0], sizes = [16, 128], strides = [1, 1]} : vector<16x256xf32> to vector<16x128xf32>
    %32 = vector.extract_strided_slice %30 {offsets = [0, 128], sizes = [16, 128], strides = [1, 1]} : vector<16x256xf32> to vector<16x128xf32>
    %33 = vector.broadcast %7 : vector<16x1xf32> to vector<16x128xf32>
    %34 = arith.mulf %31, %33 : vector<16x128xf32>
    %35 = vector.broadcast %7 : vector<16x1xf32> to vector<16x128xf32>
    %36 = arith.mulf %32, %35 : vector<16x128xf32>
    %37 = vector.broadcast %1 : vector<16x1xf32> to vector<16x128xf32>
    %38 = arith.mulf %37, %23 : vector<16x128xf32>
    %39 = arith.addf %38, %31 : vector<16x128xf32>
    %40 = arith.addf %23, %34 : vector<16x128xf32>
    %41 = vector.broadcast %11 : vector<16x1xf32> to vector<16x128xf32>
    %42 = arith.mulf %40, %41 : vector<16x128xf32>
    %43 = arith.mulf %34, %34 : vector<16x128xf32>
    %44 = arith.subf %36, %43 : vector<16x128xf32>
    %cst_25 = arith.constant 0.000000e+00 : f32
    %45 = vector.broadcast %cst_25 : f32 to vector<16x128xf32>
    %46 = arith.maximumf %44, %45 : vector<16x128xf32>
    %cst_26 = arith.constant 9.99999974E-6 : f32
    %47 = vector.broadcast %cst_26 : f32 to vector<16x128xf32>
    %48 = arith.addf %46, %47 : vector<16x128xf32>
    %49 = math.sqrt %48 : vector<16x128xf32>
    %cst_27 = arith.constant -1.000000e+30 : f32
    %50 = vector.broadcast %cst_27 : f32 to vector<16x128xf32>
    %cst_28 = arith.constant 1.000000e+30 : f32
    %51 = vector.broadcast %cst_28 : f32 to vector<16x128xf32>
    %c0_i32 = arith.constant 0 : i32
    %c16_i32 = arith.constant 16 : i32
    %52 = arith.muli %c0_i32, %c16_i32 : i32
    %53 = tpu.assume_multiple %52, 16 : i32
    %54 = arith.index_cast %53 : i32 to index
    %c0_29 = arith.constant 0 : index
    %55 = vector.load %arg19[%54, %c0_29] : memref<16x256xbf16, #tpu.memory_space<vmem>>, vector<16x128xbf16>
    %56 = arith.extf %55 : vector<16x128xbf16> to vector<16x128xf32>
    %57 = arith.index_cast %53 : i32 to index
    %c0_30 = arith.constant 0 : index
    %58 = vector.load %arg2[%57, %c0_30] : memref<16x16xf32, #tpu.memory_space<vmem>>, vector<16x16xf32>
    %59 = vector.shape_cast %56 : vector<16x128xf32> to vector<16x1x128xf32>
    %60 = vector.shape_cast %58 : vector<16x16xf32> to vector<16x16x1xf32>
    %61 = vector.broadcast %59 : vector<16x1x128xf32> to vector<16x16x128xf32>
    %62 = vector.broadcast %60 : vector<16x16x1xf32> to vector<16x16x128xf32>
    %63 = arith.addf %61, %62 : vector<16x16x128xf32>
    %cst_31 = arith.constant dense<0xFF800000> : vector<16x128xf32>
    %64 = vector.multi_reduction <maximumf>, %63, %cst_31 [0] : vector<16x16x128xf32> to vector<16x128xf32>
    %65 = arith.maximumf %50, %64 : vector<16x128xf32>
    %66 = vector.shape_cast %56 : vector<16x128xf32> to vector<16x1x128xf32>
    %67 = vector.shape_cast %58 : vector<16x16xf32> to vector<16x16x1xf32>
    %68 = vector.broadcast %66 : vector<16x1x128xf32> to vector<16x16x128xf32>
    %69 = vector.broadcast %67 : vector<16x16x1xf32> to vector<16x16x128xf32>
    %70 = arith.subf %68, %69 : vector<16x16x128xf32>
    %cst_32 = arith.constant dense<0x7F800000> : vector<16x128xf32>
    %71 = vector.multi_reduction <minimumf>, %70, %cst_32 [0] : vector<16x16x128xf32> to vector<16x128xf32>
    %72 = arith.minimumf %51, %71 : vector<16x128xf32>
    %c1_i32 = arith.constant 1 : i32
    %73 = arith.addf %23, %65 : vector<16x128xf32>
    %74 = vector.broadcast %11 : vector<16x1xf32> to vector<16x128xf32>
    %75 = arith.mulf %73, %74 : vector<16x128xf32>
    %76 = arith.addf %23, %72 : vector<16x128xf32>
    %77 = vector.broadcast %11 : vector<16x1xf32> to vector<16x128xf32>
    %78 = arith.mulf %76, %77 : vector<16x128xf32>
    %79 = arith.truncf %39 : vector<16x128xf32> to vector<16x128xbf16>
    %c0_33 = arith.constant 0 : index
    %c0_34 = arith.constant 0 : index
    %80 = vector.load %arg20[%c0_33, %c0_34] : memref<16x640xbf16, #tpu.memory_space<vmem>>, vector<16x128xbf16>
    tpu.vector_store %arg20[%c0_33, %c0_34], %79 {strides = array<i32>} : memref<16x640xbf16, #tpu.memory_space<vmem>>, vector<16x128xbf16>,
    %81 = arith.truncf %42 : vector<16x128xf32> to vector<16x128xbf16>
    %c0_35 = arith.constant 0 : index
    %c128_36 = arith.constant 128 : index
    %82 = vector.load %arg20[%c0_35, %c128_36] : memref<16x640xbf16, #tpu.memory_space<vmem>>, vector<16x128xbf16>
    tpu.vector_store %arg20[%c0_35, %c128_36], %81 {strides = array<i32>} : memref<16x640xbf16, #tpu.memory_space<vmem>>, vector<16x128xbf16>,
    %83 = arith.truncf %49 : vector<16x128xf32> to vector<16x128xbf16>
    %c0_37 = arith.constant 0 : index
    %c256 = arith.constant 256 : index
    %84 = vector.load %arg20[%c0_37, %c256] : memref<16x640xbf16, #tpu.memory_space<vmem>>, vector<16x128xbf16>
    tpu.vector_store %arg20[%c0_37, %c256], %83 {strides = array<i32>} : memref<16x640xbf16, #tpu.memory_space<vmem>>, vector<16x128xbf16>,
    %85 = arith.truncf %75 : vector<16x128xf32> to vector<16x128xbf16>
    %c0_38 = arith.constant 0 : index
    %c384 = arith.constant 384 : index
    %86 = vector.load %arg20[%c0_38, %c384] : memref<16x640xbf16, #tpu.memory_space<vmem>>, vector<16x128xbf16>
    tpu.vector_store %arg20[%c0_38, %c384], %85 {strides = array<i32>} : memref<16x640xbf16, #tpu.memory_space<vmem>>, vector<16x128xbf16>,
    %87 = arith.truncf %78 : vector<16x128xf32> to vector<16x128xbf16>
    %c0_39 = arith.constant 0 : index
    %c512 = arith.constant 512 : index
    %88 = vector.load %arg20[%c0_39, %c512] : memref<16x640xbf16, #tpu.memory_space<vmem>>, vector<16x128xbf16>
    tpu.vector_store %arg20[%c0_39, %c512], %87 {strides = array<i32>} : memref<16x640xbf16, #tpu.memory_space<vmem>>, vector<16x128xbf16>,
    %c0_40 = arith.constant 0 : index
    %c0_41 = arith.constant 0 : index
    %89 = vector.load %arg20[%c0_40, %c0_41] : memref<16x640xbf16, #tpu.memory_space<vmem>>, vector<16x640xbf16>
    %c0_42 = arith.constant 0 : index
    %c0_43 = arith.constant 0 : index
    %c0_44 = arith.constant 0 : index
    %90 = vector.load %arg10[%c0_42, %c0_43, %c0_44] : memref<2x640x384xbf16, #tpu.memory_space<vmem>>, vector<1x640x384xbf16>
    %91 = vector.shape_cast %90 : vector<1x640x384xbf16> to vector<640x384xbf16>
    %cst_45 = arith.constant dense<0.000000e+00> : vector<16x384xf32>
    %92 = tpu.matmul %89, %91, %cst_45 {dimension_numbers = #tpu.dot_dimension_numbers<[1], [0], [0], [1], [0, 0, 1, 1], [], []>} : vector<16x640xbf16>, vector<640x384xbf16>, vector<16x384xf32> -> vector<16x384xf32>
    %93 = vector.extract_strided_slice %92 {offsets = [0, 0], sizes = [16, 128], strides = [1, 1]} : vector<16x384xf32> to vector<16x128xf32>
    %94 = arith.addf %19, %93 : vector<16x128xf32>
    %95 = vector.extract_strided_slice %92 {offsets = [0, 128], sizes = [16, 128], strides = [1, 1]} : vector<16x384xf32> to vector<16x128xf32>
    %96 = vector.broadcast %2 : vector<16x1xf32> to vector<16x128xf32>
    %97 = arith.mulf %96, %95 : vector<16x128xf32>
    %98 = arith.addf %94, %97 : vector<16x128xf32>
    %99 = vector.extract_strided_slice %92 {offsets = [0, 256], sizes = [16, 128], strides = [1, 1]} : vector<16x384xf32> to vector<16x128xf32>
    %100 = vector.broadcast %3 : vector<16x1xf32> to vector<16x128xf32>
    %101 = arith.mulf %100, %99 : vector<16x128xf32>
    %102 = arith.addf %98, %101 : vector<16x128xf32>
    %c0_46 = arith.constant 0 : index
    %c0_47 = arith.constant 0 : index
    %c0_48 = arith.constant 0 : index
    %103 = vector.load %arg11[%c0_46, %c0_47, %c0_48] : memref<2x1x128xf32, #tpu.memory_space<vmem>>, vector<1x1x128xf32>
    %104 = vector.shape_cast %103 : vector<1x1x128xf32> to vector<1x128xf32>
    %105 = vector.broadcast %104 : vector<1x128xf32> to vector<16x128xf32>
    %106 = arith.addf %102, %105 : vector<16x128xf32>
    %107 = arith.truncf %106 : vector<16x128xf32> to vector<16x128xbf16>
    %c0_49 = arith.constant 0 : index
    %c0_50 = arith.constant 0 : index
    %c0_51 = arith.constant 0 : index
    %108 = vector.load %arg12[%c0_49, %c0_50, %c0_51] : memref<2x128x128xbf16, #tpu.memory_space<vmem>>, vector<1x128x128xbf16>
    %109 = vector.shape_cast %108 : vector<1x128x128xbf16> to vector<128x128xbf16>
    %cst_52 = arith.constant dense<0.000000e+00> : vector<16x128xf32>
    %110 = tpu.matmul %107, %109, %cst_52 {dimension_numbers = #tpu.dot_dimension_numbers<[1], [0], [0], [1], [0, 0, 1, 1], [], []>} : vector<16x128xbf16>, vector<128x128xbf16>, vector<16x128xf32> -> vector<16x128xf32>
    %c0_53 = arith.constant 0 : index
    %c0_54 = arith.constant 0 : index
    %c0_55 = arith.constant 0 : index
    %111 = vector.load %arg13[%c0_53, %c0_54, %c0_55] : memref<2x1x128xf32, #tpu.memory_space<vmem>>, vector<1x1x128xf32>
    %112 = vector.shape_cast %111 : vector<1x1x128xf32> to vector<1x128xf32>
    %113 = vector.broadcast %112 : vector<1x128xf32> to vector<16x128xf32>
    %114 = arith.addf %110, %113 : vector<16x128xf32>
    %115 = vector.broadcast %4 : vector<16x1xf32> to vector<16x128xf32>
    %116 = arith.mulf %114, %115 : vector<16x128xf32>
    %cst_56 = arith.constant dense<0.000000e+00> : vector<128xf32>
    %117 = vector.multi_reduction <add>, %116, %cst_56 [0] : vector<16x128xf32> to vector<128xf32>
    %118 = vector.shape_cast %117 : vector<128xf32> to vector<1x128xf32>
    %119 = vector.broadcast %118 : vector<1x128xf32> to vector<16x128xf32>
    %120 = arith.subf %114, %119 : vector<16x128xf32>
    %121 = vector.broadcast %4 : vector<16x1xf32> to vector<16x128xf32>
    %122 = arith.mulf %121, %120 : vector<16x128xf32>
    %123 = arith.mulf %122, %120 : vector<16x128xf32>
    %cst_57 = arith.constant dense<0.000000e+00> : vector<128xf32>
    %124 = vector.multi_reduction <add>, %123, %cst_57 [0] : vector<16x128xf32> to vector<128xf32>
    %125 = vector.shape_cast %124 : vector<128xf32> to vector<1x128xf32>
    %cst_58 = arith.constant 9.99999974E-6 : f32
    %126 = vector.broadcast %cst_58 : f32 to vector<1x128xf32>
    %127 = arith.addf %125, %126 : vector<1x128xf32>
    %128 = math.rsqrt %127 : vector<1x128xf32>
    %129 = vector.broadcast %128 : vector<1x128xf32> to vector<16x128xf32>
    %130 = arith.mulf %120, %129 : vector<16x128xf32>
    %c0_59 = arith.constant 0 : index
    %c0_60 = arith.constant 0 : index
    %c0_61 = arith.constant 0 : index
    %131 = vector.load %arg14[%c0_59, %c0_60, %c0_61] : memref<2x1x128xf32, #tpu.memory_space<vmem>>, vector<1x1x128xf32>
    %132 = vector.shape_cast %131 : vector<1x1x128xf32> to vector<1x128xf32>
    %133 = vector.broadcast %132 : vector<1x128xf32> to vector<16x128xf32>
    %134 = arith.mulf %130, %133 : vector<16x128xf32>
    %c0_62 = arith.constant 0 : index
    %c0_63 = arith.constant 0 : index
    %c0_64 = arith.constant 0 : index
    %135 = vector.load %arg15[%c0_62, %c0_63, %c0_64] : memref<2x1x128xf32, #tpu.memory_space<vmem>>, vector<1x1x128xf32>
    %136 = vector.shape_cast %135 : vector<1x1x128xf32> to vector<1x128xf32>
    %137 = vector.broadcast %136 : vector<1x128xf32> to vector<16x128xf32>
    %138 = arith.addf %134, %137 : vector<16x128xf32>
    %cst_65 = arith.constant 0.000000e+00 : f32
    %139 = vector.broadcast %cst_65 : f32 to vector<16x128xf32>
    %140 = arith.maximumf %138, %139 : vector<16x128xf32>
    %141 = arith.truncf %140 : vector<16x128xf32> to vector<16x128xbf16>
    %c1 = arith.constant 1 : index
    %c0_66 = arith.constant 0 : index
    %c0_67 = arith.constant 0 : index
    %142 = vector.load %arg8[%c1, %c0_66, %c0_67] : memref<2x128x384xbf16, #tpu.memory_space<vmem>>, vector<1x128x384xbf16>
    %143 = vector.shape_cast %142 : vector<1x128x384xbf16> to vector<128x384xbf16>
    %cst_68 = arith.constant dense<0.000000e+00> : vector<16x384xf32>
    %144 = tpu.matmul %141, %143, %cst_68 {dimension_numbers = #tpu.dot_dimension_numbers<[1], [0], [0], [1], [0, 0, 1, 1], [], []>} : vector<16x128xbf16>, vector<128x384xbf16>, vector<16x384xf32> -> vector<16x384xf32>
    %145 = vector.extract_strided_slice %144 {offsets = [0, 0], sizes = [16, 128], strides = [1, 1]} : vector<16x384xf32> to vector<16x128xf32>
    %146 = vector.extract_strided_slice %144 {offsets = [0, 128], sizes = [16, 128], strides = [1, 1]} : vector<16x384xf32> to vector<16x128xf32>
    %147 = vector.extract_strided_slice %144 {offsets = [0, 256], sizes = [16, 128], strides = [1, 1]} : vector<16x384xf32> to vector<16x128xf32>
    %c1_69 = arith.constant 1 : index
    %c0_70 = arith.constant 0 : index
    %c0_71 = arith.constant 0 : index
    %148 = vector.load %arg9[%c1_69, %c0_70, %c0_71] : memref<2x1x128xf32, #tpu.memory_space<vmem>>, vector<1x1x128xf32>
    %149 = vector.shape_cast %148 : vector<1x1x128xf32> to vector<1x128xf32>
    %150 = vector.broadcast %149 : vector<1x128xf32> to vector<16x128xf32>
    %151 = arith.addf %145, %150 : vector<16x128xf32>
    %152 = arith.truncf %146 : vector<16x128xf32> to vector<16x128xbf16>
    %c0_72 = arith.constant 0 : index
    %c0_73 = arith.constant 0 : index
    %153 = vector.load %arg19[%c0_72, %c0_73] : memref<16x256xbf16, #tpu.memory_space<vmem>>, vector<16x128xbf16>
    tpu.vector_store %arg19[%c0_72, %c0_73], %152 {strides = array<i32>} : memref<16x256xbf16, #tpu.memory_space<vmem>>, vector<16x128xbf16>,
    %154 = arith.mulf %146, %146 : vector<16x128xf32>
    %155 = arith.truncf %154 : vector<16x128xf32> to vector<16x128xbf16>
    %c0_74 = arith.constant 0 : index
    %c128_75 = arith.constant 128 : index
    %156 = vector.load %arg19[%c0_74, %c128_75] : memref<16x256xbf16, #tpu.memory_space<vmem>>, vector<16x128xbf16>
    tpu.vector_store %arg19[%c0_74, %c128_75], %155 {strides = array<i32>} : memref<16x256xbf16, #tpu.memory_space<vmem>>, vector<16x128xbf16>,
    %c0_76 = arith.constant 0 : index
    %c0_77 = arith.constant 0 : index
    %157 = vector.load %arg19[%c0_76, %c0_77] : memref<16x256xbf16, #tpu.memory_space<vmem>>, vector<16x256xbf16>
    %cst_78 = arith.constant dense<0.000000e+00> : vector<16x256xf32>
    %158 = tpu.matmul %0, %157, %cst_78 {dimension_numbers = #tpu.dot_dimension_numbers<[1], [0], [0], [1], [0, 0, 1, 1], [], []>} : vector<16x16xbf16>, vector<16x256xbf16>, vector<16x256xf32> -> vector<16x256xf32>
    %159 = vector.extract_strided_slice %158 {offsets = [0, 0], sizes = [16, 128], strides = [1, 1]} : vector<16x256xf32> to vector<16x128xf32>
    %160 = vector.extract_strided_slice %158 {offsets = [0, 128], sizes = [16, 128], strides = [1, 1]} : vector<16x256xf32> to vector<16x128xf32>
    %161 = vector.broadcast %7 : vector<16x1xf32> to vector<16x128xf32>
    %162 = arith.mulf %159, %161 : vector<16x128xf32>
    %163 = vector.broadcast %7 : vector<16x1xf32> to vector<16x128xf32>
    %164 = arith.mulf %160, %163 : vector<16x128xf32>
    %165 = vector.broadcast %1 : vector<16x1xf32> to vector<16x128xf32>
    %166 = arith.mulf %165, %151 : vector<16x128xf32>
    %167 = arith.addf %166, %159 : vector<16x128xf32>
    %168 = arith.addf %151, %162 : vector<16x128xf32>
    %169 = vector.broadcast %11 : vector<16x1xf32> to vector<16x128xf32>
    %170 = arith.mulf %168, %169 : vector<16x128xf32>
    %171 = arith.mulf %162, %162 : vector<16x128xf32>
    %172 = arith.subf %164, %171 : vector<16x128xf32>
    %cst_79 = arith.constant 0.000000e+00 : f32
    %173 = vector.broadcast %cst_79 : f32 to vector<16x128xf32>
    %174 = arith.maximumf %172, %173 : vector<16x128xf32>
    %cst_80 = arith.constant 9.99999974E-6 : f32
    %175 = vector.broadcast %cst_80 : f32 to vector<16x128xf32>
    %176 = arith.addf %174, %175 : vector<16x128xf32>
    %177 = math.sqrt %176 : vector<16x128xf32>
    %cst_81 = arith.constant -1.000000e+30 : f32
    %178 = vector.broadcast %cst_81 : f32 to vector<16x128xf32>
    %cst_82 = arith.constant 1.000000e+30 : f32
    %179 = vector.broadcast %cst_82 : f32 to vector<16x128xf32>
    %c0_i32_83 = arith.constant 0 : i32
    %c16_i32_84 = arith.constant 16 : i32
    %180 = arith.muli %c0_i32_83, %c16_i32_84 : i32
    %181 = tpu.assume_multiple %180, 16 : i32
    %182 = arith.index_cast %181 : i32 to index
    %c0_85 = arith.constant 0 : index
    %183 = vector.load %arg19[%182, %c0_85] : memref<16x256xbf16, #tpu.memory_space<vmem>>, vector<16x128xbf16>
    %184 = arith.extf %183 : vector<16x128xbf16> to vector<16x128xf32>
    %185 = arith.index_cast %181 : i32 to index
    %c0_86 = arith.constant 0 : index
    %186 = vector.load %arg2[%185, %c0_86] : memref<16x16xf32, #tpu.memory_space<vmem>>, vector<16x16xf32>
    %187 = vector.shape_cast %184 : vector<16x128xf32> to vector<16x1x128xf32>
    %188 = vector.shape_cast %186 : vector<16x16xf32> to vector<16x16x1xf32>
    %189 = vector.broadcast %187 : vector<16x1x128xf32> to vector<16x16x128xf32>
    %190 = vector.broadcast %188 : vector<16x16x1xf32> to vector<16x16x128xf32>
    %191 = arith.addf %189, %190 : vector<16x16x128xf32>
    %cst_87 = arith.constant dense<0xFF800000> : vector<16x128xf32>
    %192 = vector.multi_reduction <maximumf>, %191, %cst_87 [0] : vector<16x16x128xf32> to vector<16x128xf32>
    %193 = arith.maximumf %178, %192 : vector<16x128xf32>
    %194 = vector.shape_cast %184 : vector<16x128xf32> to vector<16x1x128xf32>
    %195 = vector.shape_cast %186 : vector<16x16xf32> to vector<16x16x1xf32>
    %196 = vector.broadcast %194 : vector<16x1x128xf32> to vector<16x16x128xf32>
    %197 = vector.broadcast %195 : vector<16x16x1xf32> to vector<16x16x128xf32>
    %198 = arith.subf %196, %197 : vector<16x16x128xf32>
    %cst_88 = arith.constant dense<0x7F800000> : vector<16x128xf32>
    %199 = vector.multi_reduction <minimumf>, %198, %cst_88 [0] : vector<16x16x128xf32> to vector<16x128xf32>
    %200 = arith.minimumf %179, %199 : vector<16x128xf32>
    %c1_i32_89 = arith.constant 1 : i32
    %201 = arith.addf %151, %193 : vector<16x128xf32>
    %202 = vector.broadcast %11 : vector<16x1xf32> to vector<16x128xf32>
    %203 = arith.mulf %201, %202 : vector<16x128xf32>
    %204 = arith.addf %151, %200 : vector<16x128xf32>
    %205 = vector.broadcast %11 : vector<16x1xf32> to vector<16x128xf32>
    %206 = arith.mulf %204, %205 : vector<16x128xf32>
    %207 = arith.truncf %167 : vector<16x128xf32> to vector<16x128xbf16>
    %c0_90 = arith.constant 0 : index
    %c0_91 = arith.constant 0 : index
    %208 = vector.load %arg20[%c0_90, %c0_91] : memref<16x640xbf16, #tpu.memory_space<vmem>>, vector<16x128xbf16>
    tpu.vector_store %arg20[%c0_90, %c0_91], %207 {strides = array<i32>} : memref<16x640xbf16, #tpu.memory_space<vmem>>, vector<16x128xbf16>,
    %209 = arith.truncf %170 : vector<16x128xf32> to vector<16x128xbf16>
    %c0_92 = arith.constant 0 : index
    %c128_93 = arith.constant 128 : index
    %210 = vector.load %arg20[%c0_92, %c128_93] : memref<16x640xbf16, #tpu.memory_space<vmem>>, vector<16x128xbf16>
    tpu.vector_store %arg20[%c0_92, %c128_93], %209 {strides = array<i32>} : memref<16x640xbf16, #tpu.memory_space<vmem>>, vector<16x128xbf16>,
    %211 = arith.truncf %177 : vector<16x128xf32> to vector<16x128xbf16>
    %c0_94 = arith.constant 0 : index
    %c256_95 = arith.constant 256 : index
    %212 = vector.load %arg20[%c0_94, %c256_95] : memref<16x640xbf16, #tpu.memory_space<vmem>>, vector<16x128xbf16>
    tpu.vector_store %arg20[%c0_94, %c256_95], %211 {strides = array<i32>} : memref<16x640xbf16, #tpu.memory_space<vmem>>, vector<16x128xbf16>,
    %213 = arith.truncf %203 : vector<16x128xf32> to vector<16x128xbf16>
    %c0_96 = arith.constant 0 : index
    %c384_97 = arith.constant 384 : index
    %214 = vector.load %arg20[%c0_96, %c384_97] : memref<16x640xbf16, #tpu.memory_space<vmem>>, vector<16x128xbf16>
    tpu.vector_store %arg20[%c0_96, %c384_97], %213 {strides = array<i32>} : memref<16x640xbf16, #tpu.memory_space<vmem>>, vector<16x128xbf16>,
    %215 = arith.truncf %206 : vector<16x128xf32> to vector<16x128xbf16>
    %c0_98 = arith.constant 0 : index
    %c512_99 = arith.constant 512 : index
    %216 = vector.load %arg20[%c0_98, %c512_99] : memref<16x640xbf16, #tpu.memory_space<vmem>>, vector<16x128xbf16>
    tpu.vector_store %arg20[%c0_98, %c512_99], %215 {strides = array<i32>} : memref<16x640xbf16, #tpu.memory_space<vmem>>, vector<16x128xbf16>,
    %c0_100 = arith.constant 0 : index
    %c0_101 = arith.constant 0 : index
    %217 = vector.load %arg20[%c0_100, %c0_101] : memref<16x640xbf16, #tpu.memory_space<vmem>>, vector<16x640xbf16>
    %c1_102 = arith.constant 1 : index
    %c0_103 = arith.constant 0 : index
    %c0_104 = arith.constant 0 : index
    %218 = vector.load %arg10[%c1_102, %c0_103, %c0_104] : memref<2x640x384xbf16, #tpu.memory_space<vmem>>, vector<1x640x384xbf16>
    %219 = vector.shape_cast %218 : vector<1x640x384xbf16> to vector<640x384xbf16>
    %cst_105 = arith.constant dense<0.000000e+00> : vector<16x384xf32>
    %220 = tpu.matmul %217, %219, %cst_105 {dimension_numbers = #tpu.dot_dimension_numbers<[1], [0], [0], [1], [0, 0, 1, 1], [], []>} : vector<16x640xbf16>, vector<640x384xbf16>, vector<16x384xf32> -> vector<16x384xf32>
    %221 = vector.extract_strided_slice %220 {offsets = [0, 0], sizes = [16, 128], strides = [1, 1]} : vector<16x384xf32> to vector<16x128xf32>
    %222 = arith.addf %147, %221 : vector<16x128xf32>
    %223 = vector.extract_strided_slice %220 {offsets = [0, 128], sizes = [16, 128], strides = [1, 1]} : vector<16x384xf32> to vector<16x128xf32>
    %224 = vector.broadcast %2 : vector<16x1xf32> to vector<16x128xf32>
    %225 = arith.mulf %224, %223 : vector<16x128xf32>
    %226 = arith.addf %222, %225 : vector<16x128xf32>
    %227 = vector.extract_strided_slice %220 {offsets = [0, 256], sizes = [16, 128], strides = [1, 1]} : vector<16x384xf32> to vector<16x128xf32>
    %228 = vector.broadcast %3 : vector<16x1xf32> to vector<16x128xf32>
    %229 = arith.mulf %228, %227 : vector<16x128xf32>
    %230 = arith.addf %226, %229 : vector<16x128xf32>
    %c1_106 = arith.constant 1 : index
    %c0_107 = arith.constant 0 : index
    %c0_108 = arith.constant 0 : index
    %231 = vector.load %arg11[%c1_106, %c0_107, %c0_108] : memref<2x1x128xf32, #tpu.memory_space<vmem>>, vector<1x1x128xf32>
    %232 = vector.shape_cast %231 : vector<1x1x128xf32> to vector<1x128xf32>
    %233 = vector.broadcast %232 : vector<1x128xf32> to vector<16x128xf32>
    %234 = arith.addf %230, %233 : vector<16x128xf32>
    %235 = arith.truncf %234 : vector<16x128xf32> to vector<16x128xbf16>
    %c1_109 = arith.constant 1 : index
    %c0_110 = arith.constant 0 : index
    %c0_111 = arith.constant 0 : index
    %236 = vector.load %arg12[%c1_109, %c0_110, %c0_111] : memref<2x128x128xbf16, #tpu.memory_space<vmem>>, vector<1x128x128xbf16>
    %237 = vector.shape_cast %236 : vector<1x128x128xbf16> to vector<128x128xbf16>
    %cst_112 = arith.constant dense<0.000000e+00> : vector<16x128xf32>
    %238 = tpu.matmul %235, %237, %cst_112 {dimension_numbers = #tpu.dot_dimension_numbers<[1], [0], [0], [1], [0, 0, 1, 1], [], []>} : vector<16x128xbf16>, vector<128x128xbf16>, vector<16x128xf32> -> vector<16x128xf32>
    %c1_113 = arith.constant 1 : index
    %c0_114 = arith.constant 0 : index
    %c0_115 = arith.constant 0 : index
    %239 = vector.load %arg13[%c1_113, %c0_114, %c0_115] : memref<2x1x128xf32, #tpu.memory_space<vmem>>, vector<1x1x128xf32>
    %240 = vector.shape_cast %239 : vector<1x1x128xf32> to vector<1x128xf32>
    %241 = vector.broadcast %240 : vector<1x128xf32> to vector<16x128xf32>
    %242 = arith.addf %238, %241 : vector<16x128xf32>
    %243 = vector.broadcast %4 : vector<16x1xf32> to vector<16x128xf32>
    %244 = arith.mulf %242, %243 : vector<16x128xf32>
    %cst_116 = arith.constant dense<0.000000e+00> : vector<128xf32>
    %245 = vector.multi_reduction <add>, %244, %cst_116 [0] : vector<16x128xf32> to vector<128xf32>
    %246 = vector.shape_cast %245 : vector<128xf32> to vector<1x128xf32>
    %247 = vector.broadcast %246 : vector<1x128xf32> to vector<16x128xf32>
    %248 = arith.subf %242, %247 : vector<16x128xf32>
    %249 = vector.broadcast %4 : vector<16x1xf32> to vector<16x128xf32>
    %250 = arith.mulf %249, %248 : vector<16x128xf32>
    %251 = arith.mulf %250, %248 : vector<16x128xf32>
    %cst_117 = arith.constant dense<0.000000e+00> : vector<128xf32>
    %252 = vector.multi_reduction <add>, %251, %cst_117 [0] : vector<16x128xf32> to vector<128xf32>
    %253 = vector.shape_cast %252 : vector<128xf32> to vector<1x128xf32>
    %cst_118 = arith.constant 9.99999974E-6 : f32
    %254 = vector.broadcast %cst_118 : f32 to vector<1x128xf32>
    %255 = arith.addf %253, %254 : vector<1x128xf32>
    %256 = math.rsqrt %255 : vector<1x128xf32>
    %257 = vector.broadcast %256 : vector<1x128xf32> to vector<16x128xf32>
    %258 = arith.mulf %248, %257 : vector<16x128xf32>
    %c1_119 = arith.constant 1 : index
    %c0_120 = arith.constant 0 : index
    %c0_121 = arith.constant 0 : index
    %259 = vector.load %arg14[%c1_119, %c0_120, %c0_121] : memref<2x1x128xf32, #tpu.memory_space<vmem>>, vector<1x1x128xf32>
    %260 = vector.shape_cast %259 : vector<1x1x128xf32> to vector<1x128xf32>
    %261 = vector.broadcast %260 : vector<1x128xf32> to vector<16x128xf32>
    %262 = arith.mulf %258, %261 : vector<16x128xf32>
    %c1_122 = arith.constant 1 : index
    %c0_123 = arith.constant 0 : index
    %c0_124 = arith.constant 0 : index
    %263 = vector.load %arg15[%c1_122, %c0_123, %c0_124] : memref<2x1x128xf32, #tpu.memory_space<vmem>>, vector<1x1x128xf32>
    %264 = vector.shape_cast %263 : vector<1x1x128xf32> to vector<1x128xf32>
    %265 = vector.broadcast %264 : vector<1x128xf32> to vector<16x128xf32>
    %266 = arith.addf %262, %265 : vector<16x128xf32>
    %cst_125 = arith.constant 0.000000e+00 : f32
    %267 = vector.broadcast %cst_125 : f32 to vector<16x128xf32>
    %268 = arith.maximumf %266, %267 : vector<16x128xf32>
    %c0_126 = arith.constant 0 : index
    %c0_127 = arith.constant 0 : index
    %269 = vector.load %arg7[%c0_126, %c0_127] : memref<2x16xf32, #tpu.memory_space<vmem>>, vector<2x16xf32>
    %cst_128 = arith.constant dense<0.000000e+00> : vector<2x128xf32>
    %270 = tpu.matmul %269, %268, %cst_128 {dimension_numbers = #tpu.dot_dimension_numbers<[1], [0], [0], [1], [0, 0, 1, 1], [], []>} : vector<2x16xf32>, vector<16x128xf32>, vector<2x128xf32> -> vector<2x128xf32>
    %c0_129 = arith.constant 0 : index
    %c0_130 = arith.constant 0 : index
    %271 = vector.load %arg16[%c0_129, %c0_130] : memref<128x1xf32, #tpu.memory_space<vmem>>, vector<128x1xf32>
    %cst_131 = arith.constant dense<0.000000e+00> : vector<2x1xf32>
    %272 = tpu.matmul %270, %271, %cst_131 {dimension_numbers = #tpu.dot_dimension_numbers<[1], [0], [0], [1], [0, 0, 1, 1], [], []>} : vector<2x128xf32>, vector<128x1xf32>, vector<2x1xf32> -> vector<2x1xf32>
    %c0_132 = arith.constant 0 : index
    %c0_133 = arith.constant 0 : index
    %273 = vector.load %arg17[%c0_132, %c0_133] : memref<1x1xf32, #tpu.memory_space<vmem>>, vector<1x1xf32>
    %274 = vector.broadcast %273 : vector<1x1xf32> to vector<2x1xf32>
    %275 = arith.addf %272, %274 : vector<2x1xf32>
    %c0_134 = arith.constant 0 : index
    %c0_135 = arith.constant 0 : index
    %276 = vector.load %arg18[%c0_134, %c0_135] : memref<2x1xf32, #tpu.memory_space<vmem>>, vector<2x1xf32>
    tpu.vector_store %arg18[%c0_134, %c0_135], %275 {strides = array<i32>} : memref<2x1xf32, #tpu.memory_space<vmem>>, vector<2x1xf32>,
    return
  }
}

</mosaic_0001>

<llo_original>
// kernel: tpu_custom_call.1
$region0: #{tpu_custom_call.1}
  #allocation0 [shape = 'u32[]', space=smem, size = 0x4, offset = 0x4, fixed_abs, tag = 'smem constant byte address 0x4 - core index']
  #allocation1 [shape = 'u32[144,128]{1,0:T(1,128)}', space=vmem, size = 0x12000, scoped, tag = 'internal scratch']
  #allocation2 [shape = 'bf16[16,256]{1,0:T(16,128)(2,1)}', space=vmem, size = 0x2000, scoped, tag = 'scratch operand']
  #allocation3 [shape = 'bf16[16,640]{1,0:T(16,128)(2,1)}', space=vmem, size = 0x5000, scoped, tag = 'scratch operand']
  #allocation4 [shape = 'f32[1,1]{1,0:T(1,128)S(1)}', space=vmem, size = 0x200, scoped, tag = 'scoped memory for tpu_custom_call.1']
  %s0 = inlined_call_operand.vmem [shape: f32[16,128], index: 0, kind: input, shape index: {}]
  %s1 = inlined_call_operand.vmem [shape: bf16[16,16], index: 1, kind: input, shape index: {}]
  %s2 = inlined_call_operand.vmem [shape: f32[16,16], index: 2, kind: input, shape index: {}]
  %s3 = inlined_call_operand.vmem [shape: f32[16,1], index: 3, kind: input, shape index: {}]
  %s4 = inlined_call_operand.vmem [shape: f32[16,1], index: 4, kind: input, shape index: {}]
  %s5 = inlined_call_operand.vmem [shape: f32[16,1], index: 5, kind: input, shape index: {}]
  %s6 = inlined_call_operand.vmem [shape: f32[16,1], index: 6, kind: input, shape index: {}]
  %s7 = inlined_call_operand.vmem [shape: f32[2,16], index: 7, kind: input, shape index: {}]
  %s8 = inlined_call_operand.hbm [shape: bf16[2,128,384], index: 8, kind: input, shape index: {}]
  %s9 = inlined_call_operand.vmem [shape: f32[2,1,128], index: 9, kind: input, shape index: {}]
  %s10 = inlined_call_operand.hbm [shape: bf16[2,640,384], index: 10, kind: input, shape index: {}]
  %s11 = inlined_call_operand.vmem [shape: f32[2,1,128], index: 11, kind: input, shape index: {}]
  %s12 = inlined_call_operand.vmem [shape: bf16[2,128,128], index: 12, kind: input, shape index: {}]
  %s13 = inlined_call_operand.vmem [shape: f32[2,1,128], index: 13, kind: input, shape index: {}]
  %s14 = inlined_call_operand.vmem [shape: f32[2,1,128], index: 14, kind: input, shape index: {}]
  %s15 = inlined_call_operand.vmem [shape: f32[2,1,128], index: 15, kind: input, shape index: {}]
  %s16 = inlined_call_operand.vmem [shape: f32[128,1], index: 16, kind: input, shape index: {}]
  %s17 = inlined_call_operand.<no memory space> [shape: f32[1,1], index: 17, kind: input, shape index: {}]
  %s18 = inlined_call_operand.vmem [shape: f32[2,1], index: 18, kind: output, shape index: {}]
  %s19 = sld [smem:[#allocation0]]
  $region90: #{tpu_custom_call.1} parent=0
    _
  %s21 = ssub.s32 1, %s19
  %s22 = scalar_select 0, %s21, %s19
  %v23 = vstv %s17
  %24 = vst [vmem:[#allocation4] sm:$0x1] %v23
  $region1: #{tpu_custom_call.1} parent=0
    #allocation5 [shape = 'u8[196608]{0}', space=vmem, size = 0x30000, scoped, tag = 'input window, operand 8, single buffered']
    #allocation6 [shape = 's32[1]{0}', space=sflag, size = 0x4, scoped, tag = 'scoped memory for tpu_custom_call.1']
    #allocation7 [shape = 'u8[983040]{0}', space=vmem, size = 0xf0000, scoped, tag = 'input window, operand 10, single buffered']
    #allocation8 [shape = 's32[1]{0}', space=sflag, size = 0x4, scoped, tag = 'scoped memory for tpu_custom_call.1']
    %25 = vsyncpa [#allocation6], 0
    %26 = vsyncpa [#allocation8], 0
    // Predicated region
    $region2: #{tpu_custom_call.1} parent=1 // pred_check
      _
    $region3: #{tpu_custom_call.1} parent=1 // pred_check_branch
      %28 = sbr.rel (0) target = $region5
    $region4: #{tpu_custom_call.1} parent=1 // pred_region
      _
    $region5: #{tpu_custom_call.1} parent=1 // pred_fallthru
      _
    // Predicated region
    $region6: #{tpu_custom_call.1} parent=1 // pred_check
      _
    $region7: #{tpu_custom_call.1} parent=1 // pred_check_branch
      %30 = sbr.rel (0) target = $region9
    $region8: #{tpu_custom_call.1} parent=1 // pred_region
      _
    $region9: #{tpu_custom_call.1} parent=1 // pred_fallthru
      _
    // Predicated region
    $region10: #{tpu_custom_call.1} parent=1 // pred_check
      _
    $region11: #{tpu_custom_call.1} parent=1 // pred_check_branch
      %32 = sbr.rel (0) target = $region13
    $region12: #{tpu_custom_call.1} parent=1 // pred_region
      _
    $region13: #{tpu_custom_call.1} parent=1 // pred_fallthru
      _
    // Predicated region
    $region14: #{tpu_custom_call.1} parent=1 // pred_check
      _
    $region15: #{tpu_custom_call.1} parent=1 // pred_check_branch
      %34 = sbr.rel (0) target = $region17
    $region16: #{tpu_custom_call.1} parent=1 // pred_region
      _
    $region17: #{tpu_custom_call.1} parent=1 // pred_fallthru
      _
    // Predicated region
    $region18: #{tpu_custom_call.1} parent=1 // pred_check
      _
    $region19: #{tpu_custom_call.1} parent=1 // pred_check_branch
      %36 = sbr.rel (0) target = $region21
    $region20: #{tpu_custom_call.1} parent=1 // pred_region
      _
    $region21: #{tpu_custom_call.1} parent=1 // pred_fallthru
      _
    // Predicated region
    $region22: #{tpu_custom_call.1} parent=1 // pred_check
      _
    $region23: #{tpu_custom_call.1} parent=1 // pred_check_branch
      %38 = sbr.rel (0) target = $region25
    $region24: #{tpu_custom_call.1} parent=1 // pred_region
      _
    $region25: #{tpu_custom_call.1} parent=1 // pred_fallthru
      _
    // Predicated region
    $region26: #{tpu_custom_call.1} parent=1 // pred_check
      _
    $region27: #{tpu_custom_call.1} parent=1 // pred_check_branch
      %40 = sbr.rel (0) target = $region29
    $region28: #{tpu_custom_call.1} parent=1 // pred_region
      _
    $region29: #{tpu_custom_call.1} parent=1 // pred_fallthru
      _
    // Predicated region
    $region30: #{tpu_custom_call.1} parent=1 // pred_check
      _
    $region31: #{tpu_custom_call.1} parent=1 // pred_check_branch
      %42 = sbr.rel (0) target = $region33
    $region32: #{tpu_custom_call.1} parent=1 // pred_region
      _
    $region33: #{tpu_custom_call.1} parent=1 // pred_fallthru
      _
    // Predicated region
    $region34: #{tpu_custom_call.1} parent=1 // pred_check
      _
    $region35: #{tpu_custom_call.1} parent=1 // pred_check_branch
      %44 = sbr.rel (0) target = $region37
    $region36: #{tpu_custom_call.1} parent=1 // pred_region
      %s46 = ssub.s32 6144, 6144
      %47 = vsyncadd [#allocation6], %s46
      %s48 = sshll.u32 [#allocation5], 4
      %s49 = int_to_ptr.vmem [resolvable:$true] %s48
      %54 = dma.hbm_to_vmem [thread:$0]  %s8, 6144, %s49, [#allocation6], 192, 192, 12
    $region37: #{tpu_custom_call.1} parent=1 // pred_fallthru
      _
    // Predicated region
    $region38: #{tpu_custom_call.1} parent=1 // pred_check
      _
    $region39: #{tpu_custom_call.1} parent=1 // pred_check_branch
      %56 = sbr.rel (0) target = $region41
    $region40: #{tpu_custom_call.1} parent=1 // pred_region
      _
    $region41: #{tpu_custom_call.1} parent=1 // pred_fallthru
      _
    // Predicated region
    $region42: #{tpu_custom_call.1} parent=1 // pred_check
      _
    $region43: #{tpu_custom_call.1} parent=1 // pred_check_branch
      %58 = sbr.rel (0) target = $region45
    $region44: #{tpu_custom_call.1} parent=1 // pred_region
      %s60 = ssub.s32 30720, 30720
      %61 = vsyncadd [#allocation8], %s60
      %s62 = sshll.u32 [#allocation7], 4
      %s63 = int_to_ptr.vmem [resolvable:$true] %s62
      %68 = dma.hbm_to_vmem [thread:$0]  %s10, 30720, %s63, [#allocation8], 192, 192, 12
    $region45: #{tpu_custom_call.1} parent=1 // pred_fallthru
      _
    // Predicated region
    $region46: #{tpu_custom_call.1} parent=1 // pred_check
      _
    $region47: #{tpu_custom_call.1} parent=1 // pred_check_branch
      %70 = sbr.rel (0) target = $region49
    $region48: #{tpu_custom_call.1} parent=1 // pred_region
      _
    $region49: #{tpu_custom_call.1} parent=1 // pred_fallthru
      _
    // Predicated region
    $region50: #{tpu_custom_call.1} parent=1 // pred_check
      _
    $region51: #{tpu_custom_call.1} parent=1 // pred_check_branch
      %72 = sbr.rel (0) target = $region53
    $region52: #{tpu_custom_call.1} parent=1 // pred_region
      _
    $region53: #{tpu_custom_call.1} parent=1 // pred_fallthru
      _
    // Predicated region
    $region54: #{tpu_custom_call.1} parent=1 // pred_check
      _
    $region55: #{tpu_custom_call.1} parent=1 // pred_check_branch
      %74 = sbr.rel (0) target = $region57
    $region56: #{tpu_custom_call.1} parent=1 // pred_region
      _
    $region57: #{tpu_custom_call.1} parent=1 // pred_fallthru
      _
    // Predicated region
    $region58: #{tpu_custom_call.1} parent=1 // pred_check
      _
    $region59: #{tpu_custom_call.1} parent=1 // pred_check_branch
      %76 = sbr.rel (0) target = $region61
    $region60: #{tpu_custom_call.1} parent=1 // pred_region
      _
    $region61: #{tpu_custom_call.1} parent=1 // pred_fallthru
      _
    // Predicated region
    $region62: #{tpu_custom_call.1} parent=1 // pred_check
      _
    $region63: #{tpu_custom_call.1} parent=1 // pred_check_branch
      %78 = sbr.rel (0) target = $region65
    $region64: #{tpu_custom_call.1} parent=1 // pred_region
      _
    $region65: #{tpu_custom_call.1} parent=1 // pred_fallthru
      _
    // Predicated region
    $region66: #{tpu_custom_call.1} parent=1 // pred_check
      _
    $region67: #{tpu_custom_call.1} parent=1 // pred_check_branch
      %80 = sbr.rel (0) target = $region69
    $region68: #{tpu_custom_call.1} parent=1 // pred_region
      _
    $region69: #{tpu_custom_call.1} parent=1 // pred_fallthru
      _
    // Predicated region
    $region70: #{tpu_custom_call.1} parent=1 // pred_check
      _
    $region71: #{tpu_custom_call.1} parent=1 // pred_check_branch
      %82 = sbr.rel (0) target = $region73
    $region72: #{tpu_custom_call.1} parent=1 // pred_region
      _
    $region73: #{tpu_custom_call.1} parent=1 // pred_fallthru
      _
    // Predicated region
    $region74: #{tpu_custom_call.1} parent=1 // pred_check
      _
    $region75: #{tpu_custom_call.1} parent=1 // pred_check_branch
      %84 = sbr.rel (0) target = $region77
    $region76: #{tpu_custom_call.1} parent=1 // pred_region
      %85 = dma.done [#allocation6], 6144
    $region77: #{tpu_custom_call.1} parent=1 // pred_fallthru
      _
    // Predicated region
    $region78: #{tpu_custom_call.1} parent=1 // pred_check
      _
    $region79: #{tpu_custom_call.1} parent=1 // pred_check_branch
      %87 = sbr.rel (0) target = $region81
    $region80: #{tpu_custom_call.1} parent=1 // pred_region
      %88 = dma.done [#allocation8], 30720
    $region81: #{tpu_custom_call.1} parent=1 // pred_fallthru
      _
    %v90 = vld [vmem:[%s1] sm:$0xf]
    %v91 = vld [vmem:[%s1 + $0x4] sm:$0xf]
    %v92 = vld [vmem:[%s3] sm:$0xff]
    %v93 = vld [vmem:[%s3 + $0x8] sm:$0xff]
    %v94 = vld [vmem:[%s4] sm:$0xff]
    %v95 = vld [vmem:[%s4 + $0x8] sm:$0xff]
    %v96 = vld [vmem:[%s5] sm:$0xff]
    %v97 = vld [vmem:[%s5 + $0x8] sm:$0xff]
    %v98 = vld [vmem:[%s6] sm:$0xff]
    %v99 = vld [vmem:[%s6 + $0x8] sm:$0xff]
    %v100 = vmax.f32 %v92, 1.0
    %v101 = vmax.f32 %v93, 1.0
    %v102 = vrcp.pop %v100
    %v103 = vrcp.pop %v101
    %vm104 = vcmp.gt.f32.partialorder %v92, 0.0
    %vm105 = vcmp.gt.f32.partialorder %v93, 0.0
    %v106 = vsel %vm104, 1, 0
    %v107 = vsel %vm105, 1, 0
    %v108 = vcvt.s32.f32 %v106
    %v109 = vcvt.s32.f32 %v107
    %v110 = vld [vmem:[%s0] sm:$0xff]
    %v111 = vld [vmem:[%s0 + $0x8] sm:$0xff]
    %v112 = vpack.c.bf16 %v111, %v110
    %v113 = vld [vmem:[#allocation5] sm:$0xff]
    %v114 = vld [vmem:[#allocation5 + $0x8] sm:$0xf]
    %v115 = vld [vmem:[#allocation5 + $0xc] sm:$0xff]
    %v116 = vld [vmem:[#allocation5 + $0x14] sm:$0xf]
    %v117 = vld [vmem:[#allocation5 + $0x18] sm:$0xff]
    %v118 = vld [vmem:[#allocation5 + $0x20] sm:$0xf]
    %v119 = vld [vmem:[#allocation5 + $0x24] sm:$0xff]
    %v120 = vld [vmem:[#allocation5 + $0x2c] sm:$0xf]
    %v121 = vld [vmem:[#allocation5 + $0x30] sm:$0xff]
    %v122 = vld [vmem:[#allocation5 + $0x38] sm:$0xf]
    %v123 = vld [vmem:[#allocation5 + $0x3c] sm:$0xff]
    %v124 = vld [vmem:[#allocation5 + $0x44] sm:$0xf]
    %v125 = vld [vmem:[#allocation5 + $0x48] sm:$0xff]
    %v126 = vld [vmem:[#allocation5 + $0x50] sm:$0xf]
    %v127 = vld [vmem:[#allocation5 + $0x54] sm:$0xff]
    %v128 = vld [vmem:[#allocation5 + $0x5c] sm:$0xf]
    %v129 = vld [vmem:[#allocation5 + $0x60] sm:$0xff]
    %v130 = vld [vmem:[#allocation5 + $0x68] sm:$0xf]
    %v131 = vld [vmem:[#allocation5 + $0x6c] sm:$0xff]
    %v132 = vld [vmem:[#allocation5 + $0x74] sm:$0xf]
    %v133 = vld [vmem:[#allocation5 + $0x78] sm:$0xff]
    %v134 = vld [vmem:[#allocation5 + $0x80] sm:$0xf]
    %v135 = vld [vmem:[#allocation5 + $0x84] sm:$0xff]
    %v136 = vld [vmem:[#allocation5 + $0x8c] sm:$0xf]
    %v137 = vld [vmem:[#allocation5 + $0x90] sm:$0xff]
    %v138 = vld [vmem:[#allocation5 + $0x98] sm:$0xf]
    %v139 = vld [vmem:[#allocation5 + $0x9c] sm:$0xff]
    %v140 = vld [vmem:[#allocation5 + $0xa4] sm:$0xf]
    %v141 = vld [vmem:[#allocation5 + $0xa8] sm:$0xff]
    %v142 = vld [vmem:[#allocation5 + $0xb0] sm:$0xf]
    %v143 = vld [vmem:[#allocation5 + $0xb4] sm:$0xff]
    %v144 = vld [vmem:[#allocation5 + $0xbc] sm:$0xf]
    %v177 = vunpack.c.l.b16 %v113
    %v178 = vunpack.c.h.b16 %v113
    %v179 = vunpack.c.l.b16 %v114
    %v180 = vunpack.c.l.b16 %v115
    %v181 = vunpack.c.h.b16 %v115
    %v182 = vunpack.c.l.b16 %v116
    %v183 = vunpack.c.l.b16 %v117
    %v184 = vunpack.c.h.b16 %v117
    %v185 = vunpack.c.l.b16 %v118
    %v186 = vunpack.c.l.b16 %v119
    %v187 = vunpack.c.h.b16 %v119
    %v188 = vunpack.c.l.b16 %v120
    %v189 = vunpack.c.l.b16 %v121
    %v190 = vunpack.c.h.b16 %v121
    %v191 = vunpack.c.l.b16 %v122
    %v192 = vunpack.c.l.b16 %v123
    %v193 = vunpack.c.h.b16 %v123
    %v194 = vunpack.c.l.b16 %v124
    %v195 = vunpack.c.l.b16 %v125
    %v196 = vunpack.c.h.b16 %v125
    %v197 = vunpack.c.l.b16 %v126
    %v198 = vunpack.c.l.b16 %v127
    %v199 = vunpack.c.h.b16 %v127
    %v200 = vunpack.c.l.b16 %v128
    %v201 = vunpack.c.l.b16 %v129
    %v202 = vunpack.c.h.b16 %v129
    %v203 = vunpack.c.l.b16 %v130
    %v204 = vunpack.c.l.b16 %v131
    %v205 = vunpack.c.h.b16 %v131
    %v206 = vunpack.c.l.b16 %v132
    %v207 = vunpack.c.l.b16 %v133
    %v208 = vunpack.c.h.b16 %v133
    %v209 = vunpack.c.l.b16 %v134
    %v210 = vunpack.c.l.b16 %v135
    %v211 = vunpack.c.h.b16 %v135
    %v212 = vunpack.c.l.b16 %v136
    %v213 = vunpack.c.l.b16 %v137
    %v214 = vunpack.c.h.b16 %v137
    %v215 = vunpack.c.l.b16 %v138
    %v216 = vunpack.c.l.b16 %v139
    %v217 = vunpack.c.h.b16 %v139
    %v218 = vunpack.c.l.b16 %v140
    %v219 = vunpack.c.l.b16 %v141
    %v220 = vunpack.c.h.b16 %v141
    %v221 = vunpack.c.l.b16 %v142
    %v222 = vunpack.c.l.b16 %v143
    %v223 = vunpack.c.h.b16 %v143
    %v224 = vunpack.c.l.b16 %v144
    %v225 = vpack.c.b16 %v180, %v177
    %v226 = vpack.c.b16 %v181, %v178
    %v227 = vpack.c.b16 %v182, %v179
    %v228 = vpack.c.b16 %v186, %v183
    %v229 = vpack.c.b16 %v187, %v184
    %v230 = vpack.c.b16 %v188, %v185
    %v231 = vpack.c.b16 %v192, %v189
    %v232 = vpack.c.b16 %v193, %v190
    %v233 = vpack.c.b16 %v194, %v191
    %v234 = vpack.c.b16 %v198, %v195
    %v235 = vpack.c.b16 %v199, %v196
    %v236 = vpack.c.b16 %v200, %v197
    %v237 = vpack.c.b16 %v204, %v201
    %v238 = vpack.c.b16 %v205, %v202
    %v239 = vpack.c.b16 %v206, %v203
    %v240 = vpack.c.b16 %v210, %v207
    %v241 = vpack.c.b16 %v211, %v208
    %v242 = vpack.c.b16 %v212, %v209
    %v243 = vpack.c.b16 %v216, %v213
    %v244 = vpack.c.b16 %v217, %v214
    %v245 = vpack.c.b16 %v218, %v215
    %v246 = vpack.c.b16 %v222, %v219
    %v247 = vpack.c.b16 %v223, %v220
    %v248 = vpack.c.b16 %v224, %v221
    %273 = vmatprep.subr.bf16.mxu0 %v226
    %274 = vmatpush1.bf16.msra.mxu0 %v225
    %275 = vmatprep.subr.bf16.mxu0 %v229
    %276 = vmatpush1.bf16.msra.mxu0 %v228
    %277 = vmatprep.subr.bf16.mxu0 %v232
    %278 = vmatpush1.bf16.msra.mxu0 %v231
    %279 = vmatprep.subr.bf16.mxu0 %v235
    %280 = vmatpush1.bf16.msra.mxu0 %v234
    %281 = vmatprep.subr.bf16.mxu0 %v238
    %282 = vmatpush1.bf16.msra.mxu0 %v237
    %283 = vmatprep.subr.bf16.mxu0 %v241
    %284 = vmatpush1.bf16.msra.mxu0 %v240
    %285 = vmatprep.subr.bf16.mxu0 %v244
    %286 = vmatpush1.bf16.msra.mxu0 %v243
    %287 = vmatprep.subr.bf16.mxu0 %v247
    %288 = vmatpush1.bf16.msra.mxu0 %v246
    %289 = vmatprep.subr.bf16.mxu0 0
    %290 = vmatpush1.bf16.msra.mxu0 0
    %291 = vmatprep.subr.bf16.mxu0 0
    %292 = vmatpush1.bf16.msra.mxu0 0
    %293 = vmatprep.subr.bf16.mxu0 0
    %294 = vmatpush1.bf16.msra.mxu0 0
    %295 = vmatprep.subr.bf16.mxu0 0
    %296 = vmatpush1.bf16.msra.mxu0 0
    %297 = vmatprep.subr.bf16.mxu0 0
    %298 = vmatpush1.bf16.msra.mxu0 0
    %299 = vmatprep.subr.bf16.mxu0 0
    %300 = vmatpush1.bf16.msra.mxu0 0
    %301 = vmatprep.subr.bf16.mxu0 0
    %302 = vmatpush1.bf16.msra.mxu0 0
    %303 = vmatprep.subr.bf16.mxu0 0
    %304 = vmatpush1.bf16.msra.mxu0 0
    %305 = vmatprep.mubr.bf16.mxu0 0
    %306 = vmatmul.mubr.bf16.gmra.mrb[0].mxu0 %v112
    %v307 = vpop.f32.mrb[0].mxu0
    %v308 = vadd.f32 0.0, %v307
    %v309 = vpop.f32.mrb[0].mxu0
    %v310 = vadd.f32 0.0, %v309
    %v311 = vpop.f32.mrb[0].mxu0
    %v312 = vadd.f32 0.0, %v311
    %v313 = vpop.f32.mrb[0].mxu0
    %v314 = vadd.f32 0.0, %v313
    %315 = vdwg.mxu0
    %316 = vmatprep.subr.bf16.mxu0 0
    %317 = vmatpush1.bf16.msra.mxu0 %v227
    %318 = vmatprep.subr.bf16.mxu0 0
    %319 = vmatpush1.bf16.msra.mxu0 %v230
    %320 = vmatprep.subr.bf16.mxu0 0
    %321 = vmatpush1.bf16.msra.mxu0 %v233
    %322 = vmatprep.subr.bf16.mxu0 0
    %323 = vmatpush1.bf16.msra.mxu0 %v236
    %324 = vmatprep.subr.bf16.mxu0 0
    %325 = vmatpush1.bf16.msra.mxu0 %v239
    %326 = vmatprep.subr.bf16.mxu0 0
    %327 = vmatpush1.bf16.msra.mxu0 %v242
    %328 = vmatprep.subr.bf16.mxu0 0
    %329 = vmatpush1.bf16.msra.mxu0 %v245
    %330 = vmatprep.subr.bf16.mxu0 0
    %331 = vmatpush1.bf16.msra.mxu0 %v248
    %332 = vmatprep.subr.bf16.mxu0 0
    %333 = vmatpush1.bf16.msra.mxu0 0
    %334 = vmatprep.subr.bf16.mxu0 0
    %335 = vmatpush1.bf16.msra.mxu0 0
    %336 = vmatprep.subr.bf16.mxu0 0
    %337 = vmatpush1.bf16.msra.mxu0 0
    %338 = vmatprep.subr.bf16.mxu0 0
    %339 = vmatpush1.bf16.msra.mxu0 0
    %340 = vmatprep.subr.bf16.mxu0 0
    %341 = vmatpush1.bf16.msra.mxu0 0
    %342 = vmatprep.subr.bf16.mxu0 0
    %343 = vmatpush1.bf16.msra.mxu0 0
    %344 = vmatprep.subr.bf16.mxu0 0
    %345 = vmatpush1.bf16.msra.mxu0 0
    %346 = vmatprep.subr.bf16.mxu0 0
    %347 = vmatpush1.bf16.msra.mxu0 0
    %348 = vmatprep.mubr.bf16.mxu0 0
    %349 = vmatmul.mubr.bf16.gmra.mrb[0].mxu0 %v112
    %v350 = vpop.f32.mrb[0].mxu0
    %v351 = vadd.f32 0.0, %v350
    %v352 = vpop.f32.mrb[0].mxu0
    %v353 = vpop.f32.mrb[0].mxu0
    %v354 = vadd.f32 0.0, %v353
    %v355 = vpop.f32.mrb[0].mxu0
    %356 = vdwg.mxu0
    %v357 = vld [vmem:[%s9] sm:$0x1]
    %v359 = vlaneseq
    %v360 = vshrl.u32 %v359, 7
    %v361 = vsub.s32 0, %v360
    %v362 = vrot.slane %v357, %v361
    %v364 = vadd.f32 %v308, %v362
    %v365 = vadd.f32 %v312, %v362
    %v366 = vpack.c.bf16 %v314, %v310
    %367 = vst [vmem:[#allocation2] sm:$0xff] %v366
    %v368 = vmul.f32 %v310, %v310
    %v369 = vmul.f32 %v314, %v314
    %v370 = vpack.c.bf16 %v369, %v368
    %371 = vst [vmem:[#allocation2 + $0x8] sm:$0xff] %v370
    %v372 = vld [vmem:[#allocation2] sm:$0xff]
    %v373 = vld [vmem:[#allocation2 + $0x8] sm:$0xff]
    %v376 = vunpack.c.l.b16 %v90
    %v377 = vunpack.c.l.b16 %v91
    %v378 = vpack.c.b16 %v377, %v376
    %vm379 = vcmask 130048
    %v381 = vsel %vm379, %v378, 0
    %383 = vmatprep.subr.bf16.mxu0 %v373
    %384 = vmatpush1.bf16.msra.mxu0 %v372
    %385 = vmatprep.subr.bf16.mxu0 0
    %386 = vmatpush1.bf16.msra.mxu0 0
    %387 = vmatprep.subr.bf16.mxu0 0
    %388 = vmatpush1.bf16.msra.mxu0 0
    %389 = vmatprep.subr.bf16.mxu0 0
    %390 = vmatpush1.bf16.msra.mxu0 0
    %391 = vmatprep.subr.bf16.mxu0 0
    %392 = vmatpush1.bf16.msra.mxu0 0
    %393 = vmatprep.subr.bf16.mxu0 0
    %394 = vmatpush1.bf16.msra.mxu0 0
    %395 = vmatprep.subr.bf16.mxu0 0
    %396 = vmatpush1.bf16.msra.mxu0 0
    %397 = vmatprep.subr.bf16.mxu0 0
    %398 = vmatpush1.bf16.msra.mxu0 0
    %399 = vmatprep.subr.bf16.mxu0 0
    %400 = vmatpush1.bf16.msra.mxu0 0
    %401 = vmatprep.subr.bf16.mxu0 0
    %402 = vmatpush1.bf16.msra.mxu0 0
    %403 = vmatprep.subr.bf16.mxu0 0
    %404 = vmatpush1.bf16.msra.mxu0 0
    %405 = vmatprep.subr.bf16.mxu0 0
    %406 = vmatpush1.bf16.msra.mxu0 0
    %407 = vmatprep.subr.bf16.mxu0 0
    %408 = vmatpush1.bf16.msra.mxu0 0
    %409 = vmatprep.subr.bf16.mxu0 0
    %410 = vmatpush1.bf16.msra.mxu0 0
    %411 = vmatprep.subr.bf16.mxu0 0
    %412 = vmatpush1.bf16.msra.mxu0 0
    %413 = vmatprep.subr.bf16.mxu0 0
    %414 = vmatpush1.bf16.msra.mxu0 0
    %415 = vmatprep.mubr.bf16.mxu0 0
    %416 = vmatmul.mubr.bf16.gmra.mrb[0].mxu0 %v381
    %v417 = vpop.f32.mrb[0].mxu0
    %v418 = vadd.f32 0.0, %v417
    %v419 = vpop.f32.mrb[0].mxu0
    %v420 = vadd.f32 0.0, %v419
    %v421 = vpop.f32.mrb[0].mxu0
    %v422 = vadd.f32 0.0, %v421
    %v423 = vpop.f32.mrb[0].mxu0
    %v424 = vadd.f32 0.0, %v423
    %425 = vdwg.mxu0
    %427 = vset.pattern.permute.xlu0 0
    %428 = vperm.xlu0 %427, %v102
    %v429 = vpop.permute.xlu0 %428
    %432 = vset.pattern.permute.xlu0 0
    %433 = vperm.xlu0 %432, %v103
    %v434 = vpop.permute.xlu0 %433
    %v436 = vmul.f32 %v418, %v429
    %v437 = vmul.f32 %v422, %v434
    %v438 = vmul.f32 %v420, %v429
    %v439 = vmul.f32 %v424, %v434
    %441 = vset.pattern.permute.xlu0 0
    %442 = vperm.xlu0 %441, %v92
    %v443 = vpop.permute.xlu0 %442
    %446 = vset.pattern.permute.xlu0 0
    %447 = vperm.xlu0 %446, %v93
    %v448 = vpop.permute.xlu0 %447
    %v450 = vmul.f32 %v443, %v364
    %v451 = vmul.f32 %v448, %v365
    %v452 = vadd.f32 %v450, %v418
    %v453 = vadd.f32 %v451, %v422
    %v454 = vadd.f32 %v364, %v436
    %v455 = vadd.f32 %v365, %v437
    %457 = vset.pattern.permute.xlu0 0
    %458 = vperm.xlu0 %457, %v108
    %v459 = vpop.permute.xlu0 %458
    %462 = vset.pattern.permute.xlu0 0
    %463 = vperm.xlu0 %462, %v109
    %v464 = vpop.permute.xlu0 %463
    %v466 = vmul.f32 %v454, %v459
    %v467 = vmul.f32 %v455, %v464
    %v468 = vmul.f32 %v436, %v436
    %v469 = vmul.f32 %v437, %v437
    %v470 = vsub.f32 %v438, %v468
    %v471 = vsub.f32 %v439, %v469
    %v472 = vmax.f32 %v470, 0.0
    %v473 = vmax.f32 %v471, 0.0
    %v474 = vadd.f32 %v472, 1e-05
    %v475 = vadd.f32 %v473, 1e-05
    %v476 = vrsqrt.pop %v474
    %v477 = vmul.f32 %v474, %v476
    %vm478 = vcmp.eq.f32.partialorder %v474, inf
    %v479 = vsel %vm478, %v474, %v477
    %vm480 = vcmp.eq.f32.partialorder %v474, 0.0
    %v481 = vand.u32 %v474, 2147483648
    %v482 = vsel %vm480, %v481, %v479
    %v483 = vrsqrt.pop %v475
    %v484 = vmul.f32 %v475, %v483
    %vm485 = vcmp.eq.f32.partialorder %v475, inf
    %v486 = vsel %vm485, %v475, %v484
    %vm487 = vcmp.eq.f32.partialorder %v475, 0.0
    %v488 = vand.u32 %v475, 2147483648
    %v489 = vsel %vm487, %v488, %v486
    %s490 = smul.u32 0, 2
    %s491 = smul.addr %s490, 8
    %s492 = scalar_lea.vmem [#allocation2], %s491
    %v493 = vld [vmem:[%s492] sm:$0xff]
    %v494 = vunpack.c.l.bf16 %v493
    %v495 = vunpack.c.h.bf16 %v493
    %v496 = vld [vmem:[%s2] sm:$0xff]
    %v497 = vld [vmem:[%s2 + $0x8] sm:$0xff]
    %v500 = vcombine.high %v494, %v494
    %v502 = vunpack.c.l.s4 1966171168
    %v503 = vunpack.c.0.s8 %v502
    %v504 = vlaneseq
    %v505 = vshrl.u32 %v504, 7
    %v506 = vsub.s32 %v503, %v505
    %v507 = vrot.slane %v494, %v506
    %v509 = vunpack.c.l.s4 1966171168
    %v510 = vunpack.c.0.s8 %v509
    %v511 = vlaneseq
    %v512 = vshrl.u32 %v511, 7
    %v513 = vsub.s32 %v510, %v512
    %v514 = vrot.slane %v500, %v513
    %v515 = vcombine.high %v507, %v507
    %v516 = vcombine.high %v514, %v514
    %v518 = vunpack.c.l.s4 1966171168
    %v519 = vunpack.c.0.s8 %v518
    %v520 = vlaneseq
    %v521 = vshrl.u32 %v520, 7
    %v522 = vsub.s32 %v519, %v521
    %v523 = vrot.slane %v507, %v522
    %v525 = vunpack.c.l.s4 1966171168
    %v526 = vunpack.c.0.s8 %v525
    %v527 = vlaneseq
    %v528 = vshrl.u32 %v527, 7
    %v529 = vsub.s32 %v526, %v528
    %v530 = vrot.slane %v514, %v529
    %v532 = vunpack.c.l.s4 1966171168
    %v533 = vunpack.c.0.s8 %v532
    %v534 = vlaneseq
    %v535 = vshrl.u32 %v534, 7
    %v536 = vsub.s32 %v533, %v535
    %v537 = vrot.slane %v515, %v536
    %v539 = vunpack.c.l.s4 1966171168
    %v540 = vunpack.c.0.s8 %v539
    %v541 = vlaneseq
    %v542 = vshrl.u32 %v541, 7
    %v543 = vsub.s32 %v540, %v542
    %v544 = vrot.slane %v516, %v543
    %v545 = vcombine.high %v523, %v523
    %v546 = vcombine.high %v530, %v530
    %v547 = vcombine.high %v537, %v537
    %v548 = vcombine.high %v544, %v544
    %v549 = vcombine.high %v495, %v495
    %v551 = vunpack.c.l.s4 1966171168
    %v552 = vunpack.c.0.s8 %v551
    %v553 = vlaneseq
    %v554 = vshrl.u32 %v553, 7
    %v555 = vsub.s32 %v552, %v554
    %v556 = vrot.slane %v495, %v555
    %v558 = vunpack.c.l.s4 1966171168
    %v559 = vunpack.c.0.s8 %v558
    %v560 = vlaneseq
    %v561 = vshrl.u32 %v560, 7
    %v562 = vsub.s32 %v559, %v561
    %v563 = vrot.slane %v549, %v562
    %v564 = vcombine.high %v556, %v556
    %v565 = vcombine.high %v563, %v563
    %v567 = vunpack.c.l.s4 1966171168
    %v568 = vunpack.c.0.s8 %v567
    %v569 = vlaneseq
    %v570 = vshrl.u32 %v569, 7
    %v571 = vsub.s32 %v568, %v570
    %v572 = vrot.slane %v556, %v571
    %v574 = vunpack.c.l.s4 1966171168
    %v575 = vunpack.c.0.s8 %v574
    %v576 = vlaneseq
    %v577 = vshrl.u32 %v576, 7
    %v578 = vsub.s32 %v575, %v577
    %v579 = vrot.slane %v563, %v578
    %v581 = vunpack.c.l.s4 1966171168
    %v582 = vunpack.c.0.s8 %v581
    %v583 = vlaneseq
    %v584 = vshrl.u32 %v583, 7
    %v585 = vsub.s32 %v582, %v584
    %v586 = vrot.slane %v564, %v585
    %v588 = vunpack.c.l.s4 1966171168
    %v589 = vunpack.c.0.s8 %v588
    %v590 = vlaneseq
    %v591 = vshrl.u32 %v590, 7
    %v592 = vsub.s32 %v589, %v591
    %v593 = vrot.slane %v565, %v592
    %v594 = vcombine.high %v572, %v572
    %v595 = vcombine.high %v579, %v579
    %v596 = vcombine.high %v586, %v586
    %v597 = vcombine.high %v593, %v593
    %v598 = vlaneseq
    %v599 = vshrl.u32 %v598, 7
    %v600 = vsub.s32 0, %v599
    %v601 = vrot.slane %v496, %v600
    %603 = vbcast.lane.b32.xlu0 %v601, 256
    %v604 = vpop.permute.xlu0 %603
    %s606 = sor.u32 256, 8
    %607 = vbcast.lane.b32.xlu0 %v601, %s606
    %v608 = vpop.permute.xlu0 %607
    %v609 = vlaneseq
    %v610 = vshrl.u32 %v609, 7
    %v611 = vsub.s32 1, %v610
    %v612 = vrot.slane %v496, %v611
    %614 = vbcast.lane.b32.xlu0 %v612, 256
    %v615 = vpop.permute.xlu0 %614
    %s617 = sor.u32 256, 8
    %618 = vbcast.lane.b32.xlu0 %v612, %s617
    %v619 = vpop.permute.xlu0 %618
    %v620 = vlaneseq
    %v621 = vshrl.u32 %v620, 7
    %v622 = vsub.s32 2, %v621
    %v623 = vrot.slane %v496, %v622
    %625 = vbcast.lane.b32.xlu0 %v623, 256
    %v626 = vpop.permute.xlu0 %625
    %s628 = sor.u32 256, 8
    %629 = vbcast.lane.b32.xlu0 %v623, %s628
    %v630 = vpop.permute.xlu0 %629
    %v631 = vlaneseq
    %v632 = vshrl.u32 %v631, 7
    %v633 = vsub.s32 3, %v632
    %v634 = vrot.slane %v496, %v633
    %636 = vbcast.lane.b32.xlu0 %v634, 256
    %v637 = vpop.permute.xlu0 %636
    %s639 = sor.u32 256, 8
    %640 = vbcast.lane.b32.xlu0 %v634, %s639
    %v641 = vpop.permute.xlu0 %640
    %v642 = vlaneseq
    %v643 = vshrl.u32 %v642, 7
    %v644 = vsub.s32 4, %v643
    %v645 = vrot.slane %v496, %v644
    %647 = vbcast.lane.b32.xlu0 %v645, 256
    %v648 = vpop.permute.xlu0 %647
    %s650 = sor.u32 256, 8
    %651 = vbcast.lane.b32.xlu0 %v645, %s650
    %v652 = vpop.permute.xlu0 %651
    %v653 = vlaneseq
    %v654 = vshrl.u32 %v653, 7
    %v655 = vsub.s32 5, %v654
    %v656 = vrot.slane %v496, %v655
    %658 = vbcast.lane.b32.xlu0 %v656, 256
    %v659 = vpop.permute.xlu0 %658
    %s661 = sor.u32 256, 8
    %662 = vbcast.lane.b32.xlu0 %v656, %s661
    %v663 = vpop.permute.xlu0 %662
    %v664 = vlaneseq
    %v665 = vshrl.u32 %v664, 7
    %v666 = vsub.s32 6, %v665
    %v667 = vrot.slane %v496, %v666
    %669 = vbcast.lane.b32.xlu0 %v667, 256
    %v670 = vpop.permute.xlu0 %669
    %s672 = sor.u32 256, 8
    %673 = vbcast.lane.b32.xlu0 %v667, %s672
    %v674 = vpop.permute.xlu0 %673
    %v675 = vlaneseq
    %v676 = vshrl.u32 %v675, 7
    %v677 = vsub.s32 7, %v676
    %v678 = vrot.slane %v496, %v677
    %680 = vbcast.lane.b32.xlu0 %v678, 256
    %v681 = vpop.permute.xlu0 %680
    %s683 = sor.u32 256, 8
    %684 = vbcast.lane.b32.xlu0 %v678, %s683
    %v685 = vpop.permute.xlu0 %684
    %v686 = vlaneseq
    %v687 = vshrl.u32 %v686, 7
    %v688 = vsub.s32 0, %v687
    %v689 = vrot.slane %v497, %v688
    %691 = vbcast.lane.b32.xlu0 %v689, 256
    %v692 = vpop.permute.xlu0 %691
    %s694 = sor.u32 256, 8
    %695 = vbcast.lane.b32.xlu0 %v689, %s694
    %v696 = vpop.permute.xlu0 %695
    %v697 = vlaneseq
    %v698 = vshrl.u32 %v697, 7
    %v699 = vsub.s32 1, %v698
    %v700 = vrot.slane %v497, %v699
    %702 = vbcast.lane.b32.xlu0 %v700, 256
    %v703 = vpop.permute.xlu0 %702
    %s705 = sor.u32 256, 8
    %706 = vbcast.lane.b32.xlu0 %v700, %s705
    %v707 = vpop.permute.xlu0 %706
    %v708 = vlaneseq
    %v709 = vshrl.u32 %v708, 7
    %v710 = vsub.s32 2, %v709
    %v711 = vrot.slane %v497, %v710
    %713 = vbcast.lane.b32.xlu0 %v711, 256
    %v714 = vpop.permute.xlu0 %713
    %s716 = sor.u32 256, 8
    %717 = vbcast.lane.b32.xlu0 %v711, %s716
    %v718 = vpop.permute.xlu0 %717
    %v719 = vlaneseq
    %v720 = vshrl.u32 %v719, 7
    %v721 = vsub.s32 3, %v720
    %v722 = vrot.slane %v497, %v721
    %724 = vbcast.lane.b32.xlu0 %v722, 256
    %v725 = vpop.permute.xlu0 %724
    %s727 = sor.u32 256, 8
    %728 = vbcast.lane.b32.xlu0 %v722, %s727
    %v729 = vpop.permute.xlu0 %728
    %v730 = vlaneseq
    %v731 = vshrl.u32 %v730, 7
    %v732 = vsub.s32 4, %v731
    %v733 = vrot.slane %v497, %v732
    %735 = vbcast.lane.b32.xlu0 %v733, 256
    %v736 = vpop.permute.xlu0 %735
    %s738 = sor.u32 256, 8
    %739 = vbcast.lane.b32.xlu0 %v733, %s738
    %v740 = vpop.permute.xlu0 %739
    %v741 = vlaneseq
    %v742 = vshrl.u32 %v741, 7
    %v743 = vsub.s32 5, %v742
    %v744 = vrot.slane %v497, %v743
    %746 = vbcast.lane.b32.xlu0 %v744, 256
    %v747 = vpop.permute.xlu0 %746
    %s749 = sor.u32 256, 8
    %750 = vbcast.lane.b32.xlu0 %v744, %s749
    %v751 = vpop.permute.xlu0 %750
    %v752 = vlaneseq
    %v753 = vshrl.u32 %v752, 7
    %v754 = vsub.s32 6, %v753
    %v755 = vrot.slane %v497, %v754
    %757 = vbcast.lane.b32.xlu0 %v755, 256
    %v758 = vpop.permute.xlu0 %757
    %s760 = sor.u32 256, 8
    %761 = vbcast.lane.b32.xlu0 %v755, %s760
    %v762 = vpop.permute.xlu0 %761
    %v763 = vlaneseq
    %v764 = vshrl.u32 %v763, 7
    %v765 = vsub.s32 7, %v764
    %v766 = vrot.slane %v497, %v765
    %768 = vbcast.lane.b32.xlu0 %v766, 256
    %v769 = vpop.permute.xlu0 %768
    %s771 = sor.u32 256, 8
    %772 = vbcast.lane.b32.xlu0 %v766, %s771
    %v773 = vpop.permute.xlu0 %772
    %v774 = vlaneseq
    %v775 = vshrl.u32 %v774, 7
    %v776 = vsub.s32 0, %v775
    %v777 = vrot.slane %v523, %v776
    %v778 = vlaneseq
    %v779 = vshrl.u32 %v778, 7
    %v780 = vsub.s32 0, %v779
    %v781 = vrot.slane %v537, %v780
    %v782 = vlaneseq
    %v783 = vshrl.u32 %v782, 7
    %v784 = vsub.s32 0, %v783
    %v785 = vrot.slane %v545, %v784
    %v786 = vlaneseq
    %v787 = vshrl.u32 %v786, 7
    %v788 = vsub.s32 0, %v787
    %v789 = vrot.slane %v547, %v788
    %v790 = vlaneseq
    %v791 = vshrl.u32 %v790, 7
    %v792 = vsub.s32 0, %v791
    %v793 = vrot.slane %v530, %v792
    %v794 = vlaneseq
    %v795 = vshrl.u32 %v794, 7
    %v796 = vsub.s32 0, %v795
    %v797 = vrot.slane %v544, %v796
    %v798 = vlaneseq
    %v799 = vshrl.u32 %v798, 7
    %v800 = vsub.s32 0, %v799
    %v801 = vrot.slane %v546, %v800
    %v802 = vlaneseq
    %v803 = vshrl.u32 %v802, 7
    %v804 = vsub.s32 0, %v803
    %v805 = vrot.slane %v548, %v804
    %v806 = vlaneseq
    %v807 = vshrl.u32 %v806, 7
    %v808 = vsub.s32 0, %v807
    %v809 = vrot.slane %v572, %v808
    %v810 = vlaneseq
    %v811 = vshrl.u32 %v810, 7
    %v812 = vsub.s32 0, %v811
    %v813 = vrot.slane %v586, %v812
    %v814 = vlaneseq
    %v815 = vshrl.u32 %v814, 7
    %v816 = vsub.s32 0, %v815
    %v817 = vrot.slane %v594, %v816
    %v818 = vlaneseq
    %v819 = vshrl.u32 %v818, 7
    %v820 = vsub.s32 0, %v819
    %v821 = vrot.slane %v596, %v820
    %v822 = vlaneseq
    %v823 = vshrl.u32 %v822, 7
    %v824 = vsub.s32 0, %v823
    %v825 = vrot.slane %v579, %v824
    %v826 = vlaneseq
    %v827 = vshrl.u32 %v826, 7
    %v828 = vsub.s32 0, %v827
    %v829 = vrot.slane %v593, %v828
    %v830 = vlaneseq
    %v831 = vshrl.u32 %v830, 7
    %v832 = vsub.s32 0, %v831
    %v833 = vrot.slane %v595, %v832
    %v834 = vlaneseq
    %v835 = vshrl.u32 %v834, 7
    %v836 = vsub.s32 0, %v835
    %v837 = vrot.slane %v597, %v836
    %v854 = vadd.f32 %v777, %v604
    %v855 = vadd.f32 %v777, %v608
    %v856 = vadd.f32 %v781, %v615
    %v857 = vadd.f32 %v781, %v619
    %v858 = vadd.f32 %v785, %v626
    %v859 = vadd.f32 %v785, %v630
    %v860 = vadd.f32 %v789, %v637
    %v861 = vadd.f32 %v789, %v641
    %v862 = vadd.f32 %v793, %v648
    %v863 = vadd.f32 %v793, %v652
    %v864 = vadd.f32 %v797, %v659
    %v865 = vadd.f32 %v797, %v663
    %v866 = vadd.f32 %v801, %v670
    %v867 = vadd.f32 %v801, %v674
    %v868 = vadd.f32 %v805, %v681
    %v869 = vadd.f32 %v805, %v685
    %v870 = vadd.f32 %v809, %v692
    %v871 = vadd.f32 %v809, %v696
    %v872 = vadd.f32 %v813, %v703
    %v873 = vadd.f32 %v813, %v707
    %v874 = vadd.f32 %v817, %v714
    %v875 = vadd.f32 %v817, %v718
    %v876 = vadd.f32 %v821, %v725
    %v877 = vadd.f32 %v821, %v729
    %v878 = vadd.f32 %v825, %v736
    %v879 = vadd.f32 %v825, %v740
    %v880 = vadd.f32 %v829, %v747
    %v881 = vadd.f32 %v829, %v751
    %v882 = vadd.f32 %v833, %v758
    %v883 = vadd.f32 %v833, %v762
    %v884 = vadd.f32 %v837, %v769
    %v885 = vadd.f32 %v837, %v773
    %v886 = vmax.f32 %v854, %v858
    %v887 = vmax.f32 %v856, %v860
    %v888 = vmax.f32 %v886, %v862
    %v889 = vmax.f32 %v887, %v864
    %v890 = vmax.f32 %v888, %v866
    %v891 = vmax.f32 %v889, %v868
    %v892 = vmax.f32 %v890, %v870
    %v893 = vmax.f32 %v891, %v872
    %v894 = vmax.f32 %v892, %v874
    %v895 = vmax.f32 %v893, %v876
    %v896 = vmax.f32 %v894, %v878
    %v897 = vmax.f32 %v895, %v880
    %v898 = vmax.f32 %v896, %v882
    %v899 = vmax.f32 %v897, %v884
    %v900 = vmax.f32 %v898, %v899
    %v901 = vmax.f32 %v855, %v859
    %v902 = vmax.f32 %v857, %v861
    %v903 = vmax.f32 %v901, %v863
    %v904 = vmax.f32 %v902, %v865
    %v905 = vmax.f32 %v903, %v867
    %v906 = vmax.f32 %v904, %v869
    %v907 = vmax.f32 %v905, %v871
    %v908 = vmax.f32 %v906, %v873
    %v909 = vmax.f32 %v907, %v875
    %v910 = vmax.f32 %v908, %v877
    %v911 = vmax.f32 %v909, %v879
    %v912 = vmax.f32 %v910, %v881
    %v913 = vmax.f32 %v911, %v883
    %v914 = vmax.f32 %v912, %v885
    %v915 = vmax.f32 %v913, %v914
    %v916 = vmax.f32 %v900, -1e+30
    %v917 = vmax.f32 %v915, -1e+30
    %v918 = vsub.f32 %v777, %v604
    %v919 = vsub.f32 %v777, %v608
    %v920 = vsub.f32 %v781, %v615
    %v921 = vsub.f32 %v781, %v619
    %v922 = vsub.f32 %v785, %v626
    %v923 = vsub.f32 %v785, %v630
    %v924 = vsub.f32 %v789, %v637
    %v925 = vsub.f32 %v789, %v641
    %v926 = vsub.f32 %v793, %v648
    %v927 = vsub.f32 %v793, %v652
    %v928 = vsub.f32 %v797, %v659
    %v929 = vsub.f32 %v797, %v663
    %v930 = vsub.f32 %v801, %v670
    %v931 = vsub.f32 %v801, %v674
    %v932 = vsub.f32 %v805, %v681
    %v933 = vsub.f32 %v805, %v685
    %v934 = vsub.f32 %v809, %v692
    %v935 = vsub.f32 %v809, %v696
    %v936 = vsub.f32 %v813, %v703
    %v937 = vsub.f32 %v813, %v707
    %v938 = vsub.f32 %v817, %v714
    %v939 = vsub.f32 %v817, %v718
    %v940 = vsub.f32 %v821, %v725
    %v941 = vsub.f32 %v821, %v729
    %v942 = vsub.f32 %v825, %v736
    %v943 = vsub.f32 %v825, %v740
    %v944 = vsub.f32 %v829, %v747
    %v945 = vsub.f32 %v829, %v751
    %v946 = vsub.f32 %v833, %v758
    %v947 = vsub.f32 %v833, %v762
    %v948 = vsub.f32 %v837, %v769
    %v949 = vsub.f32 %v837, %v773
    %v950 = vmin.f32 %v918, %v922
    %v951 = vmin.f32 %v920, %v924
    %v952 = vmin.f32 %v950, %v926
    %v953 = vmin.f32 %v951, %v928
    %v954 = vmin.f32 %v952, %v930
    %v955 = vmin.f32 %v953, %v932
    %v956 = vmin.f32 %v954, %v934
    %v957 = vmin.f32 %v955, %v936
    %v958 = vmin.f32 %v956, %v938
    %v959 = vmin.f32 %v957, %v940
    %v960 = vmin.f32 %v958, %v942
    %v961 = vmin.f32 %v959, %v944
    %v962 = vmin.f32 %v960, %v946
    %v963 = vmin.f32 %v961, %v948
    %v964 = vmin.f32 %v962, %v963
    %v965 = vmin.f32 %v919, %v923
    %v966 = vmin.f32 %v921, %v925
    %v967 = vmin.f32 %v965, %v927
    %v968 = vmin.f32 %v966, %v929
    %v969 = vmin.f32 %v967, %v931
    %v970 = vmin.f32 %v968, %v933
    %v971 = vmin.f32 %v969, %v935
    %v972 = vmin.f32 %v970, %v937
    %v973 = vmin.f32 %v971, %v939
    %v974 = vmin.f32 %v972, %v941
    %v975 = vmin.f32 %v973, %v943
    %v976 = vmin.f32 %v974, %v945
    %v977 = vmin.f32 %v975, %v947
    %v978 = vmin.f32 %v976, %v949
    %v979 = vmin.f32 %v977, %v978
    %v980 = vmin.f32 %v964, 1e+30
    %v981 = vmin.f32 %v979, 1e+30
    %v982 = vadd.f32 %v364, %v916
    %v983 = vadd.f32 %v365, %v917
    %v984 = vmul.f32 %v982, %v459
    %v985 = vmul.f32 %v983, %v464
    %v986 = vadd.f32 %v364, %v980
    %v987 = vadd.f32 %v365, %v981
    %v988 = vmul.f32 %v986, %v459
    %v989 = vmul.f32 %v987, %v464
    %v990 = vpack.c.bf16 %v453, %v452
    %991 = vst [vmem:[#allocation3] sm:$0xff] %v990
    %v992 = vpack.c.bf16 %v467, %v466
    %993 = vst [vmem:[#allocation3 + $0x8] sm:$0xff] %v992
    %v994 = vpack.c.bf16 %v489, %v482
    %995 = vst [vmem:[#allocation3 + $0x10] sm:$0xff] %v994
    %v996 = vpack.c.bf16 %v985, %v984
    %997 = vst [vmem:[#allocation3 + $0x18] sm:$0xff] %v996
    %v998 = vpack.c.bf16 %v989, %v988
    %999 = vst [vmem:[#allocation3 + $0x20] sm:$0xff] %v998
    %v1000 = vld [vmem:[#allocation3] sm:$0xff]
    %v1001 = vld [vmem:[#allocation3 + $0x8] sm:$0xff]
    %v1002 = vld [vmem:[#allocation3 + $0x10] sm:$0xff]
    %v1003 = vld [vmem:[#allocation3 + $0x18] sm:$0xff]
    %v1004 = vld [vmem:[#allocation3 + $0x20] sm:$0xff]
    %v1005 = vld [vmem:[#allocation7] sm:$0xff]
    %v1006 = vld [vmem:[#allocation7 + $0x8] sm:$0xf]
    %v1007 = vld [vmem:[#allocation7 + $0xc] sm:$0xff]
    %v1008 = vld [vmem:[#allocation7 + $0x14] sm:$0xf]
    %v1009 = vld [vmem:[#allocation7 + $0x18] sm:$0xff]
    %v1010 = vld [vmem:[#allocation7 + $0x20] sm:$0xf]
    %v1011 = vld [vmem:[#allocation7 + $0x24] sm:$0xff]
    %v1012 = vld [vmem:[#allocation7 + $0x2c] sm:$0xf]
    %v1013 = vld [vmem:[#allocation7 + $0x30] sm:$0xff]
    %v1014 = vld [vmem:[#allocation7 + $0x38] sm:$0xf]
    %v1015 = vld [vmem:[#allocation7 + $0x3c] sm:$0xff]
    %v1016 = vld [vmem:[#allocation7 + $0x44] sm:$0xf]
    %v1017 = vld [vmem:[#allocation7 + $0x48] sm:$0xff]
    %v1018 = vld [vmem:[#allocation7 + $0x50] sm:$0xf]
    %v1019 = vld [vmem:[#allocation7 + $0x54] sm:$0xff]
    %v1020 = vld [vmem:[#allocation7 + $0x5c] sm:$0xf]
    %v1021 = vld [vmem:[#allocation7 + $0x60] sm:$0xff]
    %v1022 = vld [vmem:[#allocation7 + $0x68] sm:$0xf]
    %v1023 = vld [vmem:[#allocation7 + $0x6c] sm:$0xff]
    %v1024 = vld [vmem:[#allocation7 + $0x74] sm:$0xf]
    %v1025 = vld [vmem:[#allocation7 + $0x78] sm:$0xff]
    %v1026 = vld [vmem:[#allocation7 + $0x80] sm:$0xf]
    %v1027 = vld [vmem:[#allocation7 + $0x84] sm:$0xff]
    %v1028 = vld [vmem:[#allocation7 + $0x8c] sm:$0xf]
    %v1029 = vld [vmem:[#allocation7 + $0x90] sm:$0xff]
    %v1030 = vld [vmem:[#allocation7 + $0x98] sm:$0xf]
    %v1031 = vld [vmem:[#allocation7 + $0x9c] sm:$0xff]
    %v1032 = vld [vmem:[#allocation7 + $0xa4] sm:$0xf]
    %v1033 = vld [vmem:[#allocation7 + $0xa8] sm:$0xff]
    %v1034 = vld [vmem:[#allocation7 + $0xb0] sm:$0xf]
    %v1035 = vld [vmem:[#allocation7 + $0xb4] sm:$0xff]
    %v1036 = vld [vmem:[#allocation7 + $0xbc] sm:$0xf]
    %v1037 = vld [vmem:[#allocation7 + $0xc0] sm:$0xff]
    %v1038 = vld [vmem:[#allocation7 + $0xc8] sm:$0xf]
    %v1039 = vld [vmem:[#allocation7 + $0xcc] sm:$0xff]
    %v1040 = vld [vmem:[#allocation7 + $0xd4] sm:$0xf]
    %v1041 = vld [vmem:[#allocation7 + $0xd8] sm:$0xff]
    %v1042 = vld [vmem:[#allocation7 + $0xe0] sm:$0xf]
    %v1043 = vld [vmem:[#allocation7 + $0xe4] sm:$0xff]
    %v1044 = vld [vmem:[#allocation7 + $0xec] sm:$0xf]
    %v1045 = vld [vmem:[#allocation7 + $0xf0] sm:$0xff]
    %v1046 = vld [vmem:[#allocation7 + $0xf8] sm:$0xf]
    %v1047 = vld [vmem:[#allocation7 + $0xfc] sm:$0xff]
    %v1048 = vld [vmem:[#allocation7 + $0x104] sm:$0xf]
    %v1049 = vld [vmem:[#allocation7 + $0x108] sm:$0xff]
    %v1050 = vld [vmem:[#allocation7 + $0x110] sm:$0xf]
    %v1051 = vld [vmem:[#allocation7 + $0x114] sm:$0xff]
    %v1052 = vld [vmem:[#allocation7 + $0x11c] sm:$0xf]
    %v1053 = vld [vmem:[#allocation7 + $0x120] sm:$0xff]
    %v1054 = vld [vmem:[#allocation7 + $0x128] sm:$0xf]
    %v1055 = vld [vmem:[#allocation7 + $0x12c] sm:$0xff]
    %v1056 = vld [vmem:[#allocation7 + $0x134] sm:$0xf]
    %v1057 = vld [vmem:[#allocation7 + $0x138] sm:$0xff]
    %v1058 = vld [vmem:[#allocation7 + $0x140] sm:$0xf]
    %v1059 = vld [vmem:[#allocation7 + $0x144] sm:$0xff]
    %v1060 = vld [vmem:[#allocation7 + $0x14c] sm:$0xf]
    %v1061 = vld [vmem:[#allocation7 + $0x150] sm:$0xff]
    %v1062 = vld [vmem:[#allocation7 + $0x158] sm:$0xf]
    %v1063 = vld [vmem:[#allocation7 + $0x15c] sm:$0xff]
    %v1064 = vld [vmem:[#allocation7 + $0x164] sm:$0xf]
    %v1065 = vld [vmem:[#allocation7 + $0x168] sm:$0xff]
    %v1066 = vld [vmem:[#allocation7 + $0x170] sm:$0xf]
    %v1067 = vld [vmem:[#allocation7 + $0x174] sm:$0xff]
    %v1068 = vld [vmem:[#allocation7 + $0x17c] sm:$0xf]
    %v1069 = vld [vmem:[#allocation7 + $0x180] sm:$0xff]
    %v1070 = vld [vmem:[#allocation7 + $0x188] sm:$0xf]
    %v1071 = vld [vmem:[#allocation7 + $0x18c] sm:$0xff]
    %v1072 = vld [vmem:[#allocation7 + $0x194] sm:$0xf]
    %v1073 = vld [vmem:[#allocation7 + $0x198] sm:$0xff]
    %v1074 = vld [vmem:[#allocation7 + $0x1a0] sm:$0xf]
    %v1075 = vld [vmem:[#allocation7 + $0x1a4] sm:$0xff]
    %v1076 = vld [vmem:[#allocation7 + $0x1ac] sm:$0xf]
    %v1077 = vld [vmem:[#allocation7 + $0x1b0] sm:$0xff]
    %v1078 = vld [vmem:[#allocation7 + $0x1b8] sm:$0xf]
    %v1079 = vld [vmem:[#allocation7 + $0x1bc] sm:$0xff]
    %v1080 = vld [vmem:[#allocation7 + $0x1c4] sm:$0xf]
    %v1081 = vld [vmem:[#allocation7 + $0x1c8] sm:$0xff]
    %v1082 = vld [vmem:[#allocation7 + $0x1d0] sm:$0xf]
    %v1083 = vld [vmem:[#allocation7 + $0x1d4] sm:$0xff]
    %v1084 = vld [vmem:[#allocation7 + $0x1dc] sm:$0xf]
    %v1085 = vld [vmem:[#allocation7 + $0x1e0] sm:$0xff]
    %v1086 = vld [vmem:[#allocation7 + $0x1e8] sm:$0xf]
    %v1087 = vld [vmem:[#allocation7 + $0x1ec] sm:$0xff]
    %v1088 = vld [vmem:[#allocation7 + $0x1f4] sm:$0xf]
    %v1089 = vld [vmem:[#allocation7 + $0x1f8] sm:$0xff]
    %v1090 = vld [vmem:[#allocation7 + $0x200] sm:$0xf]
    %v1091 = vld [vmem:[#allocation7 + $0x204] sm:$0xff]
    %v1092 = vld [vmem:[#allocation7 + $0x20c] sm:$0xf]
    %v1093 = vld [vmem:[#allocation7 + $0x210] sm:$0xff]
    %v1094 = vld [vmem:[#allocation7 + $0x218] sm:$0xf]
    %v1095 = vld [vmem:[#allocation7 + $0x21c] sm:$0xff]
    %v1096 = vld [vmem:[#allocation7 + $0x224] sm:$0xf]
    %v1097 = vld [vmem:[#allocation7 + $0x228] sm:$0xff]
    %v1098 = vld [vmem:[#allocation7 + $0x230] sm:$0xf]
    %v1099 = vld [vmem:[#allocation7 + $0x234] sm:$0xff]
    %v1100 = vld [vmem:[#allocation7 + $0x23c] sm:$0xf]
    %v1101 = vld [vmem:[#allocation7 + $0x240] sm:$0xff]
    %v1102 = vld [vmem:[#allocation7 + $0x248] sm:$0xf]
    %v1103 = vld [vmem:[#allocation7 + $0x24c] sm:$0xff]
    %v1104 = vld [vmem:[#allocation7 + $0x254] sm:$0xf]
    %v1105 = vld [vmem:[#allocation7 + $0x258] sm:$0xff]
    %v1106 = vld [vmem:[#allocation7 + $0x260] sm:$0xf]
    %v1107 = vld [vmem:[#allocation7 + $0x264] sm:$0xff]
    %v1108 = vld [vmem:[#allocation7 + $0x26c] sm:$0xf]
    %v1109 = vld [vmem:[#allocation7 + $0x270] sm:$0xff]
    %v1110 = vld [vmem:[#allocation7 + $0x278] sm:$0xf]
    %v1111 = vld [vmem:[#allocation7 + $0x27c] sm:$0xff]
    %v1112 = vld [vmem:[#allocation7 + $0x284] sm:$0xf]
    %v1113 = vld [vmem:[#allocation7 + $0x288] sm:$0xff]
    %v1114 = vld [vmem:[#allocation7 + $0x290] sm:$0xf]
    %v1115 = vld [vmem:[#allocation7 + $0x294] sm:$0xff]
    %v1116 = vld [vmem:[#allocation7 + $0x29c] sm:$0xf]
    %v1117 = vld [vmem:[#allocation7 + $0x2a0] sm:$0xff]
    %v1118 = vld [vmem:[#allocation7 + $0x2a8] sm:$0xf]
    %v1119 = vld [vmem:[#allocation7 + $0x2ac] sm:$0xff]
    %v1120 = vld [vmem:[#allocation7 + $0x2b4] sm:$0xf]
    %v1121 = vld [vmem:[#allocation7 + $0x2b8] sm:$0xff]
    %v1122 = vld [vmem:[#allocation7 + $0x2c0] sm:$0xf]
    %v1123 = vld [vmem:[#allocation7 + $0x2c4] sm:$0xff]
    %v1124 = vld [vmem:[#allocation7 + $0x2cc] sm:$0xf]
    %v1125 = vld [vmem:[#allocation7 + $0x2d0] sm:$0xff]
    %v1126 = vld [vmem:[#allocation7 + $0x2d8] sm:$0xf]
    %v1127 = vld [vmem:[#allocation7 + $0x2dc] sm:$0xff]
    %v1128 = vld [vmem:[#allocation7 + $0x2e4] sm:$0xf]
    %v1129 = vld [vmem:[#allocation7 + $0x2e8] sm:$0xff]
    %v1130 = vld [vmem:[#allocation7 + $0x2f0] sm:$0xf]
    %v1131 = vld [vmem:[#allocation7 + $0x2f4] sm:$0xff]
    %v1132 = vld [vmem:[#allocation7 + $0x2fc] sm:$0xf]
    %v1133 = vld [vmem:[#allocation7 + $0x300] sm:$0xff]
    %v1134 = vld [vmem:[#allocation7 + $0x308] sm:$0xf]
    %v1135 = vld [vmem:[#allocation7 + $0x30c] sm:$0xff]
    %v1136 = vld [vmem:[#allocation7 + $0x314] sm:$0xf]
    %v1137 = vld [vmem:[#allocation7 + $0x318] sm:$0xff]
    %v1138 = vld [vmem:[#allocation7 + $0x320] sm:$0xf]
    %v1139 = vld [vmem:[#allocation7 + $0x324] sm:$0xff]
    %v1140 = vld [vmem:[#allocation7 + $0x32c] sm:$0xf]
    %v1141 = vld [vmem:[#allocation7 + $0x330] sm:$0xff]
    %v1142 = vld [vmem:[#allocation7 + $0x338] sm:$0xf]
    %v1143 = vld [vmem:[#allocation7 + $0x33c] sm:$0xff]
    %v1144 = vld [vmem:[#allocation7 + $0x344] sm:$0xf]
    %v1145 = vld [vmem:[#allocation7 + $0x348] sm:$0xff]
    %v1146 = vld [vmem:[#allocation7 + $0x350] sm:$0xf]
    %v1147 = vld [vmem:[#allocation7 + $0x354] sm:$0xff]
    %v1148 = vld [vmem:[#allocation7 + $0x35c] sm:$0xf]
    %v1149 = vld [vmem:[#allocation7 + $0x360] sm:$0xff]
    %v1150 = vld [vmem:[#allocation7 + $0x368] sm:$0xf]
    %v1151 = vld [vmem:[#allocation7 + $0x36c] sm:$0xff]
    %v1152 = vld [vmem:[#allocation7 + $0x374] sm:$0xf]
    %v1153 = vld [vmem:[#allocation7 + $0x378] sm:$0xff]
    %v1154 = vld [vmem:[#allocation7 + $0x380] sm:$0xf]
    %v1155 = vld [vmem:[#allocation7 + $0x384] sm:$0xff]
    %v1156 = vld [vmem:[#allocation7 + $0x38c] sm:$0xf]
    %v1157 = vld [vmem:[#allocation7 + $0x390] sm:$0xff]
    %v1158 = vld [vmem:[#allocation7 + $0x398] sm:$0xf]
    %v1159 = vld [vmem:[#allocation7 + $0x39c] sm:$0xff]
    %v1160 = vld [vmem:[#allocation7 + $0x3a4] sm:$0xf]
    %v1161 = vld [vmem:[#allocation7 + $0x3a8] sm:$0xff]
    %v1162 = vld [vmem:[#allocation7 + $0x3b0] sm:$0xf]
    %v1163 = vld [vmem:[#allocation7 + $0x3b4] sm:$0xff]
    %v1164 = vld [vmem:[#allocation7 + $0x3bc] sm:$0xf]
    %v1325 = vunpack.c.l.b16 %v1005
    %v1326 = vunpack.c.h.b16 %v1005
    %v1327 = vunpack.c.l.b16 %v1006
    %v1328 = vunpack.c.l.b16 %v1007
    %v1329 = vunpack.c.h.b16 %v1007
    %v1330 = vunpack.c.l.b16 %v1008
    %v1331 = vunpack.c.l.b16 %v1009
    %v1332 = vunpack.c.h.b16 %v1009
    %v1333 = vunpack.c.l.b16 %v1010
    %v1334 = vunpack.c.l.b16 %v1011
    %v1335 = vunpack.c.h.b16 %v1011
    %v1336 = vunpack.c.l.b16 %v1012
    %v1337 = vunpack.c.l.b16 %v1013
    %v1338 = vunpack.c.h.b16 %v1013
    %v1339 = vunpack.c.l.b16 %v1014
    %v1340 = vunpack.c.l.b16 %v1015
    %v1341 = vunpack.c.h.b16 %v1015
    %v1342 = vunpack.c.l.b16 %v1016
    %v1343 = vunpack.c.l.b16 %v1017
    %v1344 = vunpack.c.h.b16 %v1017
    %v1345 = vunpack.c.l.b16 %v1018
    %v1346 = vunpack.c.l.b16 %v1019
    %v1347 = vunpack.c.h.b16 %v1019
    %v1348 = vunpack.c.l.b16 %v1020
    %v1349 = vunpack.c.l.b16 %v1021
    %v1350 = vunpack.c.h.b16 %v1021
    %v1351 = vunpack.c.l.b16 %v1022
    %v1352 = vunpack.c.l.b16 %v1023
    %v1353 = vunpack.c.h.b16 %v1023
    %v1354 = vunpack.c.l.b16 %v1024
    %v1355 = vunpack.c.l.b16 %v1025
    %v1356 = vunpack.c.h.b16 %v1025
    %v1357 = vunpack.c.l.b16 %v1026
    %v1358 = vunpack.c.l.b16 %v1027
    %v1359 = vunpack.c.h.b16 %v1027
    %v1360 = vunpack.c.l.b16 %v1028
    %v1361 = vunpack.c.l.b16 %v1029
    %v1362 = vunpack.c.h.b16 %v1029
    %v1363 = vunpack.c.l.b16 %v1030
    %v1364 = vunpack.c.l.b16 %v1031
    %v1365 = vunpack.c.h.b16 %v1031
    %v1366 = vunpack.c.l.b16 %v1032
    %v1367 = vunpack.c.l.b16 %v1033
    %v1368 = vunpack.c.h.b16 %v1033
    %v1369 = vunpack.c.l.b16 %v1034
    %v1370 = vunpack.c.l.b16 %v1035
    %v1371 = vunpack.c.h.b16 %v1035
    %v1372 = vunpack.c.l.b16 %v1036
    %v1373 = vunpack.c.l.b16 %v1037
    %v1374 = vunpack.c.h.b16 %v1037
    %v1375 = vunpack.c.l.b16 %v1038
    %v1376 = vunpack.c.l.b16 %v1039
    %v1377 = vunpack.c.h.b16 %v1039
    %v1378 = vunpack.c.l.b16 %v1040
    %v1379 = vunpack.c.l.b16 %v1041
    %v1380 = vunpack.c.h.b16 %v1041
    %v1381 = vunpack.c.l.b16 %v1042
    %v1382 = vunpack.c.l.b16 %v1043
    %v1383 = vunpack.c.h.b16 %v1043
    %v1384 = vunpack.c.l.b16 %v1044
    %v1385 = vunpack.c.l.b16 %v1045
    %v1386 = vunpack.c.h.b16 %v1045
    %v1387 = vunpack.c.l.b16 %v1046
    %v1388 = vunpack.c.l.b16 %v1047
    %v1389 = vunpack.c.h.b16 %v1047
    %v1390 = vunpack.c.l.b16 %v1048
    %v1391 = vunpack.c.l.b16 %v1049
    %v1392 = vunpack.c.h.b16 %v1049
    %v1393 = vunpack.c.l.b16 %v1050
    %v1394 = vunpack.c.l.b16 %v1051
    %v1395 = vunpack.c.h.b16 %v1051
    %v1396 = vunpack.c.l.b16 %v1052
    %v1397 = vunpack.c.l.b16 %v1053
    %v1398 = vunpack.c.h.b16 %v1053
    %v1399 = vunpack.c.l.b16 %v1054
    %v1400 = vunpack.c.l.b16 %v1055
    %v1401 = vunpack.c.h.b16 %v1055
    %v1402 = vunpack.c.l.b16 %v1056
    %v1403 = vunpack.c.l.b16 %v1057
    %v1404 = vunpack.c.h.b16 %v1057
    %v1405 = vunpack.c.l.b16 %v1058
    %v1406 = vunpack.c.l.b16 %v1059
    %v1407 = vunpack.c.h.b16 %v1059
    %v1408 = vunpack.c.l.b16 %v1060
    %v1409 = vunpack.c.l.b16 %v1061
    %v1410 = vunpack.c.h.b16 %v1061
    %v1411 = vunpack.c.l.b16 %v1062
    %v1412 = vunpack.c.l.b16 %v1063
    %v1413 = vunpack.c.h.b16 %v1063
    %v1414 = vunpack.c.l.b16 %v1064
    %v1415 = vunpack.c.l.b16 %v1065
    %v1416 = vunpack.c.h.b16 %v1065
    %v1417 = vunpack.c.l.b16 %v1066
    %v1418 = vunpack.c.l.b16 %v1067
    %v1419 = vunpack.c.h.b16 %v1067
    %v1420 = vunpack.c.l.b16 %v1068
    %v1421 = vunpack.c.l.b16 %v1069
    %v1422 = vunpack.c.h.b16 %v1069
    %v1423 = vunpack.c.l.b16 %v1070
    %v1424 = vunpack.c.l.b16 %v1071
    %v1425 = vunpack.c.h.b16 %v1071
    %v1426 = vunpack.c.l.b16 %v1072
    %v1427 = vunpack.c.l.b16 %v1073
    %v1428 = vunpack.c.h.b16 %v1073
    %v1429 = vunpack.c.l.b16 %v1074
    %v1430 = vunpack.c.l.b16 %v1075
    %v1431 = vunpack.c.h.b16 %v1075
    %v1432 = vunpack.c.l.b16 %v1076
    %v1433 = vunpack.c.l.b16 %v1077
    %v1434 = vunpack.c.h.b16 %v1077
    %v1435 = vunpack.c.l.b16 %v1078
    %v1436 = vunpack.c.l.b16 %v1079
    %v1437 = vunpack.c.h.b16 %v1079
    %v1438 = vunpack.c.l.b16 %v1080
    %v1439 = vunpack.c.l.b16 %v1081
    %v1440 = vunpack.c.h.b16 %v1081
    %v1441 = vunpack.c.l.b16 %v1082
    %v1442 = vunpack.c.l.b16 %v1083
    %v1443 = vunpack.c.h.b16 %v1083
    %v1444 = vunpack.c.l.b16 %v1084
    %v1445 = vunpack.c.l.b16 %v1085
    %v1446 = vunpack.c.h.b16 %v1085
    %v1447 = vunpack.c.l.b16 %v1086
    %v1448 = vunpack.c.l.b16 %v1087
    %v1449 = vunpack.c.h.b16 %v1087
    %v1450 = vunpack.c.l.b16 %v1088
    %v1451 = vunpack.c.l.b16 %v1089
    %v1452 = vunpack.c.h.b16 %v1089
    %v1453 = vunpack.c.l.b16 %v1090
    %v1454 = vunpack.c.l.b16 %v1091
    %v1455 = vunpack.c.h.b16 %v1091
    %v1456 = vunpack.c.l.b16 %v1092
    %v1457 = vunpack.c.l.b16 %v1093
    %v1458 = vunpack.c.h.b16 %v1093
    %v1459 = vunpack.c.l.b16 %v1094
    %v1460 = vunpack.c.l.b16 %v1095
    %v1461 = vunpack.c.h.b16 %v1095
    %v1462 = vunpack.c.l.b16 %v1096
    %v1463 = vunpack.c.l.b16 %v1097
    %v1464 = vunpack.c.h.b16 %v1097
    %v1465 = vunpack.c.l.b16 %v1098
    %v1466 = vunpack.c.l.b16 %v1099
    %v1467 = vunpack.c.h.b16 %v1099
    %v1468 = vunpack.c.l.b16 %v1100
    %v1469 = vunpack.c.l.b16 %v1101
    %v1470 = vunpack.c.h.b16 %v1101
    %v1471 = vunpack.c.l.b16 %v1102
    %v1472 = vunpack.c.l.b16 %v1103
    %v1473 = vunpack.c.h.b16 %v1103
    %v1474 = vunpack.c.l.b16 %v1104
    %v1475 = vunpack.c.l.b16 %v1105
    %v1476 = vunpack.c.h.b16 %v1105
    %v1477 = vunpack.c.l.b16 %v1106
    %v1478 = vunpack.c.l.b16 %v1107
    %v1479 = vunpack.c.h.b16 %v1107
    %v1480 = vunpack.c.l.b16 %v1108
    %v1481 = vunpack.c.l.b16 %v1109
    %v1482 = vunpack.c.h.b16 %v1109
    %v1483 = vunpack.c.l.b16 %v1110
    %v1484 = vunpack.c.l.b16 %v1111
    %v1485 = vunpack.c.h.b16 %v1111
    %v1486 = vunpack.c.l.b16 %v1112
    %v1487 = vunpack.c.l.b16 %v1113
    %v1488 = vunpack.c.h.b16 %v1113
    %v1489 = vunpack.c.l.b16 %v1114
    %v1490 = vunpack.c.l.b16 %v1115
    %v1491 = vunpack.c.h.b16 %v1115
    %v1492 = vunpack.c.l.b16 %v1116
    %v1493 = vunpack.c.l.b16 %v1117
    %v1494 = vunpack.c.h.b16 %v1117
    %v1495 = vunpack.c.l.b16 %v1118
    %v1496 = vunpack.c.l.b16 %v1119
    %v1497 = vunpack.c.h.b16 %v1119
    %v1498 = vunpack.c.l.b16 %v1120
    %v1499 = vunpack.c.l.b16 %v1121
    %v1500 = vunpack.c.h.b16 %v1121
    %v1501 = vunpack.c.l.b16 %v1122
    %v1502 = vunpack.c.l.b16 %v1123
    %v1503 = vunpack.c.h.b16 %v1123
    %v1504 = vunpack.c.l.b16 %v1124
    %v1505 = vunpack.c.l.b16 %v1125
    %v1506 = vunpack.c.h.b16 %v1125
    %v1507 = vunpack.c.l.b16 %v1126
    %v1508 = vunpack.c.l.b16 %v1127
    %v1509 = vunpack.c.h.b16 %v1127
    %v1510 = vunpack.c.l.b16 %v1128
    %v1511 = vunpack.c.l.b16 %v1129
    %v1512 = vunpack.c.h.b16 %v1129
    %v1513 = vunpack.c.l.b16 %v1130
    %v1514 = vunpack.c.l.b16 %v1131
    %v1515 = vunpack.c.h.b16 %v1131
    %v1516 = vunpack.c.l.b16 %v1132
    %v1517 = vunpack.c.l.b16 %v1133
    %v1518 = vunpack.c.h.b16 %v1133
    %v1519 = vunpack.c.l.b16 %v1134
    %v1520 = vunpack.c.l.b16 %v1135
    %v1521 = vunpack.c.h.b16 %v1135
    %v1522 = vunpack.c.l.b16 %v1136
    %v1523 = vunpack.c.l.b16 %v1137
    %v1524 = vunpack.c.h.b16 %v1137
    %v1525 = vunpack.c.l.b16 %v1138
    %v1526 = vunpack.c.l.b16 %v1139
    %v1527 = vunpack.c.h.b16 %v1139
    %v1528 = vunpack.c.l.b16 %v1140
    %v1529 = vunpack.c.l.b16 %v1141
    %v1530 = vunpack.c.h.b16 %v1141
    %v1531 = vunpack.c.l.b16 %v1142
    %v1532 = vunpack.c.l.b16 %v1143
    %v1533 = vunpack.c.h.b16 %v1143
    %v1534 = vunpack.c.l.b16 %v1144
    %v1535 = vunpack.c.l.b16 %v1145
    %v1536 = vunpack.c.h.b16 %v1145
    %v1537 = vunpack.c.l.b16 %v1146
    %v1538 = vunpack.c.l.b16 %v1147
    %v1539 = vunpack.c.h.b16 %v1147
    %v1540 = vunpack.c.l.b16 %v1148
    %v1541 = vunpack.c.l.b16 %v1149
    %v1542 = vunpack.c.h.b16 %v1149
    %v1543 = vunpack.c.l.b16 %v1150
    %v1544 = vunpack.c.l.b16 %v1151
    %v1545 = vunpack.c.h.b16 %v1151
    %v1546 = vunpack.c.l.b16 %v1152
    %v1547 = vunpack.c.l.b16 %v1153
    %v1548 = vunpack.c.h.b16 %v1153
    %v1549 = vunpack.c.l.b16 %v1154
    %v1550 = vunpack.c.l.b16 %v1155
    %v1551 = vunpack.c.h.b16 %v1155
    %v1552 = vunpack.c.l.b16 %v1156
    %v1553 = vunpack.c.l.b16 %v1157
    %v1554 = vunpack.c.h.b16 %v1157
    %v1555 = vunpack.c.l.b16 %v1158
    %v1556 = vunpack.c.l.b16 %v1159
    %v1557 = vunpack.c.h.b16 %v1159
    %v1558 = vunpack.c.l.b16 %v1160
    %v1559 = vunpack.c.l.b16 %v1161
    %v1560 = vunpack.c.h.b16 %v1161
    %v1561 = vunpack.c.l.b16 %v1162
    %v1562 = vunpack.c.l.b16 %v1163
    %v1563 = vunpack.c.h.b16 %v1163
    %v1564 = vunpack.c.l.b16 %v1164
    %v1565 = vpack.c.b16 %v1328, %v1325
    %v1566 = vpack.c.b16 %v1329, %v1326
    %v1567 = vpack.c.b16 %v1330, %v1327
    %v1568 = vpack.c.b16 %v1334, %v1331
    %v1569 = vpack.c.b16 %v1335, %v1332
    %v1570 = vpack.c.b16 %v1336, %v1333
    %v1571 = vpack.c.b16 %v1340, %v1337
    %v1572 = vpack.c.b16 %v1341, %v1338
    %v1573 = vpack.c.b16 %v1342, %v1339
    %v1574 = vpack.c.b16 %v1346, %v1343
    %v1575 = vpack.c.b16 %v1347, %v1344
    %v1576 = vpack.c.b16 %v1348, %v1345
    %v1577 = vpack.c.b16 %v1352, %v1349
    %v1578 = vpack.c.b16 %v1353, %v1350
    %v1579 = vpack.c.b16 %v1354, %v1351
    %v1580 = vpack.c.b16 %v1358, %v1355
    %v1581 = vpack.c.b16 %v1359, %v1356
    %v1582 = vpack.c.b16 %v1360, %v1357
    %v1583 = vpack.c.b16 %v1364, %v1361
    %v1584 = vpack.c.b16 %v1365, %v1362
    %v1585 = vpack.c.b16 %v1366, %v1363
    %v1586 = vpack.c.b16 %v1370, %v1367
    %v1587 = vpack.c.b16 %v1371, %v1368
    %v1588 = vpack.c.b16 %v1372, %v1369
    %v1589 = vpack.c.b16 %v1376, %v1373
    %v1590 = vpack.c.b16 %v1377, %v1374
    %v1591 = vpack.c.b16 %v1378, %v1375
    %v1592 = vpack.c.b16 %v1382, %v1379
    %v1593 = vpack.c.b16 %v1383, %v1380
    %v1594 = vpack.c.b16 %v1384, %v1381
    %v1595 = vpack.c.b16 %v1388, %v1385
    %v1596 = vpack.c.b16 %v1389, %v1386
    %v1597 = vpack.c.b16 %v1390, %v1387
    %v1598 = vpack.c.b16 %v1394, %v1391
    %v1599 = vpack.c.b16 %v1395, %v1392
    %v1600 = vpack.c.b16 %v1396, %v1393
    %v1601 = vpack.c.b16 %v1400, %v1397
    %v1602 = vpack.c.b16 %v1401, %v1398
    %v1603 = vpack.c.b16 %v1402, %v1399
    %v1604 = vpack.c.b16 %v1406, %v1403
    %v1605 = vpack.c.b16 %v1407, %v1404
    %v1606 = vpack.c.b16 %v1408, %v1405
    %v1607 = vpack.c.b16 %v1412, %v1409
    %v1608 = vpack.c.b16 %v1413, %v1410
    %v1609 = vpack.c.b16 %v1414, %v1411
    %v1610 = vpack.c.b16 %v1418, %v1415
    %v1611 = vpack.c.b16 %v1419, %v1416
    %v1612 = vpack.c.b16 %v1420, %v1417
    %v1613 = vpack.c.b16 %v1424, %v1421
    %v1614 = vpack.c.b16 %v1425, %v1422
    %v1615 = vpack.c.b16 %v1426, %v1423
    %v1616 = vpack.c.b16 %v1430, %v1427
    %v1617 = vpack.c.b16 %v1431, %v1428
    %v1618 = vpack.c.b16 %v1432, %v1429
    %v1619 = vpack.c.b16 %v1436, %v1433
    %v1620 = vpack.c.b16 %v1437, %v1434
    %v1621 = vpack.c.b16 %v1438, %v1435
    %v1622 = vpack.c.b16 %v1442, %v1439
    %v1623 = vpack.c.b16 %v1443, %v1440
    %v1624 = vpack.c.b16 %v1444, %v1441
    %v1625 = vpack.c.b16 %v1448, %v1445
    %v1626 = vpack.c.b16 %v1449, %v1446
    %v1627 = vpack.c.b16 %v1450, %v1447
    %v1628 = vpack.c.b16 %v1454, %v1451
    %v1629 = vpack.c.b16 %v1455, %v1452
    %v1630 = vpack.c.b16 %v1456, %v1453
    %v1631 = vpack.c.b16 %v1460, %v1457
    %v1632 = vpack.c.b16 %v1461, %v1458
    %v1633 = vpack.c.b16 %v1462, %v1459
    %v1634 = vpack.c.b16 %v1466, %v1463
    %v1635 = vpack.c.b16 %v1467, %v1464
    %v1636 = vpack.c.b16 %v1468, %v1465
    %v1637 = vpack.c.b16 %v1472, %v1469
    %v1638 = vpack.c.b16 %v1473, %v1470
    %v1639 = vpack.c.b16 %v1474, %v1471
    %v1640 = vpack.c.b16 %v1478, %v1475
    %v1641 = vpack.c.b16 %v1479, %v1476
    %v1642 = vpack.c.b16 %v1480, %v1477
    %v1643 = vpack.c.b16 %v1484, %v1481
    %v1644 = vpack.c.b16 %v1485, %v1482
    %v1645 = vpack.c.b16 %v1486, %v1483
    %v1646 = vpack.c.b16 %v1490, %v1487
    %v1647 = vpack.c.b16 %v1491, %v1488
    %v1648 = vpack.c.b16 %v1492, %v1489
    %v1649 = vpack.c.b16 %v1496, %v1493
    %v1650 = vpack.c.b16 %v1497, %v1494
    %v1651 = vpack.c.b16 %v1498, %v1495
    %v1652 = vpack.c.b16 %v1502, %v1499
    %v1653 = vpack.c.b16 %v1503, %v1500
    %v1654 = vpack.c.b16 %v1504, %v1501
    %v1655 = vpack.c.b16 %v1508, %v1505
    %v1656 = vpack.c.b16 %v1509, %v1506
    %v1657 = vpack.c.b16 %v1510, %v1507
    %v1658 = vpack.c.b16 %v1514, %v1511
    %v1659 = vpack.c.b16 %v1515, %v1512
    %v1660 = vpack.c.b16 %v1516, %v1513
    %v1661 = vpack.c.b16 %v1520, %v1517
    %v1662 = vpack.c.b16 %v1521, %v1518
    %v1663 = vpack.c.b16 %v1522, %v1519
    %v1664 = vpack.c.b16 %v1526, %v1523
    %v1665 = vpack.c.b16 %v1527, %v1524
    %v1666 = vpack.c.b16 %v1528, %v1525
    %v1667 = vpack.c.b16 %v1532, %v1529
    %v1668 = vpack.c.b16 %v1533, %v1530
    %v1669 = vpack.c.b16 %v1534, %v1531
    %v1670 = vpack.c.b16 %v1538, %v1535
    %v1671 = vpack.c.b16 %v1539, %v1536
    %v1672 = vpack.c.b16 %v1540, %v1537
    %v1673 = vpack.c.b16 %v1544, %v1541
    %v1674 = vpack.c.b16 %v1545, %v1542
    %v1675 = vpack.c.b16 %v1546, %v1543
    %v1676 = vpack.c.b16 %v1550, %v1547
    %v1677 = vpack.c.b16 %v1551, %v1548
    %v1678 = vpack.c.b16 %v1552, %v1549
    %v1679 = vpack.c.b16 %v1556, %v1553
    %v1680 = vpack.c.b16 %v1557, %v1554
    %v1681 = vpack.c.b16 %v1558, %v1555
    %v1682 = vpack.c.b16 %v1562, %v1559
    %v1683 = vpack.c.b16 %v1563, %v1560
    %v1684 = vpack.c.b16 %v1564, %v1561
    %1805 = vmatprep.subr.bf16.mxu0 %v1566
    %1806 = vmatpush1.bf16.msra.mxu0 %v1565
    %1807 = vmatprep.subr.bf16.mxu0 %v1569
    %1808 = vmatpush1.bf16.msra.mxu0 %v1568
    %1809 = vmatprep.subr.bf16.mxu0 %v1572
    %1810 = vmatpush1.bf16.msra.mxu0 %v1571
    %1811 = vmatprep.subr.bf16.mxu0 %v1575
    %1812 = vmatpush1.bf16.msra.mxu0 %v1574
    %1813 = vmatprep.subr.bf16.mxu0 %v1578
    %1814 = vmatpush1.bf16.msra.mxu0 %v1577
    %1815 = vmatprep.subr.bf16.mxu0 %v1581
    %1816 = vmatpush1.bf16.msra.mxu0 %v1580
    %1817 = vmatprep.subr.bf16.mxu0 %v1584
    %1818 = vmatpush1.bf16.msra.mxu0 %v1583
    %1819 = vmatprep.subr.bf16.mxu0 %v1587
    %1820 = vmatpush1.bf16.msra.mxu0 %v1586
    %1821 = vmatprep.subr.bf16.mxu0 %v1590
    %1822 = vmatpush1.bf16.msra.mxu0 %v1589
    %1823 = vmatprep.subr.bf16.mxu0 %v1593
    %1824 = vmatpush1.bf16.msra.mxu0 %v1592
    %1825 = vmatprep.subr.bf16.mxu0 %v1596
    %1826 = vmatpush1.bf16.msra.mxu0 %v1595
    %1827 = vmatprep.subr.bf16.mxu0 %v1599
    %1828 = vmatpush1.bf16.msra.mxu0 %v1598
    %1829 = vmatprep.subr.bf16.mxu0 %v1602
    %1830 = vmatpush1.bf16.msra.mxu0 %v1601
    %1831 = vmatprep.subr.bf16.mxu0 %v1605
    %1832 = vmatpush1.bf16.msra.mxu0 %v1604
    %1833 = vmatprep.subr.bf16.mxu0 %v1608
    %1834 = vmatpush1.bf16.msra.mxu0 %v1607
    %1835 = vmatprep.subr.bf16.mxu0 %v1611
    %1836 = vmatpush1.bf16.msra.mxu0 %v1610
    %1837 = vmatprep.mubr.bf16.mxu0 %v1001
    %1838 = vmatmul.mubr.bf16.gmra.mrb[0].mxu0 %v1000
    %v1839 = vpop.f32.mrb[0].mxu0
    %v1840 = vadd.f32 0.0, %v1839
    %v1841 = vpop.f32.mrb[0].mxu0
    %v1842 = vadd.f32 0.0, %v1841
    %v1843 = vpop.f32.mrb[0].mxu0
    %v1844 = vadd.f32 0.0, %v1843
    %v1845 = vpop.f32.mrb[0].mxu0
    %v1846 = vadd.f32 0.0, %v1845
    %1847 = vdwg.mxu0
    %1848 = vmatprep.subr.bf16.mxu0 %v1614
    %1849 = vmatpush1.bf16.msra.mxu0 %v1613
    %1850 = vmatprep.subr.bf16.mxu0 %v1617
    %1851 = vmatpush1.bf16.msra.mxu0 %v1616
    %1852 = vmatprep.subr.bf16.mxu0 %v1620
    %1853 = vmatpush1.bf16.msra.mxu0 %v1619
    %1854 = vmatprep.subr.bf16.mxu0 %v1623
    %1855 = vmatpush1.bf16.msra.mxu0 %v1622
    %1856 = vmatprep.subr.bf16.mxu0 %v1626
    %1857 = vmatpush1.bf16.msra.mxu0 %v1625
    %1858 = vmatprep.subr.bf16.mxu0 %v1629
    %1859 = vmatpush1.bf16.msra.mxu0 %v1628
    %1860 = vmatprep.subr.bf16.mxu0 %v1632
    %1861 = vmatpush1.bf16.msra.mxu0 %v1631
    %1862 = vmatprep.subr.bf16.mxu0 %v1635
    %1863 = vmatpush1.bf16.msra.mxu0 %v1634
    %1864 = vmatprep.subr.bf16.mxu0 %v1638
    %1865 = vmatpush1.bf16.msra.mxu0 %v1637
    %1866 = vmatprep.subr.bf16.mxu0 %v1641
    %1867 = vmatpush1.bf16.msra.mxu0 %v1640
    %1868 = vmatprep.subr.bf16.mxu0 %v1644
    %1869 = vmatpush1.bf16.msra.mxu0 %v1643
    %1870 = vmatprep.subr.bf16.mxu0 %v1647
    %1871 = vmatpush1.bf16.msra.mxu0 %v1646
    %1872 = vmatprep.subr.bf16.mxu0 %v1650
    %1873 = vmatpush1.bf16.msra.mxu0 %v1649
    %1874 = vmatprep.subr.bf16.mxu0 %v1653
    %1875 = vmatpush1.bf16.msra.mxu0 %v1652
    %1876 = vmatprep.subr.bf16.mxu0 %v1656
    %1877 = vmatpush1.bf16.msra.mxu0 %v1655
    %1878 = vmatprep.subr.bf16.mxu0 %v1659
    %1879 = vmatpush1.bf16.msra.mxu0 %v1658
    %1880 = vmatprep.mubr.bf16.mxu0 %v1003
    %1881 = vmatmul.mubr.bf16.gmra.mrb[0].mxu0 %v1002
    %v1882 = vpop.f32.mrb[0].mxu0
    %v1883 = vadd.f32 %v1840, %v1882
    %v1884 = vpop.f32.mrb[0].mxu0
    %v1885 = vadd.f32 %v1842, %v1884
    %v1886 = vpop.f32.mrb[0].mxu0
    %v1887 = vadd.f32 %v1844, %v1886
    %v1888 = vpop.f32.mrb[0].mxu0
    %v1889 = vadd.f32 %v1846, %v1888
    %1890 = vdwg.mxu0
    %1891 = vmatprep.subr.bf16.mxu0 %v1662
    %1892 = vmatpush1.bf16.msra.mxu0 %v1661
    %1893 = vmatprep.subr.bf16.mxu0 %v1665
    %1894 = vmatpush1.bf16.msra.mxu0 %v1664
    %1895 = vmatprep.subr.bf16.mxu0 %v1668
    %1896 = vmatpush1.bf16.msra.mxu0 %v1667
    %1897 = vmatprep.subr.bf16.mxu0 %v1671
    %1898 = vmatpush1.bf16.msra.mxu0 %v1670
    %1899 = vmatprep.subr.bf16.mxu0 %v1674
    %1900 = vmatpush1.bf16.msra.mxu0 %v1673
    %1901 = vmatprep.subr.bf16.mxu0 %v1677
    %1902 = vmatpush1.bf16.msra.mxu0 %v1676
    %1903 = vmatprep.subr.bf16.mxu0 %v1680
    %1904 = vmatpush1.bf16.msra.mxu0 %v1679
    %1905 = vmatprep.subr.bf16.mxu0 %v1683
    %1906 = vmatpush1.bf16.msra.mxu0 %v1682
    %1907 = vmatprep.subr.bf16.mxu0 0
    %1908 = vmatpush1.bf16.msra.mxu0 0
    %1909 = vmatprep.subr.bf16.mxu0 0
    %1910 = vmatpush1.bf16.msra.mxu0 0
    %1911 = vmatprep.subr.bf16.mxu0 0
    %1912 = vmatpush1.bf16.msra.mxu0 0
    %1913 = vmatprep.subr.bf16.mxu0 0
    %1914 = vmatpush1.bf16.msra.mxu0 0
    %1915 = vmatprep.subr.bf16.mxu0 0
    %1916 = vmatpush1.bf16.msra.mxu0 0
    %1917 = vmatprep.subr.bf16.mxu0 0
    %1918 = vmatpush1.bf16.msra.mxu0 0
    %1919 = vmatprep.subr.bf16.mxu0 0
    %1920 = vmatpush1.bf16.msra.mxu0 0
    %1921 = vmatprep.subr.bf16.mxu0 0
    %1922 = vmatpush1.bf16.msra.mxu0 0
    %1923 = vmatprep.mubr.bf16.mxu0 0
    %1924 = vmatmul.mubr.bf16.gmra.mrb[0].mxu0 %v1004
    %v1925 = vpop.f32.mrb[0].mxu0
    %v1926 = vadd.f32 %v1883, %v1925
    %v1927 = vpop.f32.mrb[0].mxu0
    %v1928 = vadd.f32 %v1885, %v1927
    %v1929 = vpop.f32.mrb[0].mxu0
    %v1930 = vadd.f32 %v1887, %v1929
    %v1931 = vpop.f32.mrb[0].mxu0
    %v1932 = vadd.f32 %v1889, %v1931
    %1933 = vdwg.mxu0
    %1934 = vmatprep.subr.bf16.mxu0 0
    %1935 = vmatpush1.bf16.msra.mxu0 %v1567
    %1936 = vmatprep.subr.bf16.mxu0 0
    %1937 = vmatpush1.bf16.msra.mxu0 %v1570
    %1938 = vmatprep.subr.bf16.mxu0 0
    %1939 = vmatpush1.bf16.msra.mxu0 %v1573
    %1940 = vmatprep.subr.bf16.mxu0 0
    %1941 = vmatpush1.bf16.msra.mxu0 %v1576
    %1942 = vmatprep.subr.bf16.mxu0 0
    %1943 = vmatpush1.bf16.msra.mxu0 %v1579
    %1944 = vmatprep.subr.bf16.mxu0 0
    %1945 = vmatpush1.bf16.msra.mxu0 %v1582
    %1946 = vmatprep.subr.bf16.mxu0 0
    %1947 = vmatpush1.bf16.msra.mxu0 %v1585
    %1948 = vmatprep.subr.bf16.mxu0 0
    %1949 = vmatpush1.bf16.msra.mxu0 %v1588
    %1950 = vmatprep.subr.bf16.mxu0 0
    %1951 = vmatpush1.bf16.msra.mxu0 %v1591
    %1952 = vmatprep.subr.bf16.mxu0 0
    %1953 = vmatpush1.bf16.msra.mxu0 %v1594
    %1954 = vmatprep.subr.bf16.mxu0 0
    %1955 = vmatpush1.bf16.msra.mxu0 %v1597
    %1956 = vmatprep.subr.bf16.mxu0 0
    %1957 = vmatpush1.bf16.msra.mxu0 %v1600
    %1958 = vmatprep.subr.bf16.mxu0 0
    %1959 = vmatpush1.bf16.msra.mxu0 %v1603
    %1960 = vmatprep.subr.bf16.mxu0 0
    %1961 = vmatpush1.bf16.msra.mxu0 %v1606
    %1962 = vmatprep.subr.bf16.mxu0 0
    %1963 = vmatpush1.bf16.msra.mxu0 %v1609
    %1964 = vmatprep.subr.bf16.mxu0 0
    %1965 = vmatpush1.bf16.msra.mxu0 %v1612
    %1966 = vmatprep.mubr.bf16.mxu0 %v1001
    %1967 = vmatmul.mubr.bf16.gmra.mrb[0].mxu0 %v1000
    %v1968 = vpop.f32.mrb[0].mxu0
    %v1969 = vadd.f32 0.0, %v1968
    %v1970 = vpop.f32.mrb[0].mxu0
    %v1971 = vpop.f32.mrb[0].mxu0
    %v1972 = vadd.f32 0.0, %v1971
    %v1973 = vpop.f32.mrb[0].mxu0
    %1974 = vdwg.mxu0
    %1975 = vmatprep.subr.bf16.mxu0 0
    %1976 = vmatpush1.bf16.msra.mxu0 %v1615
    %1977 = vmatprep.subr.bf16.mxu0 0
    %1978 = vmatpush1.bf16.msra.mxu0 %v1618
    %1979 = vmatprep.subr.bf16.mxu0 0
    %1980 = vmatpush1.bf16.msra.mxu0 %v1621
    %1981 = vmatprep.subr.bf16.mxu0 0
    %1982 = vmatpush1.bf16.msra.mxu0 %v1624
    %1983 = vmatprep.subr.bf16.mxu0 0
    %1984 = vmatpush1.bf16.msra.mxu0 %v1627
    %1985 = vmatprep.subr.bf16.mxu0 0
    %1986 = vmatpush1.bf16.msra.mxu0 %v1630
    %1987 = vmatprep.subr.bf16.mxu0 0
    %1988 = vmatpush1.bf16.msra.mxu0 %v1633
    %1989 = vmatprep.subr.bf16.mxu0 0
    %1990 = vmatpush1.bf16.msra.mxu0 %v1636
    %1991 = vmatprep.subr.bf16.mxu0 0
    %1992 = vmatpush1.bf16.msra.mxu0 %v1639
    %1993 = vmatprep.subr.bf16.mxu0 0
    %1994 = vmatpush1.bf16.msra.mxu0 %v1642
    %1995 = vmatprep.subr.bf16.mxu0 0
    %1996 = vmatpush1.bf16.msra.mxu0 %v1645
    %1997 = vmatprep.subr.bf16.mxu0 0
    %1998 = vmatpush1.bf16.msra.mxu0 %v1648
    %1999 = vmatprep.subr.bf16.mxu0 0
    %2000 = vmatpush1.bf16.msra.mxu0 %v1651
    %2001 = vmatprep.subr.bf16.mxu0 0
    %2002 = vmatpush1.bf16.msra.mxu0 %v1654
    %2003 = vmatprep.subr.bf16.mxu0 0
    %2004 = vmatpush1.bf16.msra.mxu0 %v1657
    %2005 = vmatprep.subr.bf16.mxu0 0
    %2006 = vmatpush1.bf16.msra.mxu0 %v1660
    %2007 = vmatprep.mubr.bf16.mxu0 %v1003
    %2008 = vmatmul.mubr.bf16.gmra.mrb[0].mxu0 %v1002
    %v2009 = vpop.f32.mrb[0].mxu0
    %v2010 = vadd.f32 %v1969, %v2009
    %v2011 = vpop.f32.mrb[0].mxu0
    %v2012 = vpop.f32.mrb[0].mxu0
    %v2013 = vadd.f32 %v1972, %v2012
    %v2014 = vpop.f32.mrb[0].mxu0
    %2015 = vdwg.mxu0
    %2016 = vmatprep.subr.bf16.mxu0 0
    %2017 = vmatpush1.bf16.msra.mxu0 %v1663
    %2018 = vmatprep.subr.bf16.mxu0 0
    %2019 = vmatpush1.bf16.msra.mxu0 %v1666
    %2020 = vmatprep.subr.bf16.mxu0 0
    %2021 = vmatpush1.bf16.msra.mxu0 %v1669
    %2022 = vmatprep.subr.bf16.mxu0 0
    %2023 = vmatpush1.bf16.msra.mxu0 %v1672
    %2024 = vmatprep.subr.bf16.mxu0 0
    %2025 = vmatpush1.bf16.msra.mxu0 %v1675
    %2026 = vmatprep.subr.bf16.mxu0 0
    %2027 = vmatpush1.bf16.msra.mxu0 %v1678
    %2028 = vmatprep.subr.bf16.mxu0 0
    %2029 = vmatpush1.bf16.msra.mxu0 %v1681
    %2030 = vmatprep.subr.bf16.mxu0 0
    %2031 = vmatpush1.bf16.msra.mxu0 %v1684
    %2032 = vmatprep.subr.bf16.mxu0 0
    %2033 = vmatpush1.bf16.msra.mxu0 0
    %2034 = vmatprep.subr.bf16.mxu0 0
    %2035 = vmatpush1.bf16.msra.mxu0 0
    %2036 = vmatprep.subr.bf16.mxu0 0
    %2037 = vmatpush1.bf16.msra.mxu0 0
    %2038 = vmatprep.subr.bf16.mxu0 0
    %2039 = vmatpush1.bf16.msra.mxu0 0
    %2040 = vmatprep.subr.bf16.mxu0 0
    %2041 = vmatpush1.bf16.msra.mxu0 0
    %2042 = vmatprep.subr.bf16.mxu0 0
    %2043 = vmatpush1.bf16.msra.mxu0 0
    %2044 = vmatprep.subr.bf16.mxu0 0
    %2045 = vmatpush1.bf16.msra.mxu0 0
    %2046 = vmatprep.subr.bf16.mxu0 0
    %2047 = vmatpush1.bf16.msra.mxu0 0
    %2048 = vmatprep.mubr.bf16.mxu0 0
    %2049 = vmatmul.mubr.bf16.gmra.mrb[0].mxu0 %v1004
    %v2050 = vpop.f32.mrb[0].mxu0
    %v2051 = vadd.f32 %v2010, %v2050
    %v2052 = vpop.f32.mrb[0].mxu0
    %v2053 = vpop.f32.mrb[0].mxu0
    %v2054 = vadd.f32 %v2013, %v2053
    %v2055 = vpop.f32.mrb[0].mxu0
    %2056 = vdwg.mxu0
    %v2057 = vadd.f32 %v351, %v1926
    %v2058 = vadd.f32 %v354, %v1930
    %2060 = vset.pattern.permute.xlu0 0
    %2061 = vperm.xlu0 %2060, %v94
    %v2062 = vpop.permute.xlu0 %2061
    %2065 = vset.pattern.permute.xlu0 0
    %2066 = vperm.xlu0 %2065, %v95
    %v2067 = vpop.permute.xlu0 %2066
    %v2069 = vmul.f32 %v2062, %v1928
    %v2070 = vmul.f32 %v2067, %v1932
    %v2071 = vadd.f32 %v2057, %v2069
    %v2072 = vadd.f32 %v2058, %v2070
    %2074 = vset.pattern.permute.xlu0 0
    %2075 = vperm.xlu0 %2074, %v96
    %v2076 = vpop.permute.xlu0 %2075
    %2079 = vset.pattern.permute.xlu0 0
    %2080 = vperm.xlu0 %2079, %v97
    %v2081 = vpop.permute.xlu0 %2080
    %v2083 = vmul.f32 %v2076, %v2051
    %v2084 = vmul.f32 %v2081, %v2054
    %v2085 = vadd.f32 %v2071, %v2083
    %v2086 = vadd.f32 %v2072, %v2084
    %v2087 = vld [vmem:[%s11] sm:$0x1]
    %v2089 = vlaneseq
    %v2090 = vshrl.u32 %v2089, 7
    %v2091 = vsub.s32 0, %v2090
    %v2092 = vrot.slane %v2087, %v2091
    %v2094 = vadd.f32 %v2085, %v2092
    %v2095 = vadd.f32 %v2086, %v2092
    %v2096 = vpack.c.bf16 %v2095, %v2094
    %v2097 = vld [vmem:[%s12] sm:$0xf]
    %v2098 = vld [vmem:[%s12 + $0x4] sm:$0xf]
    %v2099 = vld [vmem:[%s12 + $0x8] sm:$0xf]
    %v2100 = vld [vmem:[%s12 + $0xc] sm:$0xf]
    %v2101 = vld [vmem:[%s12 + $0x10] sm:$0xf]
    %v2102 = vld [vmem:[%s12 + $0x14] sm:$0xf]
    %v2103 = vld [vmem:[%s12 + $0x18] sm:$0xf]
    %v2104 = vld [vmem:[%s12 + $0x1c] sm:$0xf]
    %v2105 = vld [vmem:[%s12 + $0x20] sm:$0xf]
    %v2106 = vld [vmem:[%s12 + $0x24] sm:$0xf]
    %v2107 = vld [vmem:[%s12 + $0x28] sm:$0xf]
    %v2108 = vld [vmem:[%s12 + $0x2c] sm:$0xf]
    %v2109 = vld [vmem:[%s12 + $0x30] sm:$0xf]
    %v2110 = vld [vmem:[%s12 + $0x34] sm:$0xf]
    %v2111 = vld [vmem:[%s12 + $0x38] sm:$0xf]
    %v2112 = vld [vmem:[%s12 + $0x3c] sm:$0xf]
    %v2113 = vld [vmem:[%s13] sm:$0x1]
    %v2115 = vlaneseq
    %v2116 = vshrl.u32 %v2115, 7
    %v2117 = vsub.s32 0, %v2116
    %v2118 = vrot.slane %v2113, %v2117
    %v2136 = vunpack.c.l.b16 %v2097
    %v2137 = vunpack.c.l.b16 %v2098
    %v2138 = vunpack.c.l.b16 %v2099
    %v2139 = vunpack.c.l.b16 %v2100
    %v2140 = vunpack.c.l.b16 %v2101
    %v2141 = vunpack.c.l.b16 %v2102
    %v2142 = vunpack.c.l.b16 %v2103
    %v2143 = vunpack.c.l.b16 %v2104
    %v2144 = vunpack.c.l.b16 %v2105
    %v2145 = vunpack.c.l.b16 %v2106
    %v2146 = vunpack.c.l.b16 %v2107
    %v2147 = vunpack.c.l.b16 %v2108
    %v2148 = vunpack.c.l.b16 %v2109
    %v2149 = vunpack.c.l.b16 %v2110
    %v2150 = vunpack.c.l.b16 %v2111
    %v2151 = vunpack.c.l.b16 %v2112
    %v2152 = vpack.c.b16 %v2137, %v2136
    %v2153 = vpack.c.b16 %v2139, %v2138
    %v2154 = vpack.c.b16 %v2141, %v2140
    %v2155 = vpack.c.b16 %v2143, %v2142
    %v2156 = vpack.c.b16 %v2145, %v2144
    %v2157 = vpack.c.b16 %v2147, %v2146
    %v2158 = vpack.c.b16 %v2149, %v2148
    %v2159 = vpack.c.b16 %v2151, %v2150
    %2168 = vmatprep.subr.bf16.mxu0 0
    %2169 = vmatpush1.bf16.msra.mxu0 %v2152
    %2170 = vmatprep.subr.bf16.mxu0 0
    %2171 = vmatpush1.bf16.msra.mxu0 %v2153
    %2172 = vmatprep.subr.bf16.mxu0 0
    %2173 = vmatpush1.bf16.msra.mxu0 %v2154
    %2174 = vmatprep.subr.bf16.mxu0 0
    %2175 = vmatpush1.bf16.msra.mxu0 %v2155
    %2176 = vmatprep.subr.bf16.mxu0 0
    %2177 = vmatpush1.bf16.msra.mxu0 %v2156
    %2178 = vmatprep.subr.bf16.mxu0 0
    %2179 = vmatpush1.bf16.msra.mxu0 %v2157
    %2180 = vmatprep.subr.bf16.mxu0 0
    %2181 = vmatpush1.bf16.msra.mxu0 %v2158
    %2182 = vmatprep.subr.bf16.mxu0 0
    %2183 = vmatpush1.bf16.msra.mxu0 %v2159
    %2184 = vmatprep.subr.bf16.mxu0 0
    %2185 = vmatpush1.bf16.msra.mxu0 0
    %2186 = vmatprep.subr.bf16.mxu0 0
    %2187 = vmatpush1.bf16.msra.mxu0 0
    %2188 = vmatprep.subr.bf16.mxu0 0
    %2189 = vmatpush1.bf16.msra.mxu0 0
    %2190 = vmatprep.subr.bf16.mxu0 0
    %2191 = vmatpush1.bf16.msra.mxu0 0
    %2192 = vmatprep.subr.bf16.mxu0 0
    %2193 = vmatpush1.bf16.msra.mxu0 0
    %2194 = vmatprep.subr.bf16.mxu0 0
    %2195 = vmatpush1.bf16.msra.mxu0 0
    %2196 = vmatprep.subr.bf16.mxu0 0
    %2197 = vmatpush1.bf16.msra.mxu0 0
    %2198 = vmatprep.subr.bf16.mxu0 0
    %2199 = vmatpush1.bf16.msra.mxu0 0
    %2200 = vmatprep.mubr.bf16.mxu0 0
    %2201 = vmatmul.mubr.bf16.gmra.mrb[0].mxu0 %v2096
    %v2202 = vpop.f32.mrb[0].mxu0
    %v2203 = vadd.f32 %v2118, %v2202
    %v2204 = vpop.f32.mrb[0].mxu0
    %v2205 = vpop.f32.mrb[0].mxu0
    %v2206 = vadd.f32 %v2118, %v2205
    %v2207 = vpop.f32.mrb[0].mxu0
    %2208 = vdwg.mxu0
    %2210 = vset.pattern.permute.xlu0 0
    %2211 = vperm.xlu0 %2210, %v98
    %v2212 = vpop.permute.xlu0 %2211
    %2215 = vset.pattern.permute.xlu0 0
    %2216 = vperm.xlu0 %2215, %v99
    %v2217 = vpop.permute.xlu0 %2216
    %v2219 = vmul.f32 %v2203, %v2212
    %v2220 = vmul.f32 %v2206, %v2217
    %v2221 = vadd.f32 %v2219, %v2220
    %v2222 = vrot.slane %v2221, 4
    %v2223 = vadd.f32 %v2221, %v2222
    %v2224 = vrot.slane %v2223, 2
    %v2225 = vadd.f32 %v2223, %v2224
    %v2226 = vrot.slane %v2225, 1
    %v2227 = vadd.f32 %v2225, %v2226
    %v2228 = vsub.f32 %v2203, %v2227
    %v2229 = vsub.f32 %v2206, %v2227
    %v2230 = vmul.f32 %v2212, %v2228
    %v2231 = vmul.f32 %v2217, %v2229
    %v2232 = vmul.f32 %v2230, %v2228
    %v2233 = vmul.f32 %v2231, %v2229
    %v2234 = vadd.f32 %v2232, %v2233
    %v2235 = vrot.slane %v2234, 4
    %v2236 = vadd.f32 %v2234, %v2235
    %v2237 = vrot.slane %v2236, 2
    %v2238 = vadd.f32 %v2236, %v2237
    %v2239 = vrot.slane %v2238, 1
    %v2240 = vadd.f32 %v2238, %v2239
    %v2241 = vadd.f32 %v2240, 1e-05
    %v2242 = vrsqrt.pop %v2241
    %v2243 = vmul.f32 %v2228, %v2242
    %v2244 = vmul.f32 %v2229, %v2242
    %v2245 = vld [vmem:[%s14] sm:$0x1]
    %v2247 = vlaneseq
    %v2248 = vshrl.u32 %v2247, 7
    %v2249 = vsub.s32 0, %v2248
    %v2250 = vrot.slane %v2245, %v2249
    %v2252 = vmul.f32 %v2243, %v2250
    %v2253 = vmul.f32 %v2244, %v2250
    %v2254 = vld [vmem:[%s15] sm:$0x1]
    %v2256 = vlaneseq
    %v2257 = vshrl.u32 %v2256, 7
    %v2258 = vsub.s32 0, %v2257
    %v2259 = vrot.slane %v2254, %v2258
    %v2261 = vadd.f32 %v2252, %v2259
    %v2262 = vadd.f32 %v2253, %v2259
    %v2263 = vmax.f32 %v2261, 0.0
    %v2264 = vmax.f32 %v2262, 0.0
    %v2265 = vpack.c.bf16 %v2264, %v2263
    %s2266 = scalar_lea.vmem [#allocation5], 192
    %v2267 = vld [vmem:[%s2266] sm:$0xff]
    %v2268 = vld [vmem:[%s2266 + $0x8] sm:$0xf]
    %v2269 = vld [vmem:[%s2266 + $0xc] sm:$0xff]
    %v2270 = vld [vmem:[%s2266 + $0x14] sm:$0xf]
    %v2271 = vld [vmem:[%s2266 + $0x18] sm:$0xff]
    %v2272 = vld [vmem:[%s2266 + $0x20] sm:$0xf]
    %v2273 = vld [vmem:[%s2266 + $0x24] sm:$0xff]
    %v2274 = vld [vmem:[%s2266 + $0x2c] sm:$0xf]
    %v2275 = vld [vmem:[%s2266 + $0x30] sm:$0xff]
    %v2276 = vld [vmem:[%s2266 + $0x38] sm:$0xf]
    %v2277 = vld [vmem:[%s2266 + $0x3c] sm:$0xff]
    %v2278 = vld [vmem:[%s2266 + $0x44] sm:$0xf]
    %v2279 = vld [vmem:[%s2266 + $0x48] sm:$0xff]
    %v2280 = vld [vmem:[%s2266 + $0x50] sm:$0xf]
    %v2281 = vld [vmem:[%s2266 + $0x54] sm:$0xff]
    %v2282 = vld [vmem:[%s2266 + $0x5c] sm:$0xf]
    %v2283 = vld [vmem:[%s2266 + $0x60] sm:$0xff]
    %v2284 = vld [vmem:[%s2266 + $0x68] sm:$0xf]
    %v2285 = vld [vmem:[%s2266 + $0x6c] sm:$0xff]
    %v2286 = vld [vmem:[%s2266 + $0x74] sm:$0xf]
    %v2287 = vld [vmem:[%s2266 + $0x78] sm:$0xff]
    %v2288 = vld [vmem:[%s2266 + $0x80] sm:$0xf]
    %v2289 = vld [vmem:[%s2266 + $0x84] sm:$0xff]
    %v2290 = vld [vmem:[%s2266 + $0x8c] sm:$0xf]
    %v2291 = vld [vmem:[%s2266 + $0x90] sm:$0xff]
    %v2292 = vld [vmem:[%s2266 + $0x98] sm:$0xf]
    %v2293 = vld [vmem:[%s2266 + $0x9c] sm:$0xff]
    %v2294 = vld [vmem:[%s2266 + $0xa4] sm:$0xf]
    %v2295 = vld [vmem:[%s2266 + $0xa8] sm:$0xff]
    %v2296 = vld [vmem:[%s2266 + $0xb0] sm:$0xf]
    %v2297 = vld [vmem:[%s2266 + $0xb4] sm:$0xff]
    %v2298 = vld [vmem:[%s2266 + $0xbc] sm:$0xf]
    %v2331 = vunpack.c.l.b16 %v2267
    %v2332 = vunpack.c.h.b16 %v2267
    %v2333 = vunpack.c.l.b16 %v2268
    %v2334 = vunpack.c.l.b16 %v2269
    %v2335 = vunpack.c.h.b16 %v2269
    %v2336 = vunpack.c.l.b16 %v2270
    %v2337 = vunpack.c.l.b16 %v2271
    %v2338 = vunpack.c.h.b16 %v2271
    %v2339 = vunpack.c.l.b16 %v2272
    %v2340 = vunpack.c.l.b16 %v2273
    %v2341 = vunpack.c.h.b16 %v2273
    %v2342 = vunpack.c.l.b16 %v2274
    %v2343 = vunpack.c.l.b16 %v2275
    %v2344 = vunpack.c.h.b16 %v2275
    %v2345 = vunpack.c.l.b16 %v2276
    %v2346 = vunpack.c.l.b16 %v2277
    %v2347 = vunpack.c.h.b16 %v2277
    %v2348 = vunpack.c.l.b16 %v2278
    %v2349 = vunpack.c.l.b16 %v2279
    %v2350 = vunpack.c.h.b16 %v2279
    %v2351 = vunpack.c.l.b16 %v2280
    %v2352 = vunpack.c.l.b16 %v2281
    %v2353 = vunpack.c.h.b16 %v2281
    %v2354 = vunpack.c.l.b16 %v2282
    %v2355 = vunpack.c.l.b16 %v2283
    %v2356 = vunpack.c.h.b16 %v2283
    %v2357 = vunpack.c.l.b16 %v2284
    %v2358 = vunpack.c.l.b16 %v2285
    %v2359 = vunpack.c.h.b16 %v2285
    %v2360 = vunpack.c.l.b16 %v2286
    %v2361 = vunpack.c.l.b16 %v2287
    %v2362 = vunpack.c.h.b16 %v2287
    %v2363 = vunpack.c.l.b16 %v2288
    %v2364 = vunpack.c.l.b16 %v2289
    %v2365 = vunpack.c.h.b16 %v2289
    %v2366 = vunpack.c.l.b16 %v2290
    %v2367 = vunpack.c.l.b16 %v2291
    %v2368 = vunpack.c.h.b16 %v2291
    %v2369 = vunpack.c.l.b16 %v2292
    %v2370 = vunpack.c.l.b16 %v2293
    %v2371 = vunpack.c.h.b16 %v2293
    %v2372 = vunpack.c.l.b16 %v2294
    %v2373 = vunpack.c.l.b16 %v2295
    %v2374 = vunpack.c.h.b16 %v2295
    %v2375 = vunpack.c.l.b16 %v2296
    %v2376 = vunpack.c.l.b16 %v2297
    %v2377 = vunpack.c.h.b16 %v2297
    %v2378 = vunpack.c.l.b16 %v2298
    %v2379 = vpack.c.b16 %v2334, %v2331
    %v2380 = vpack.c.b16 %v2335, %v2332
    %v2381 = vpack.c.b16 %v2336, %v2333
    %v2382 = vpack.c.b16 %v2340, %v2337
    %v2383 = vpack.c.b16 %v2341, %v2338
    %v2384 = vpack.c.b16 %v2342, %v2339
    %v2385 = vpack.c.b16 %v2346, %v2343
    %v2386 = vpack.c.b16 %v2347, %v2344
    %v2387 = vpack.c.b16 %v2348, %v2345
    %v2388 = vpack.c.b16 %v2352, %v2349
    %v2389 = vpack.c.b16 %v2353, %v2350
    %v2390 = vpack.c.b16 %v2354, %v2351
    %v2391 = vpack.c.b16 %v2358, %v2355
    %v2392 = vpack.c.b16 %v2359, %v2356
    %v2393 = vpack.c.b16 %v2360, %v2357
    %v2394 = vpack.c.b16 %v2364, %v2361
    %v2395 = vpack.c.b16 %v2365, %v2362
    %v2396 = vpack.c.b16 %v2366, %v2363
    %v2397 = vpack.c.b16 %v2370, %v2367
    %v2398 = vpack.c.b16 %v2371, %v2368
    %v2399 = vpack.c.b16 %v2372, %v2369
    %v2400 = vpack.c.b16 %v2376, %v2373
    %v2401 = vpack.c.b16 %v2377, %v2374
    %v2402 = vpack.c.b16 %v2378, %v2375
    %2427 = vmatprep.subr.bf16.mxu0 %v2380
    %2428 = vmatpush1.bf16.msra.mxu0 %v2379
    %2429 = vmatprep.subr.bf16.mxu0 %v2383
    %2430 = vmatpush1.bf16.msra.mxu0 %v2382
    %2431 = vmatprep.subr.bf16.mxu0 %v2386
    %2432 = vmatpush1.bf16.msra.mxu0 %v2385
    %2433 = vmatprep.subr.bf16.mxu0 %v2389
    %2434 = vmatpush1.bf16.msra.mxu0 %v2388
    %2435 = vmatprep.subr.bf16.mxu0 %v2392
    %2436 = vmatpush1.bf16.msra.mxu0 %v2391
    %2437 = vmatprep.subr.bf16.mxu0 %v2395
    %2438 = vmatpush1.bf16.msra.mxu0 %v2394
    %2439 = vmatprep.subr.bf16.mxu0 %v2398
    %2440 = vmatpush1.bf16.msra.mxu0 %v2397
    %2441 = vmatprep.subr.bf16.mxu0 %v2401
    %2442 = vmatpush1.bf16.msra.mxu0 %v2400
    %2443 = vmatprep.subr.bf16.mxu0 0
    %2444 = vmatpush1.bf16.msra.mxu0 0
    %2445 = vmatprep.subr.bf16.mxu0 0
    %2446 = vmatpush1.bf16.msra.mxu0 0
    %2447 = vmatprep.subr.bf16.mxu0 0
    %2448 = vmatpush1.bf16.msra.mxu0 0
    %2449 = vmatprep.subr.bf16.mxu0 0
    %2450 = vmatpush1.bf16.msra.mxu0 0
    %2451 = vmatprep.subr.bf16.mxu0 0
    %2452 = vmatpush1.bf16.msra.mxu0 0
    %2453 = vmatprep.subr.bf16.mxu0 0
    %2454 = vmatpush1.bf16.msra.mxu0 0
    %2455 = vmatprep.subr.bf16.mxu0 0
    %2456 = vmatpush1.bf16.msra.mxu0 0
    %2457 = vmatprep.subr.bf16.mxu0 0
    %2458 = vmatpush1.bf16.msra.mxu0 0
    %2459 = vmatprep.mubr.bf16.mxu0 0
    %2460 = vmatmul.mubr.bf16.gmra.mrb[0].mxu0 %v2265
    %v2461 = vpop.f32.mrb[0].mxu0
    %v2462 = vadd.f32 0.0, %v2461
    %v2463 = vpop.f32.mrb[0].mxu0
    %v2464 = vadd.f32 0.0, %v2463
    %v2465 = vpop.f32.mrb[0].mxu0
    %v2466 = vadd.f32 0.0, %v2465
    %v2467 = vpop.f32.mrb[0].mxu0
    %v2468 = vadd.f32 0.0, %v2467
    %2469 = vdwg.mxu0
    %2470 = vmatprep.subr.bf16.mxu0 0
    %2471 = vmatpush1.bf16.msra.mxu0 %v2381
    %2472 = vmatprep.subr.bf16.mxu0 0
    %2473 = vmatpush1.bf16.msra.mxu0 %v2384
    %2474 = vmatprep.subr.bf16.mxu0 0
    %2475 = vmatpush1.bf16.msra.mxu0 %v2387
    %2476 = vmatprep.subr.bf16.mxu0 0
    %2477 = vmatpush1.bf16.msra.mxu0 %v2390
    %2478 = vmatprep.subr.bf16.mxu0 0
    %2479 = vmatpush1.bf16.msra.mxu0 %v2393
    %2480 = vmatprep.subr.bf16.mxu0 0
    %2481 = vmatpush1.bf16.msra.mxu0 %v2396
    %2482 = vmatprep.subr.bf16.mxu0 0
    %2483 = vmatpush1.bf16.msra.mxu0 %v2399
    %2484 = vmatprep.subr.bf16.mxu0 0
    %2485 = vmatpush1.bf16.msra.mxu0 %v2402
    %2486 = vmatprep.subr.bf16.mxu0 0
    %2487 = vmatpush1.bf16.msra.mxu0 0
    %2488 = vmatprep.subr.bf16.mxu0 0
    %2489 = vmatpush1.bf16.msra.mxu0 0
    %2490 = vmatprep.subr.bf16.mxu0 0
    %2491 = vmatpush1.bf16.msra.mxu0 0
    %2492 = vmatprep.subr.bf16.mxu0 0
    %2493 = vmatpush1.bf16.msra.mxu0 0
    %2494 = vmatprep.subr.bf16.mxu0 0
    %2495 = vmatpush1.bf16.msra.mxu0 0
    %2496 = vmatprep.subr.bf16.mxu0 0
    %2497 = vmatpush1.bf16.msra.mxu0 0
    %2498 = vmatprep.subr.bf16.mxu0 0
    %2499 = vmatpush1.bf16.msra.mxu0 0
    %2500 = vmatprep.subr.bf16.mxu0 0
    %2501 = vmatpush1.bf16.msra.mxu0 0
    %2502 = vmatprep.mubr.bf16.mxu0 0
    %2503 = vmatmul.mubr.bf16.gmra.mrb[0].mxu0 %v2265
    %v2504 = vpop.f32.mrb[0].mxu0
    %v2505 = vadd.f32 0.0, %v2504
    %v2506 = vpop.f32.mrb[0].mxu0
    %v2507 = vpop.f32.mrb[0].mxu0
    %v2508 = vadd.f32 0.0, %v2507
    %v2509 = vpop.f32.mrb[0].mxu0
    %2510 = vdwg.mxu0
    %s2511 = scalar_lea.vmem %s9, 1
    %v2512 = vld [vmem:[%s2511] sm:$0x1]
    %v2514 = vlaneseq
    %v2515 = vshrl.u32 %v2514, 7
    %v2516 = vsub.s32 0, %v2515
    %v2517 = vrot.slane %v2512, %v2516
    %v2519 = vadd.f32 %v2462, %v2517
    %v2520 = vadd.f32 %v2466, %v2517
    %v2521 = vpack.c.bf16 %v2468, %v2464
    %2522 = vst [vmem:[#allocation2] sm:$0xff] %v2521
    %v2523 = vmul.f32 %v2464, %v2464
    %v2524 = vmul.f32 %v2468, %v2468
    %v2525 = vpack.c.bf16 %v2524, %v2523
    %2526 = vst [vmem:[#allocation2 + $0x8] sm:$0xff] %v2525
    %v2527 = vld [vmem:[#allocation2] sm:$0xff]
    %v2528 = vld [vmem:[#allocation2 + $0x8] sm:$0xff]
    %2529 = vmatprep.subr.bf16.mxu0 %v2528
    %2530 = vmatpush1.bf16.msra.mxu0 %v2527
    %2531 = vmatprep.subr.bf16.mxu0 0
    %2532 = vmatpush1.bf16.msra.mxu0 0
    %2533 = vmatprep.subr.bf16.mxu0 0
    %2534 = vmatpush1.bf16.msra.mxu0 0
    %2535 = vmatprep.subr.bf16.mxu0 0
    %2536 = vmatpush1.bf16.msra.mxu0 0
    %2537 = vmatprep.subr.bf16.mxu0 0
    %2538 = vmatpush1.bf16.msra.mxu0 0
    %2539 = vmatprep.subr.bf16.mxu0 0
    %2540 = vmatpush1.bf16.msra.mxu0 0
    %2541 = vmatprep.subr.bf16.mxu0 0
    %2542 = vmatpush1.bf16.msra.mxu0 0
    %2543 = vmatprep.subr.bf16.mxu0 0
    %2544 = vmatpush1.bf16.msra.mxu0 0
    %2545 = vmatprep.subr.bf16.mxu0 0
    %2546 = vmatpush1.bf16.msra.mxu0 0
    %2547 = vmatprep.subr.bf16.mxu0 0
    %2548 = vmatpush1.bf16.msra.mxu0 0
    %2549 = vmatprep.subr.bf16.mxu0 0
    %2550 = vmatpush1.bf16.msra.mxu0 0
    %2551 = vmatprep.subr.bf16.mxu0 0
    %2552 = vmatpush1.bf16.msra.mxu0 0
    %2553 = vmatprep.subr.bf16.mxu0 0
    %2554 = vmatpush1.bf16.msra.mxu0 0
    %2555 = vmatprep.subr.bf16.mxu0 0
    %2556 = vmatpush1.bf16.msra.mxu0 0
    %2557 = vmatprep.subr.bf16.mxu0 0
    %2558 = vmatpush1.bf16.msra.mxu0 0
    %2559 = vmatprep.subr.bf16.mxu0 0
    %2560 = vmatpush1.bf16.msra.mxu0 0
    %2561 = vmatprep.mubr.bf16.mxu0 0
    %2562 = vmatmul.mubr.bf16.gmra.mrb[0].mxu0 %v381
    %v2563 = vpop.f32.mrb[0].mxu0
    %v2564 = vadd.f32 0.0, %v2563
    %v2565 = vpop.f32.mrb[0].mxu0
    %v2566 = vadd.f32 0.0, %v2565
    %v2567 = vpop.f32.mrb[0].mxu0
    %v2568 = vadd.f32 0.0, %v2567
    %v2569 = vpop.f32.mrb[0].mxu0
    %v2570 = vadd.f32 0.0, %v2569
    %2571 = vdwg.mxu0
    %v2572 = vmul.f32 %v2564, %v429
    %v2573 = vmul.f32 %v2568, %v434
    %v2574 = vmul.f32 %v2566, %v429
    %v2575 = vmul.f32 %v2570, %v434
    %v2576 = vmul.f32 %v443, %v2519
    %v2577 = vmul.f32 %v448, %v2520
    %v2578 = vadd.f32 %v2576, %v2564
    %v2579 = vadd.f32 %v2577, %v2568
    %v2580 = vadd.f32 %v2519, %v2572
    %v2581 = vadd.f32 %v2520, %v2573
    %v2582 = vmul.f32 %v2580, %v459
    %v2583 = vmul.f32 %v2581, %v464
    %v2584 = vmul.f32 %v2572, %v2572
    %v2585 = vmul.f32 %v2573, %v2573
    %v2586 = vsub.f32 %v2574, %v2584
    %v2587 = vsub.f32 %v2575, %v2585
    %v2588 = vmax.f32 %v2586, 0.0
    %v2589 = vmax.f32 %v2587, 0.0
    %v2590 = vadd.f32 %v2588, 1e-05
    %v2591 = vadd.f32 %v2589, 1e-05
    %v2592 = vrsqrt.pop %v2590
    %v2593 = vmul.f32 %v2590, %v2592
    %vm2594 = vcmp.eq.f32.partialorder %v2590, inf
    %v2595 = vsel %vm2594, %v2590, %v2593
    %vm2596 = vcmp.eq.f32.partialorder %v2590, 0.0
    %v2597 = vand.u32 %v2590, 2147483648
    %v2598 = vsel %vm2596, %v2597, %v2595
    %v2599 = vrsqrt.pop %v2591
    %v2600 = vmul.f32 %v2591, %v2599
    %vm2601 = vcmp.eq.f32.partialorder %v2591, inf
    %v2602 = vsel %vm2601, %v2591, %v2600
    %vm2603 = vcmp.eq.f32.partialorder %v2591, 0.0
    %v2604 = vand.u32 %v2591, 2147483648
    %v2605 = vsel %vm2603, %v2604, %v2602
    %v2606 = vld [vmem:[%s492] sm:$0xff]
    %v2607 = vunpack.c.l.bf16 %v2606
    %v2608 = vunpack.c.h.bf16 %v2606
    %v2609 = vld [vmem:[%s2] sm:$0xff]
    %v2610 = vld [vmem:[%s2 + $0x8] sm:$0xff]
    %v2613 = vcombine.high %v2607, %v2607
    %v2615 = vunpack.c.l.s4 1966171168
    %v2616 = vunpack.c.0.s8 %v2615
    %v2617 = vlaneseq
    %v2618 = vshrl.u32 %v2617, 7
    %v2619 = vsub.s32 %v2616, %v2618
    %v2620 = vrot.slane %v2607, %v2619
    %v2622 = vunpack.c.l.s4 1966171168
    %v2623 = vunpack.c.0.s8 %v2622
    %v2624 = vlaneseq
    %v2625 = vshrl.u32 %v2624, 7
    %v2626 = vsub.s32 %v2623, %v2625
    %v2627 = vrot.slane %v2613, %v2626
    %v2628 = vcombine.high %v2620, %v2620
    %v2629 = vcombine.high %v2627, %v2627
    %v2631 = vunpack.c.l.s4 1966171168
    %v2632 = vunpack.c.0.s8 %v2631
    %v2633 = vlaneseq
    %v2634 = vshrl.u32 %v2633, 7
    %v2635 = vsub.s32 %v2632, %v2634
    %v2636 = vrot.slane %v2620, %v2635
    %v2638 = vunpack.c.l.s4 1966171168
    %v2639 = vunpack.c.0.s8 %v2638
    %v2640 = vlaneseq
    %v2641 = vshrl.u32 %v2640, 7
    %v2642 = vsub.s32 %v2639, %v2641
    %v2643 = vrot.slane %v2627, %v2642
    %v2645 = vunpack.c.l.s4 1966171168
    %v2646 = vunpack.c.0.s8 %v2645
    %v2647 = vlaneseq
    %v2648 = vshrl.u32 %v2647, 7
    %v2649 = vsub.s32 %v2646, %v2648
    %v2650 = vrot.slane %v2628, %v2649
    %v2652 = vunpack.c.l.s4 1966171168
    %v2653 = vunpack.c.0.s8 %v2652
    %v2654 = vlaneseq
    %v2655 = vshrl.u32 %v2654, 7
    %v2656 = vsub.s32 %v2653, %v2655
    %v2657 = vrot.slane %v2629, %v2656
    %v2658 = vcombine.high %v2636, %v2636
    %v2659 = vcombine.high %v2643, %v2643
    %v2660 = vcombine.high %v2650, %v2650
    %v2661 = vcombine.high %v2657, %v2657
    %v2662 = vcombine.high %v2608, %v2608
    %v2664 = vunpack.c.l.s4 1966171168
    %v2665 = vunpack.c.0.s8 %v2664
    %v2666 = vlaneseq
    %v2667 = vshrl.u32 %v2666, 7
    %v2668 = vsub.s32 %v2665, %v2667
    %v2669 = vrot.slane %v2608, %v2668
    %v2671 = vunpack.c.l.s4 1966171168
    %v2672 = vunpack.c.0.s8 %v2671
    %v2673 = vlaneseq
    %v2674 = vshrl.u32 %v2673, 7
    %v2675 = vsub.s32 %v2672, %v2674
    %v2676 = vrot.slane %v2662, %v2675
    %v2677 = vcombine.high %v2669, %v2669
    %v2678 = vcombine.high %v2676, %v2676
    %v2680 = vunpack.c.l.s4 1966171168
    %v2681 = vunpack.c.0.s8 %v2680
    %v2682 = vlaneseq
    %v2683 = vshrl.u32 %v2682, 7
    %v2684 = vsub.s32 %v2681, %v2683
    %v2685 = vrot.slane %v2669, %v2684
    %v2687 = vunpack.c.l.s4 1966171168
    %v2688 = vunpack.c.0.s8 %v2687
    %v2689 = vlaneseq
    %v2690 = vshrl.u32 %v2689, 7
    %v2691 = vsub.s32 %v2688, %v2690
    %v2692 = vrot.slane %v2676, %v2691
    %v2694 = vunpack.c.l.s4 1966171168
    %v2695 = vunpack.c.0.s8 %v2694
    %v2696 = vlaneseq
    %v2697 = vshrl.u32 %v2696, 7
    %v2698 = vsub.s32 %v2695, %v2697
    %v2699 = vrot.slane %v2677, %v2698
    %v2701 = vunpack.c.l.s4 1966171168
    %v2702 = vunpack.c.0.s8 %v2701
    %v2703 = vlaneseq
    %v2704 = vshrl.u32 %v2703, 7
    %v2705 = vsub.s32 %v2702, %v2704
    %v2706 = vrot.slane %v2678, %v2705
    %v2707 = vcombine.high %v2685, %v2685
    %v2708 = vcombine.high %v2692, %v2692
    %v2709 = vcombine.high %v2699, %v2699
    %v2710 = vcombine.high %v2706, %v2706
    %v2711 = vlaneseq
    %v2712 = vshrl.u32 %v2711, 7
    %v2713 = vsub.s32 0, %v2712
    %v2714 = vrot.slane %v2609, %v2713
    %2716 = vbcast.lane.b32.xlu0 %v2714, 256
    %v2717 = vpop.permute.xlu0 %2716
    %s2719 = sor.u32 256, 8
    %2720 = vbcast.lane.b32.xlu0 %v2714, %s2719
    %v2721 = vpop.permute.xlu0 %2720
    %v2722 = vlaneseq
    %v2723 = vshrl.u32 %v2722, 7
    %v2724 = vsub.s32 1, %v2723
    %v2725 = vrot.slane %v2609, %v2724
    %2727 = vbcast.lane.b32.xlu0 %v2725, 256
    %v2728 = vpop.permute.xlu0 %2727
    %s2730 = sor.u32 256, 8
    %2731 = vbcast.lane.b32.xlu0 %v2725, %s2730
    %v2732 = vpop.permute.xlu0 %2731
    %v2733 = vlaneseq
    %v2734 = vshrl.u32 %v2733, 7
    %v2735 = vsub.s32 2, %v2734
    %v2736 = vrot.slane %v2609, %v2735
    %2738 = vbcast.lane.b32.xlu0 %v2736, 256
    %v2739 = vpop.permute.xlu0 %2738
    %s2741 = sor.u32 256, 8
    %2742 = vbcast.lane.b32.xlu0 %v2736, %s2741
    %v2743 = vpop.permute.xlu0 %2742
    %v2744 = vlaneseq
    %v2745 = vshrl.u32 %v2744, 7
    %v2746 = vsub.s32 3, %v2745
    %v2747 = vrot.slane %v2609, %v2746
    %2749 = vbcast.lane.b32.xlu0 %v2747, 256
    %v2750 = vpop.permute.xlu0 %2749
    %s2752 = sor.u32 256, 8
    %2753 = vbcast.lane.b32.xlu0 %v2747, %s2752
    %v2754 = vpop.permute.xlu0 %2753
    %v2755 = vlaneseq
    %v2756 = vshrl.u32 %v2755, 7
    %v2757 = vsub.s32 4, %v2756
    %v2758 = vrot.slane %v2609, %v2757
    %2760 = vbcast.lane.b32.xlu0 %v2758, 256
    %v2761 = vpop.permute.xlu0 %2760
    %s2763 = sor.u32 256, 8
    %2764 = vbcast.lane.b32.xlu0 %v2758, %s2763
    %v2765 = vpop.permute.xlu0 %2764
    %v2766 = vlaneseq
    %v2767 = vshrl.u32 %v2766, 7
    %v2768 = vsub.s32 5, %v2767
    %v2769 = vrot.slane %v2609, %v2768
    %2771 = vbcast.lane.b32.xlu0 %v2769, 256
    %v2772 = vpop.permute.xlu0 %2771
    %s2774 = sor.u32 256, 8
    %2775 = vbcast.lane.b32.xlu0 %v2769, %s2774
    %v2776 = vpop.permute.xlu0 %2775
    %v2777 = vlaneseq
    %v2778 = vshrl.u32 %v2777, 7
    %v2779 = vsub.s32 6, %v2778
    %v2780 = vrot.slane %v2609, %v2779
    %2782 = vbcast.lane.b32.xlu0 %v2780, 256
    %v2783 = vpop.permute.xlu0 %2782
    %s2785 = sor.u32 256, 8
    %2786 = vbcast.lane.b32.xlu0 %v2780, %s2785
    %v2787 = vpop.permute.xlu0 %2786
    %v2788 = vlaneseq
    %v2789 = vshrl.u32 %v2788, 7
    %v2790 = vsub.s32 7, %v2789
    %v2791 = vrot.slane %v2609, %v2790
    %2793 = vbcast.lane.b32.xlu0 %v2791, 256
    %v2794 = vpop.permute.xlu0 %2793
    %s2796 = sor.u32 256, 8
    %2797 = vbcast.lane.b32.xlu0 %v2791, %s2796
    %v2798 = vpop.permute.xlu0 %2797
    %v2799 = vlaneseq
    %v2800 = vshrl.u32 %v2799, 7
    %v2801 = vsub.s32 0, %v2800
    %v2802 = vrot.slane %v2610, %v2801
    %2804 = vbcast.lane.b32.xlu0 %v2802, 256
    %v2805 = vpop.permute.xlu0 %2804
    %s2807 = sor.u32 256, 8
    %2808 = vbcast.lane.b32.xlu0 %v2802, %s2807
    %v2809 = vpop.permute.xlu0 %2808
    %v2810 = vlaneseq
    %v2811 = vshrl.u32 %v2810, 7
    %v2812 = vsub.s32 1, %v2811
    %v2813 = vrot.slane %v2610, %v2812
    %2815 = vbcast.lane.b32.xlu0 %v2813, 256
    %v2816 = vpop.permute.xlu0 %2815
    %s2818 = sor.u32 256, 8
    %2819 = vbcast.lane.b32.xlu0 %v2813, %s2818
    %v2820 = vpop.permute.xlu0 %2819
    %v2821 = vlaneseq
    %v2822 = vshrl.u32 %v2821, 7
    %v2823 = vsub.s32 2, %v2822
    %v2824 = vrot.slane %v2610, %v2823
    %2826 = vbcast.lane.b32.xlu0 %v2824, 256
    %v2827 = vpop.permute.xlu0 %2826
    %s2829 = sor.u32 256, 8
    %2830 = vbcast.lane.b32.xlu0 %v2824, %s2829
    %v2831 = vpop.permute.xlu0 %2830
    %v2832 = vlaneseq
    %v2833 = vshrl.u32 %v2832, 7
    %v2834 = vsub.s32 3, %v2833
    %v2835 = vrot.slane %v2610, %v2834
    %2837 = vbcast.lane.b32.xlu0 %v2835, 256
    %v2838 = vpop.permute.xlu0 %2837
    %s2840 = sor.u32 256, 8
    %2841 = vbcast.lane.b32.xlu0 %v2835, %s2840
    %v2842 = vpop.permute.xlu0 %2841
    %v2843 = vlaneseq
    %v2844 = vshrl.u32 %v2843, 7
    %v2845 = vsub.s32 4, %v2844
    %v2846 = vrot.slane %v2610, %v2845
    %2848 = vbcast.lane.b32.xlu0 %v2846, 256
    %v2849 = vpop.permute.xlu0 %2848
    %s2851 = sor.u32 256, 8
    %2852 = vbcast.lane.b32.xlu0 %v2846, %s2851
    %v2853 = vpop.permute.xlu0 %2852
    %v2854 = vlaneseq
    %v2855 = vshrl.u32 %v2854, 7
    %v2856 = vsub.s32 5, %v2855
    %v2857 = vrot.slane %v2610, %v2856
    %2859 = vbcast.lane.b32.xlu0 %v2857, 256
    %v2860 = vpop.permute.xlu0 %2859
    %s2862 = sor.u32 256, 8
    %2863 = vbcast.lane.b32.xlu0 %v2857, %s2862
    %v2864 = vpop.permute.xlu0 %2863
    %v2865 = vlaneseq
    %v2866 = vshrl.u32 %v2865, 7
    %v2867 = vsub.s32 6, %v2866
    %v2868 = vrot.slane %v2610, %v2867
    %2870 = vbcast.lane.b32.xlu0 %v2868, 256
    %v2871 = vpop.permute.xlu0 %2870
    %s2873 = sor.u32 256, 8
    %2874 = vbcast.lane.b32.xlu0 %v2868, %s2873
    %v2875 = vpop.permute.xlu0 %2874
    %v2876 = vlaneseq
    %v2877 = vshrl.u32 %v2876, 7
    %v2878 = vsub.s32 7, %v2877
    %v2879 = vrot.slane %v2610, %v2878
    %2881 = vbcast.lane.b32.xlu0 %v2879, 256
    %v2882 = vpop.permute.xlu0 %2881
    %s2884 = sor.u32 256, 8
    %2885 = vbcast.lane.b32.xlu0 %v2879, %s2884
    %v2886 = vpop.permute.xlu0 %2885
    %v2887 = vlaneseq
    %v2888 = vshrl.u32 %v2887, 7
    %v2889 = vsub.s32 0, %v2888
    %v2890 = vrot.slane %v2636, %v2889
    %v2891 = vlaneseq
    %v2892 = vshrl.u32 %v2891, 7
    %v2893 = vsub.s32 0, %v2892
    %v2894 = vrot.slane %v2650, %v2893
    %v2895 = vlaneseq
    %v2896 = vshrl.u32 %v2895, 7
    %v2897 = vsub.s32 0, %v2896
    %v2898 = vrot.slane %v2658, %v2897
    %v2899 = vlaneseq
    %v2900 = vshrl.u32 %v2899, 7
    %v2901 = vsub.s32 0, %v2900
    %v2902 = vrot.slane %v2660, %v2901
    %v2903 = vlaneseq
    %v2904 = vshrl.u32 %v2903, 7
    %v2905 = vsub.s32 0, %v2904
    %v2906 = vrot.slane %v2643, %v2905
    %v2907 = vlaneseq
    %v2908 = vshrl.u32 %v2907, 7
    %v2909 = vsub.s32 0, %v2908
    %v2910 = vrot.slane %v2657, %v2909
    %v2911 = vlaneseq
    %v2912 = vshrl.u32 %v2911, 7
    %v2913 = vsub.s32 0, %v2912
    %v2914 = vrot.slane %v2659, %v2913
    %v2915 = vlaneseq
    %v2916 = vshrl.u32 %v2915, 7
    %v2917 = vsub.s32 0, %v2916
    %v2918 = vrot.slane %v2661, %v2917
    %v2919 = vlaneseq
    %v2920 = vshrl.u32 %v2919, 7
    %v2921 = vsub.s32 0, %v2920
    %v2922 = vrot.slane %v2685, %v2921
    %v2923 = vlaneseq
    %v2924 = vshrl.u32 %v2923, 7
    %v2925 = vsub.s32 0, %v2924
    %v2926 = vrot.slane %v2699, %v2925
    %v2927 = vlaneseq
    %v2928 = vshrl.u32 %v2927, 7
    %v2929 = vsub.s32 0, %v2928
    %v2930 = vrot.slane %v2707, %v2929
    %v2931 = vlaneseq
    %v2932 = vshrl.u32 %v2931, 7
    %v2933 = vsub.s32 0, %v2932
    %v2934 = vrot.slane %v2709, %v2933
    %v2935 = vlaneseq
    %v2936 = vshrl.u32 %v2935, 7
    %v2937 = vsub.s32 0, %v2936
    %v2938 = vrot.slane %v2692, %v2937
    %v2939 = vlaneseq
    %v2940 = vshrl.u32 %v2939, 7
    %v2941 = vsub.s32 0, %v2940
    %v2942 = vrot.slane %v2706, %v2941
    %v2943 = vlaneseq
    %v2944 = vshrl.u32 %v2943, 7
    %v2945 = vsub.s32 0, %v2944
    %v2946 = vrot.slane %v2708, %v2945
    %v2947 = vlaneseq
    %v2948 = vshrl.u32 %v2947, 7
    %v2949 = vsub.s32 0, %v2948
    %v2950 = vrot.slane %v2710, %v2949
    %v2967 = vadd.f32 %v2890, %v2717
    %v2968 = vadd.f32 %v2890, %v2721
    %v2969 = vadd.f32 %v2894, %v2728
    %v2970 = vadd.f32 %v2894, %v2732
    %v2971 = vadd.f32 %v2898, %v2739
    %v2972 = vadd.f32 %v2898, %v2743
    %v2973 = vadd.f32 %v2902, %v2750
    %v2974 = vadd.f32 %v2902, %v2754
    %v2975 = vadd.f32 %v2906, %v2761
    %v2976 = vadd.f32 %v2906, %v2765
    %v2977 = vadd.f32 %v2910, %v2772
    %v2978 = vadd.f32 %v2910, %v2776
    %v2979 = vadd.f32 %v2914, %v2783
    %v2980 = vadd.f32 %v2914, %v2787
    %v2981 = vadd.f32 %v2918, %v2794
    %v2982 = vadd.f32 %v2918, %v2798
    %v2983 = vadd.f32 %v2922, %v2805
    %v2984 = vadd.f32 %v2922, %v2809
    %v2985 = vadd.f32 %v2926, %v2816
    %v2986 = vadd.f32 %v2926, %v2820
    %v2987 = vadd.f32 %v2930, %v2827
    %v2988 = vadd.f32 %v2930, %v2831
    %v2989 = vadd.f32 %v2934, %v2838
    %v2990 = vadd.f32 %v2934, %v2842
    %v2991 = vadd.f32 %v2938, %v2849
    %v2992 = vadd.f32 %v2938, %v2853
    %v2993 = vadd.f32 %v2942, %v2860
    %v2994 = vadd.f32 %v2942, %v2864
    %v2995 = vadd.f32 %v2946, %v2871
    %v2996 = vadd.f32 %v2946, %v2875
    %v2997 = vadd.f32 %v2950, %v2882
    %v2998 = vadd.f32 %v2950, %v2886
    %v2999 = vmax.f32 %v2967, %v2971
    %v3000 = vmax.f32 %v2969, %v2973
    %v3001 = vmax.f32 %v2999, %v2975
    %v3002 = vmax.f32 %v3000, %v2977
    %v3003 = vmax.f32 %v3001, %v2979
    %v3004 = vmax.f32 %v3002, %v2981
    %v3005 = vmax.f32 %v3003, %v2983
    %v3006 = vmax.f32 %v3004, %v2985
    %v3007 = vmax.f32 %v3005, %v2987
    %v3008 = vmax.f32 %v3006, %v2989
    %v3009 = vmax.f32 %v3007, %v2991
    %v3010 = vmax.f32 %v3008, %v2993
    %v3011 = vmax.f32 %v3009, %v2995
    %v3012 = vmax.f32 %v3010, %v2997
    %v3013 = vmax.f32 %v3011, %v3012
    %v3014 = vmax.f32 %v2968, %v2972
    %v3015 = vmax.f32 %v2970, %v2974
    %v3016 = vmax.f32 %v3014, %v2976
    %v3017 = vmax.f32 %v3015, %v2978
    %v3018 = vmax.f32 %v3016, %v2980
    %v3019 = vmax.f32 %v3017, %v2982
    %v3020 = vmax.f32 %v3018, %v2984
    %v3021 = vmax.f32 %v3019, %v2986
    %v3022 = vmax.f32 %v3020, %v2988
    %v3023 = vmax.f32 %v3021, %v2990
    %v3024 = vmax.f32 %v3022, %v2992
    %v3025 = vmax.f32 %v3023, %v2994
    %v3026 = vmax.f32 %v3024, %v2996
    %v3027 = vmax.f32 %v3025, %v2998
    %v3028 = vmax.f32 %v3026, %v3027
    %v3029 = vmax.f32 %v3013, -1e+30
    %v3030 = vmax.f32 %v3028, -1e+30
    %v3031 = vsub.f32 %v2890, %v2717
    %v3032 = vsub.f32 %v2890, %v2721
    %v3033 = vsub.f32 %v2894, %v2728
    %v3034 = vsub.f32 %v2894, %v2732
    %v3035 = vsub.f32 %v2898, %v2739
    %v3036 = vsub.f32 %v2898, %v2743
    %v3037 = vsub.f32 %v2902, %v2750
    %v3038 = vsub.f32 %v2902, %v2754
    %v3039 = vsub.f32 %v2906, %v2761
    %v3040 = vsub.f32 %v2906, %v2765
    %v3041 = vsub.f32 %v2910, %v2772
    %v3042 = vsub.f32 %v2910, %v2776
    %v3043 = vsub.f32 %v2914, %v2783
    %v3044 = vsub.f32 %v2914, %v2787
    %v3045 = vsub.f32 %v2918, %v2794
    %v3046 = vsub.f32 %v2918, %v2798
    %v3047 = vsub.f32 %v2922, %v2805
    %v3048 = vsub.f32 %v2922, %v2809
    %v3049 = vsub.f32 %v2926, %v2816
    %v3050 = vsub.f32 %v2926, %v2820
    %v3051 = vsub.f32 %v2930, %v2827
    %v3052 = vsub.f32 %v2930, %v2831
    %v3053 = vsub.f32 %v2934, %v2838
    %v3054 = vsub.f32 %v2934, %v2842
    %v3055 = vsub.f32 %v2938, %v2849
    %v3056 = vsub.f32 %v2938, %v2853
    %v3057 = vsub.f32 %v2942, %v2860
    %v3058 = vsub.f32 %v2942, %v2864
    %v3059 = vsub.f32 %v2946, %v2871
    %v3060 = vsub.f32 %v2946, %v2875
    %v3061 = vsub.f32 %v2950, %v2882
    %v3062 = vsub.f32 %v2950, %v2886
    %v3063 = vmin.f32 %v3031, %v3035
    %v3064 = vmin.f32 %v3033, %v3037
    %v3065 = vmin.f32 %v3063, %v3039
    %v3066 = vmin.f32 %v3064, %v3041
    %v3067 = vmin.f32 %v3065, %v3043
    %v3068 = vmin.f32 %v3066, %v3045
    %v3069 = vmin.f32 %v3067, %v3047
    %v3070 = vmin.f32 %v3068, %v3049
    %v3071 = vmin.f32 %v3069, %v3051
    %v3072 = vmin.f32 %v3070, %v3053
    %v3073 = vmin.f32 %v3071, %v3055
    %v3074 = vmin.f32 %v3072, %v3057
    %v3075 = vmin.f32 %v3073, %v3059
    %v3076 = vmin.f32 %v3074, %v3061
    %v3077 = vmin.f32 %v3075, %v3076
    %v3078 = vmin.f32 %v3032, %v3036
    %v3079 = vmin.f32 %v3034, %v3038
    %v3080 = vmin.f32 %v3078, %v3040
    %v3081 = vmin.f32 %v3079, %v3042
    %v3082 = vmin.f32 %v3080, %v3044
    %v3083 = vmin.f32 %v3081, %v3046
    %v3084 = vmin.f32 %v3082, %v3048
    %v3085 = vmin.f32 %v3083, %v3050
    %v3086 = vmin.f32 %v3084, %v3052
    %v3087 = vmin.f32 %v3085, %v3054
    %v3088 = vmin.f32 %v3086, %v3056
    %v3089 = vmin.f32 %v3087, %v3058
    %v3090 = vmin.f32 %v3088, %v3060
    %v3091 = vmin.f32 %v3089, %v3062
    %v3092 = vmin.f32 %v3090, %v3091
    %v3093 = vmin.f32 %v3077, 1e+30
    %v3094 = vmin.f32 %v3092, 1e+30
    %v3095 = vadd.f32 %v2519, %v3029
    %v3096 = vadd.f32 %v2520, %v3030
    %v3097 = vmul.f32 %v3095, %v459
    %v3098 = vmul.f32 %v3096, %v464
    %v3099 = vadd.f32 %v2519, %v3093
    %v3100 = vadd.f32 %v2520, %v3094
    %v3101 = vmul.f32 %v3099, %v459
    %v3102 = vmul.f32 %v3100, %v464
    %v3103 = vpack.c.bf16 %v2579, %v2578
    %3104 = vst [vmem:[#allocation3] sm:$0xff] %v3103
    %v3105 = vpack.c.bf16 %v2583, %v2582
    %3106 = vst [vmem:[#allocation3 + $0x8] sm:$0xff] %v3105
    %v3107 = vpack.c.bf16 %v2605, %v2598
    %3108 = vst [vmem:[#allocation3 + $0x10] sm:$0xff] %v3107
    %v3109 = vpack.c.bf16 %v3098, %v3097
    %3110 = vst [vmem:[#allocation3 + $0x18] sm:$0xff] %v3109
    %v3111 = vpack.c.bf16 %v3102, %v3101
    %3112 = vst [vmem:[#allocation3 + $0x20] sm:$0xff] %v3111
    %v3113 = vld [vmem:[#allocation3] sm:$0xff]
    %v3114 = vld [vmem:[#allocation3 + $0x8] sm:$0xff]
    %v3115 = vld [vmem:[#allocation3 + $0x10] sm:$0xff]
    %v3116 = vld [vmem:[#allocation3 + $0x18] sm:$0xff]
    %v3117 = vld [vmem:[#allocation3 + $0x20] sm:$0xff]
    %s3118 = scalar_lea.vmem [#allocation7], 960
    %v3119 = vld [vmem:[%s3118] sm:$0xff]
    %v3120 = vld [vmem:[%s3118 + $0x8] sm:$0xf]
    %v3121 = vld [vmem:[%s3118 + $0xc] sm:$0xff]
    %v3122 = vld [vmem:[%s3118 + $0x14] sm:$0xf]
    %v3123 = vld [vmem:[%s3118 + $0x18] sm:$0xff]
    %v3124 = vld [vmem:[%s3118 + $0x20] sm:$0xf]
    %v3125 = vld [vmem:[%s3118 + $0x24] sm:$0xff]
    %v3126 = vld [vmem:[%s3118 + $0x2c] sm:$0xf]
    %v3127 = vld [vmem:[%s3118 + $0x30] sm:$0xff]
    %v3128 = vld [vmem:[%s3118 + $0x38] sm:$0xf]
    %v3129 = vld [vmem:[%s3118 + $0x3c] sm:$0xff]
    %v3130 = vld [vmem:[%s3118 + $0x44] sm:$0xf]
    %v3131 = vld [vmem:[%s3118 + $0x48] sm:$0xff]
    %v3132 = vld [vmem:[%s3118 + $0x50] sm:$0xf]
    %v3133 = vld [vmem:[%s3118 + $0x54] sm:$0xff]
    %v3134 = vld [vmem:[%s3118 + $0x5c] sm:$0xf]
    %v3135 = vld [vmem:[%s3118 + $0x60] sm:$0xff]
    %v3136 = vld [vmem:[%s3118 + $0x68] sm:$0xf]
    %v3137 = vld [vmem:[%s3118 + $0x6c] sm:$0xff]
    %v3138 = vld [vmem:[%s3118 + $0x74] sm:$0xf]
    %v3139 = vld [vmem:[%s3118 + $0x78] sm:$0xff]
    %v3140 = vld [vmem:[%s3118 + $0x80] sm:$0xf]
    %v3141 = vld [vmem:[%s3118 + $0x84] sm:$0xff]
    %v3142 = vld [vmem:[%s3118 + $0x8c] sm:$0xf]
    %v3143 = vld [vmem:[%s3118 + $0x90] sm:$0xff]
    %v3144 = vld [vmem:[%s3118 + $0x98] sm:$0xf]
    %v3145 = vld [vmem:[%s3118 + $0x9c] sm:$0xff]
    %v3146 = vld [vmem:[%s3118 + $0xa4] sm:$0xf]
    %v3147 = vld [vmem:[%s3118 + $0xa8] sm:$0xff]
    %v3148 = vld [vmem:[%s3118 + $0xb0] sm:$0xf]
    %v3149 = vld [vmem:[%s3118 + $0xb4] sm:$0xff]
    %v3150 = vld [vmem:[%s3118 + $0xbc] sm:$0xf]
    %v3151 = vld [vmem:[%s3118 + $0xc0] sm:$0xff]
    %v3152 = vld [vmem:[%s3118 + $0xc8] sm:$0xf]
    %v3153 = vld [vmem:[%s3118 + $0xcc] sm:$0xff]
    %v3154 = vld [vmem:[%s3118 + $0xd4] sm:$0xf]
    %v3155 = vld [vmem:[%s3118 + $0xd8] sm:$0xff]
    %v3156 = vld [vmem:[%s3118 + $0xe0] sm:$0xf]
    %v3157 = vld [vmem:[%s3118 + $0xe4] sm:$0xff]
    %v3158 = vld [vmem:[%s3118 + $0xec] sm:$0xf]
    %v3159 = vld [vmem:[%s3118 + $0xf0] sm:$0xff]
    %v3160 = vld [vmem:[%s3118 + $0xf8] sm:$0xf]
    %v3161 = vld [vmem:[%s3118 + $0xfc] sm:$0xff]
    %v3162 = vld [vmem:[%s3118 + $0x104] sm:$0xf]
    %v3163 = vld [vmem:[%s3118 + $0x108] sm:$0xff]
    %v3164 = vld [vmem:[%s3118 + $0x110] sm:$0xf]
    %v3165 = vld [vmem:[%s3118 + $0x114] sm:$0xff]
    %v3166 = vld [vmem:[%s3118 + $0x11c] sm:$0xf]
    %v3167 = vld [vmem:[%s3118 + $0x120] sm:$0xff]
    %v3168 = vld [vmem:[%s3118 + $0x128] sm:$0xf]
    %v3169 = vld [vmem:[%s3118 + $0x12c] sm:$0xff]
    %v3170 = vld [vmem:[%s3118 + $0x134] sm:$0xf]
    %v3171 = vld [vmem:[%s3118 + $0x138] sm:$0xff]
    %v3172 = vld [vmem:[%s3118 + $0x140] sm:$0xf]
    %v3173 = vld [vmem:[%s3118 + $0x144] sm:$0xff]
    %v3174 = vld [vmem:[%s3118 + $0x14c] sm:$0xf]
    %v3175 = vld [vmem:[%s3118 + $0x150] sm:$0xff]
    %v3176 = vld [vmem:[%s3118 + $0x158] sm:$0xf]
    %v3177 = vld [vmem:[%s3118 + $0x15c] sm:$0xff]
    %v3178 = vld [vmem:[%s3118 + $0x164] sm:$0xf]
    %v3179 = vld [vmem:[%s3118 + $0x168] sm:$0xff]
    %v3180 = vld [vmem:[%s3118 + $0x170] sm:$0xf]
    %v3181 = vld [vmem:[%s3118 + $0x174] sm:$0xff]
    %v3182 = vld [vmem:[%s3118 + $0x17c] sm:$0xf]
    %v3183 = vld [vmem:[%s3118 + $0x180] sm:$0xff]
    %v3184 = vld [vmem:[%s3118 + $0x188] sm:$0xf]
    %v3185 = vld [vmem:[%s3118 + $0x18c] sm:$0xff]
    %v3186 = vld [vmem:[%s3118 + $0x194] sm:$0xf]
    %v3187 = vld [vmem:[%s3118 + $0x198] sm:$0xff]
    %v3188 = vld [vmem:[%s3118 + $0x1a0] sm:$0xf]
    %v3189 = vld [vmem:[%s3118 + $0x1a4] sm:$0xff]
    %v3190 = vld [vmem:[%s3118 + $0x1ac] sm:$0xf]
    %v3191 = vld [vmem:[%s3118 + $0x1b0] sm:$0xff]
    %v3192 = vld [vmem:[%s3118 + $0x1b8] sm:$0xf]
    %v3193 = vld [vmem:[%s3118 + $0x1bc] sm:$0xff]
    %v3194 = vld [vmem:[%s3118 + $0x1c4] sm:$0xf]
    %v3195 = vld [vmem:[%s3118 + $0x1c8] sm:$0xff]
    %v3196 = vld [vmem:[%s3118 + $0x1d0] sm:$0xf]
    %v3197 = vld [vmem:[%s3118 + $0x1d4] sm:$0xff]
    %v3198 = vld [vmem:[%s3118 + $0x1dc] sm:$0xf]
    %v3199 = vld [vmem:[%s3118 + $0x1e0] sm:$0xff]
    %v3200 = vld [vmem:[%s3118 + $0x1e8] sm:$0xf]
    %v3201 = vld [vmem:[%s3118 + $0x1ec] sm:$0xff]
    %v3202 = vld [vmem:[%s3118 + $0x1f4] sm:$0xf]
    %v3203 = vld [vmem:[%s3118 + $0x1f8] sm:$0xff]
    %v3204 = vld [vmem:[%s3118 + $0x200] sm:$0xf]
    %v3205 = vld [vmem:[%s3118 + $0x204] sm:$0xff]
    %v3206 = vld [vmem:[%s3118 + $0x20c] sm:$0xf]
    %v3207 = vld [vmem:[%s3118 + $0x210] sm:$0xff]
    %v3208 = vld [vmem:[%s3118 + $0x218] sm:$0xf]
    %v3209 = vld [vmem:[%s3118 + $0x21c] sm:$0xff]
    %v3210 = vld [vmem:[%s3118 + $0x224] sm:$0xf]
    %v3211 = vld [vmem:[%s3118 + $0x228] sm:$0xff]
    %v3212 = vld [vmem:[%s3118 + $0x230] sm:$0xf]
    %v3213 = vld [vmem:[%s3118 + $0x234] sm:$0xff]
    %v3214 = vld [vmem:[%s3118 + $0x23c] sm:$0xf]
    %v3215 = vld [vmem:[%s3118 + $0x240] sm:$0xff]
    %v3216 = vld [vmem:[%s3118 + $0x248] sm:$0xf]
    %v3217 = vld [vmem:[%s3118 + $0x24c] sm:$0xff]
    %v3218 = vld [vmem:[%s3118 + $0x254] sm:$0xf]
    %v3219 = vld [vmem:[%s3118 + $0x258] sm:$0xff]
    %v3220 = vld [vmem:[%s3118 + $0x260] sm:$0xf]
    %v3221 = vld [vmem:[%s3118 + $0x264] sm:$0xff]
    %v3222 = vld [vmem:[%s3118 + $0x26c] sm:$0xf]
    %v3223 = vld [vmem:[%s3118 + $0x270] sm:$0xff]
    %v3224 = vld [vmem:[%s3118 + $0x278] sm:$0xf]
    %v3225 = vld [vmem:[%s3118 + $0x27c] sm:$0xff]
    %v3226 = vld [vmem:[%s3118 + $0x284] sm:$0xf]
    %v3227 = vld [vmem:[%s3118 + $0x288] sm:$0xff]
    %v3228 = vld [vmem:[%s3118 + $0x290] sm:$0xf]
    %v3229 = vld [vmem:[%s3118 + $0x294] sm:$0xff]
    %v3230 = vld [vmem:[%s3118 + $0x29c] sm:$0xf]
    %v3231 = vld [vmem:[%s3118 + $0x2a0] sm:$0xff]
    %v3232 = vld [vmem:[%s3118 + $0x2a8] sm:$0xf]
    %v3233 = vld [vmem:[%s3118 + $0x2ac] sm:$0xff]
    %v3234 = vld [vmem:[%s3118 + $0x2b4] sm:$0xf]
    %v3235 = vld [vmem:[%s3118 + $0x2b8] sm:$0xff]
    %v3236 = vld [vmem:[%s3118 + $0x2c0] sm:$0xf]
    %v3237 = vld [vmem:[%s3118 + $0x2c4] sm:$0xff]
    %v3238 = vld [vmem:[%s3118 + $0x2cc] sm:$0xf]
    %v3239 = vld [vmem:[%s3118 + $0x2d0] sm:$0xff]
    %v3240 = vld [vmem:[%s3118 + $0x2d8] sm:$0xf]
    %v3241 = vld [vmem:[%s3118 + $0x2dc] sm:$0xff]
    %v3242 = vld [vmem:[%s3118 + $0x2e4] sm:$0xf]
    %v3243 = vld [vmem:[%s3118 + $0x2e8] sm:$0xff]
    %v3244 = vld [vmem:[%s3118 + $0x2f0] sm:$0xf]
    %v3245 = vld [vmem:[%s3118 + $0x2f4] sm:$0xff]
    %v3246 = vld [vmem:[%s3118 + $0x2fc] sm:$0xf]
    %v3247 = vld [vmem:[%s3118 + $0x300] sm:$0xff]
    %v3248 = vld [vmem:[%s3118 + $0x308] sm:$0xf]
    %v3249 = vld [vmem:[%s3118 + $0x30c] sm:$0xff]
    %v3250 = vld [vmem:[%s3118 + $0x314] sm:$0xf]
    %v3251 = vld [vmem:[%s3118 + $0x318] sm:$0xff]
    %v3252 = vld [vmem:[%s3118 + $0x320] sm:$0xf]
    %v3253 = vld [vmem:[%s3118 + $0x324] sm:$0xff]
    %v3254 = vld [vmem:[%s3118 + $0x32c] sm:$0xf]
    %v3255 = vld [vmem:[%s3118 + $0x330] sm:$0xff]
    %v3256 = vld [vmem:[%s3118 + $0x338] sm:$0xf]
    %v3257 = vld [vmem:[%s3118 + $0x33c] sm:$0xff]
    %v3258 = vld [vmem:[%s3118 + $0x344] sm:$0xf]
    %v3259 = vld [vmem:[%s3118 + $0x348] sm:$0xff]
    %v3260 = vld [vmem:[%s3118 + $0x350] sm:$0xf]
    %v3261 = vld [vmem:[%s3118 + $0x354] sm:$0xff]
    %v3262 = vld [vmem:[%s3118 + $0x35c] sm:$0xf]
    %v3263 = vld [vmem:[%s3118 + $0x360] sm:$0xff]
    %v3264 = vld [vmem:[%s3118 + $0x368] sm:$0xf]
    %v3265 = vld [vmem:[%s3118 + $0x36c] sm:$0xff]
    %v3266 = vld [vmem:[%s3118 + $0x374] sm:$0xf]
    %v3267 = vld [vmem:[%s3118 + $0x378] sm:$0xff]
    %v3268 = vld [vmem:[%s3118 + $0x380] sm:$0xf]
    %v3269 = vld [vmem:[%s3118 + $0x384] sm:$0xff]
    %v3270 = vld [vmem:[%s3118 + $0x38c] sm:$0xf]
    %v3271 = vld [vmem:[%s3118 + $0x390] sm:$0xff]
    %v3272 = vld [vmem:[%s3118 + $0x398] sm:$0xf]
    %v3273 = vld [vmem:[%s3118 + $0x39c] sm:$0xff]
    %v3274 = vld [vmem:[%s3118 + $0x3a4] sm:$0xf]
    %v3275 = vld [vmem:[%s3118 + $0x3a8] sm:$0xff]
    %v3276 = vld [vmem:[%s3118 + $0x3b0] sm:$0xf]
    %v3277 = vld [vmem:[%s3118 + $0x3b4] sm:$0xff]
    %v3278 = vld [vmem:[%s3118 + $0x3bc] sm:$0xf]
    %v3439 = vunpack.c.l.b16 %v3119
    %v3440 = vunpack.c.h.b16 %v3119
    %v3441 = vunpack.c.l.b16 %v3120
    %v3442 = vunpack.c.l.b16 %v3121
    %v3443 = vunpack.c.h.b16 %v3121
    %v3444 = vunpack.c.l.b16 %v3122
    %v3445 = vunpack.c.l.b16 %v3123
    %v3446 = vunpack.c.h.b16 %v3123
    %v3447 = vunpack.c.l.b16 %v3124
    %v3448 = vunpack.c.l.b16 %v3125
    %v3449 = vunpack.c.h.b16 %v3125
    %v3450 = vunpack.c.l.b16 %v3126
    %v3451 = vunpack.c.l.b16 %v3127
    %v3452 = vunpack.c.h.b16 %v3127
    %v3453 = vunpack.c.l.b16 %v3128
    %v3454 = vunpack.c.l.b16 %v3129
    %v3455 = vunpack.c.h.b16 %v3129
    %v3456 = vunpack.c.l.b16 %v3130
    %v3457 = vunpack.c.l.b16 %v3131
    %v3458 = vunpack.c.h.b16 %v3131
    %v3459 = vunpack.c.l.b16 %v3132
    %v3460 = vunpack.c.l.b16 %v3133
    %v3461 = vunpack.c.h.b16 %v3133
    %v3462 = vunpack.c.l.b16 %v3134
    %v3463 = vunpack.c.l.b16 %v3135
    %v3464 = vunpack.c.h.b16 %v3135
    %v3465 = vunpack.c.l.b16 %v3136
    %v3466 = vunpack.c.l.b16 %v3137
    %v3467 = vunpack.c.h.b16 %v3137
    %v3468 = vunpack.c.l.b16 %v3138
    %v3469 = vunpack.c.l.b16 %v3139
    %v3470 = vunpack.c.h.b16 %v3139
    %v3471 = vunpack.c.l.b16 %v3140
    %v3472 = vunpack.c.l.b16 %v3141
    %v3473 = vunpack.c.h.b16 %v3141
    %v3474 = vunpack.c.l.b16 %v3142
    %v3475 = vunpack.c.l.b16 %v3143
    %v3476 = vunpack.c.h.b16 %v3143
    %v3477 = vunpack.c.l.b16 %v3144
    %v3478 = vunpack.c.l.b16 %v3145
    %v3479 = vunpack.c.h.b16 %v3145
    %v3480 = vunpack.c.l.b16 %v3146
    %v3481 = vunpack.c.l.b16 %v3147
    %v3482 = vunpack.c.h.b16 %v3147
    %v3483 = vunpack.c.l.b16 %v3148
    %v3484 = vunpack.c.l.b16 %v3149
    %v3485 = vunpack.c.h.b16 %v3149
    %v3486 = vunpack.c.l.b16 %v3150
    %v3487 = vunpack.c.l.b16 %v3151
    %v3488 = vunpack.c.h.b16 %v3151
    %v3489 = vunpack.c.l.b16 %v3152
    %v3490 = vunpack.c.l.b16 %v3153
    %v3491 = vunpack.c.h.b16 %v3153
    %v3492 = vunpack.c.l.b16 %v3154
    %v3493 = vunpack.c.l.b16 %v3155
    %v3494 = vunpack.c.h.b16 %v3155
    %v3495 = vunpack.c.l.b16 %v3156
    %v3496 = vunpack.c.l.b16 %v3157
    %v3497 = vunpack.c.h.b16 %v3157
    %v3498 = vunpack.c.l.b16 %v3158
    %v3499 = vunpack.c.l.b16 %v3159
    %v3500 = vunpack.c.h.b16 %v3159
    %v3501 = vunpack.c.l.b16 %v3160
    %v3502 = vunpack.c.l.b16 %v3161
    %v3503 = vunpack.c.h.b16 %v3161
    %v3504 = vunpack.c.l.b16 %v3162
    %v3505 = vunpack.c.l.b16 %v3163
    %v3506 = vunpack.c.h.b16 %v3163
    %v3507 = vunpack.c.l.b16 %v3164
    %v3508 = vunpack.c.l.b16 %v3165
    %v3509 = vunpack.c.h.b16 %v3165
    %v3510 = vunpack.c.l.b16 %v3166
    %v3511 = vunpack.c.l.b16 %v3167
    %v3512 = vunpack.c.h.b16 %v3167
    %v3513 = vunpack.c.l.b16 %v3168
    %v3514 = vunpack.c.l.b16 %v3169
    %v3515 = vunpack.c.h.b16 %v3169
    %v3516 = vunpack.c.l.b16 %v3170
    %v3517 = vunpack.c.l.b16 %v3171
    %v3518 = vunpack.c.h.b16 %v3171
    %v3519 = vunpack.c.l.b16 %v3172
    %v3520 = vunpack.c.l.b16 %v3173
    %v3521 = vunpack.c.h.b16 %v3173
    %v3522 = vunpack.c.l.b16 %v3174
    %v3523 = vunpack.c.l.b16 %v3175
    %v3524 = vunpack.c.h.b16 %v3175
    %v3525 = vunpack.c.l.b16 %v3176
    %v3526 = vunpack.c.l.b16 %v3177
    %v3527 = vunpack.c.h.b16 %v3177
    %v3528 = vunpack.c.l.b16 %v3178
    %v3529 = vunpack.c.l.b16 %v3179
    %v3530 = vunpack.c.h.b16 %v3179
    %v3531 = vunpack.c.l.b16 %v3180
    %v3532 = vunpack.c.l.b16 %v3181
    %v3533 = vunpack.c.h.b16 %v3181
    %v3534 = vunpack.c.l.b16 %v3182
    %v3535 = vunpack.c.l.b16 %v3183
    %v3536 = vunpack.c.h.b16 %v3183
    %v3537 = vunpack.c.l.b16 %v3184
    %v3538 = vunpack.c.l.b16 %v3185
    %v3539 = vunpack.c.h.b16 %v3185
    %v3540 = vunpack.c.l.b16 %v3186
    %v3541 = vunpack.c.l.b16 %v3187
    %v3542 = vunpack.c.h.b16 %v3187
    %v3543 = vunpack.c.l.b16 %v3188
    %v3544 = vunpack.c.l.b16 %v3189
    %v3545 = vunpack.c.h.b16 %v3189
    %v3546 = vunpack.c.l.b16 %v3190
    %v3547 = vunpack.c.l.b16 %v3191
    %v3548 = vunpack.c.h.b16 %v3191
    %v3549 = vunpack.c.l.b16 %v3192
    %v3550 = vunpack.c.l.b16 %v3193
    %v3551 = vunpack.c.h.b16 %v3193
    %v3552 = vunpack.c.l.b16 %v3194
    %v3553 = vunpack.c.l.b16 %v3195
    %v3554 = vunpack.c.h.b16 %v3195
    %v3555 = vunpack.c.l.b16 %v3196
    %v3556 = vunpack.c.l.b16 %v3197
    %v3557 = vunpack.c.h.b16 %v3197
    %v3558 = vunpack.c.l.b16 %v3198
    %v3559 = vunpack.c.l.b16 %v3199
    %v3560 = vunpack.c.h.b16 %v3199
    %v3561 = vunpack.c.l.b16 %v3200
    %v3562 = vunpack.c.l.b16 %v3201
    %v3563 = vunpack.c.h.b16 %v3201
    %v3564 = vunpack.c.l.b16 %v3202
    %v3565 = vunpack.c.l.b16 %v3203
    %v3566 = vunpack.c.h.b16 %v3203
    %v3567 = vunpack.c.l.b16 %v3204
    %v3568 = vunpack.c.l.b16 %v3205
    %v3569 = vunpack.c.h.b16 %v3205
    %v3570 = vunpack.c.l.b16 %v3206
    %v3571 = vunpack.c.l.b16 %v3207
    %v3572 = vunpack.c.h.b16 %v3207
    %v3573 = vunpack.c.l.b16 %v3208
    %v3574 = vunpack.c.l.b16 %v3209
    %v3575 = vunpack.c.h.b16 %v3209
    %v3576 = vunpack.c.l.b16 %v3210
    %v3577 = vunpack.c.l.b16 %v3211
    %v3578 = vunpack.c.h.b16 %v3211
    %v3579 = vunpack.c.l.b16 %v3212
    %v3580 = vunpack.c.l.b16 %v3213
    %v3581 = vunpack.c.h.b16 %v3213
    %v3582 = vunpack.c.l.b16 %v3214
    %v3583 = vunpack.c.l.b16 %v3215
    %v3584 = vunpack.c.h.b16 %v3215
    %v3585 = vunpack.c.l.b16 %v3216
    %v3586 = vunpack.c.l.b16 %v3217
    %v3587 = vunpack.c.h.b16 %v3217
    %v3588 = vunpack.c.l.b16 %v3218
    %v3589 = vunpack.c.l.b16 %v3219
    %v3590 = vunpack.c.h.b16 %v3219
    %v3591 = vunpack.c.l.b16 %v3220
    %v3592 = vunpack.c.l.b16 %v3221
    %v3593 = vunpack.c.h.b16 %v3221
    %v3594 = vunpack.c.l.b16 %v3222
    %v3595 = vunpack.c.l.b16 %v3223
    %v3596 = vunpack.c.h.b16 %v3223
    %v3597 = vunpack.c.l.b16 %v3224
    %v3598 = vunpack.c.l.b16 %v3225
    %v3599 = vunpack.c.h.b16 %v3225
    %v3600 = vunpack.c.l.b16 %v3226
    %v3601 = vunpack.c.l.b16 %v3227
    %v3602 = vunpack.c.h.b16 %v3227
    %v3603 = vunpack.c.l.b16 %v3228
    %v3604 = vunpack.c.l.b16 %v3229
    %v3605 = vunpack.c.h.b16 %v3229
    %v3606 = vunpack.c.l.b16 %v3230
    %v3607 = vunpack.c.l.b16 %v3231
    %v3608 = vunpack.c.h.b16 %v3231
    %v3609 = vunpack.c.l.b16 %v3232
    %v3610 = vunpack.c.l.b16 %v3233
    %v3611 = vunpack.c.h.b16 %v3233
    %v3612 = vunpack.c.l.b16 %v3234
    %v3613 = vunpack.c.l.b16 %v3235
    %v3614 = vunpack.c.h.b16 %v3235
    %v3615 = vunpack.c.l.b16 %v3236
    %v3616 = vunpack.c.l.b16 %v3237
    %v3617 = vunpack.c.h.b16 %v3237
    %v3618 = vunpack.c.l.b16 %v3238
    %v3619 = vunpack.c.l.b16 %v3239
    %v3620 = vunpack.c.h.b16 %v3239
    %v3621 = vunpack.c.l.b16 %v3240
    %v3622 = vunpack.c.l.b16 %v3241
    %v3623 = vunpack.c.h.b16 %v3241
    %v3624 = vunpack.c.l.b16 %v3242
    %v3625 = vunpack.c.l.b16 %v3243
    %v3626 = vunpack.c.h.b16 %v3243
    %v3627 = vunpack.c.l.b16 %v3244
    %v3628 = vunpack.c.l.b16 %v3245
    %v3629 = vunpack.c.h.b16 %v3245
    %v3630 = vunpack.c.l.b16 %v3246
    %v3631 = vunpack.c.l.b16 %v3247
    %v3632 = vunpack.c.h.b16 %v3247
    %v3633 = vunpack.c.l.b16 %v3248
    %v3634 = vunpack.c.l.b16 %v3249
    %v3635 = vunpack.c.h.b16 %v3249
    %v3636 = vunpack.c.l.b16 %v3250
    %v3637 = vunpack.c.l.b16 %v3251
    %v3638 = vunpack.c.h.b16 %v3251
    %v3639 = vunpack.c.l.b16 %v3252
    %v3640 = vunpack.c.l.b16 %v3253
    %v3641 = vunpack.c.h.b16 %v3253
    %v3642 = vunpack.c.l.b16 %v3254
    %v3643 = vunpack.c.l.b16 %v3255
    %v3644 = vunpack.c.h.b16 %v3255
    %v3645 = vunpack.c.l.b16 %v3256
    %v3646 = vunpack.c.l.b16 %v3257
    %v3647 = vunpack.c.h.b16 %v3257
    %v3648 = vunpack.c.l.b16 %v3258
    %v3649 = vunpack.c.l.b16 %v3259
    %v3650 = vunpack.c.h.b16 %v3259
    %v3651 = vunpack.c.l.b16 %v3260
    %v3652 = vunpack.c.l.b16 %v3261
    %v3653 = vunpack.c.h.b16 %v3261
    %v3654 = vunpack.c.l.b16 %v3262
    %v3655 = vunpack.c.l.b16 %v3263
    %v3656 = vunpack.c.h.b16 %v3263
    %v3657 = vunpack.c.l.b16 %v3264
    %v3658 = vunpack.c.l.b16 %v3265
    %v3659 = vunpack.c.h.b16 %v3265
    %v3660 = vunpack.c.l.b16 %v3266
    %v3661 = vunpack.c.l.b16 %v3267
    %v3662 = vunpack.c.h.b16 %v3267
    %v3663 = vunpack.c.l.b16 %v3268
    %v3664 = vunpack.c.l.b16 %v3269
    %v3665 = vunpack.c.h.b16 %v3269
    %v3666 = vunpack.c.l.b16 %v3270
    %v3667 = vunpack.c.l.b16 %v3271
    %v3668 = vunpack.c.h.b16 %v3271
    %v3669 = vunpack.c.l.b16 %v3272
    %v3670 = vunpack.c.l.b16 %v3273
    %v3671 = vunpack.c.h.b16 %v3273
    %v3672 = vunpack.c.l.b16 %v3274
    %v3673 = vunpack.c.l.b16 %v3275
    %v3674 = vunpack.c.h.b16 %v3275
    %v3675 = vunpack.c.l.b16 %v3276
    %v3676 = vunpack.c.l.b16 %v3277
    %v3677 = vunpack.c.h.b16 %v3277
    %v3678 = vunpack.c.l.b16 %v3278
    %v3679 = vpack.c.b16 %v3442, %v3439
    %v3680 = vpack.c.b16 %v3443, %v3440
    %v3681 = vpack.c.b16 %v3444, %v3441
    %v3682 = vpack.c.b16 %v3448, %v3445
    %v3683 = vpack.c.b16 %v3449, %v3446
    %v3684 = vpack.c.b16 %v3450, %v3447
    %v3685 = vpack.c.b16 %v3454, %v3451
    %v3686 = vpack.c.b16 %v3455, %v3452
    %v3687 = vpack.c.b16 %v3456, %v3453
    %v3688 = vpack.c.b16 %v3460, %v3457
    %v3689 = vpack.c.b16 %v3461, %v3458
    %v3690 = vpack.c.b16 %v3462, %v3459
    %v3691 = vpack.c.b16 %v3466, %v3463
    %v3692 = vpack.c.b16 %v3467, %v3464
    %v3693 = vpack.c.b16 %v3468, %v3465
    %v3694 = vpack.c.b16 %v3472, %v3469
    %v3695 = vpack.c.b16 %v3473, %v3470
    %v3696 = vpack.c.b16 %v3474, %v3471
    %v3697 = vpack.c.b16 %v3478, %v3475
    %v3698 = vpack.c.b16 %v3479, %v3476
    %v3699 = vpack.c.b16 %v3480, %v3477
    %v3700 = vpack.c.b16 %v3484, %v3481
    %v3701 = vpack.c.b16 %v3485, %v3482
    %v3702 = vpack.c.b16 %v3486, %v3483
    %v3703 = vpack.c.b16 %v3490, %v3487
    %v3704 = vpack.c.b16 %v3491, %v3488
    %v3705 = vpack.c.b16 %v3492, %v3489
    %v3706 = vpack.c.b16 %v3496, %v3493
    %v3707 = vpack.c.b16 %v3497, %v3494
    %v3708 = vpack.c.b16 %v3498, %v3495
    %v3709 = vpack.c.b16 %v3502, %v3499
    %v3710 = vpack.c.b16 %v3503, %v3500
    %v3711 = vpack.c.b16 %v3504, %v3501
    %v3712 = vpack.c.b16 %v3508, %v3505
    %v3713 = vpack.c.b16 %v3509, %v3506
    %v3714 = vpack.c.b16 %v3510, %v3507
    %v3715 = vpack.c.b16 %v3514, %v3511
    %v3716 = vpack.c.b16 %v3515, %v3512
    %v3717 = vpack.c.b16 %v3516, %v3513
    %v3718 = vpack.c.b16 %v3520, %v3517
    %v3719 = vpack.c.b16 %v3521, %v3518
    %v3720 = vpack.c.b16 %v3522, %v3519
    %v3721 = vpack.c.b16 %v3526, %v3523
    %v3722 = vpack.c.b16 %v3527, %v3524
    %v3723 = vpack.c.b16 %v3528, %v3525
    %v3724 = vpack.c.b16 %v3532, %v3529
    %v3725 = vpack.c.b16 %v3533, %v3530
    %v3726 = vpack.c.b16 %v3534, %v3531
    %v3727 = vpack.c.b16 %v3538, %v3535
    %v3728 = vpack.c.b16 %v3539, %v3536
    %v3729 = vpack.c.b16 %v3540, %v3537
    %v3730 = vpack.c.b16 %v3544, %v3541
    %v3731 = vpack.c.b16 %v3545, %v3542
    %v3732 = vpack.c.b16 %v3546, %v3543
    %v3733 = vpack.c.b16 %v3550, %v3547
    %v3734 = vpack.c.b16 %v3551, %v3548
    %v3735 = vpack.c.b16 %v3552, %v3549
    %v3736 = vpack.c.b16 %v3556, %v3553
    %v3737 = vpack.c.b16 %v3557, %v3554
    %v3738 = vpack.c.b16 %v3558, %v3555
    %v3739 = vpack.c.b16 %v3562, %v3559
    %v3740 = vpack.c.b16 %v3563, %v3560
    %v3741 = vpack.c.b16 %v3564, %v3561
    %v3742 = vpack.c.b16 %v3568, %v3565
    %v3743 = vpack.c.b16 %v3569, %v3566
    %v3744 = vpack.c.b16 %v3570, %v3567
    %v3745 = vpack.c.b16 %v3574, %v3571
    %v3746 = vpack.c.b16 %v3575, %v3572
    %v3747 = vpack.c.b16 %v3576, %v3573
    %v3748 = vpack.c.b16 %v3580, %v3577
    %v3749 = vpack.c.b16 %v3581, %v3578
    %v3750 = vpack.c.b16 %v3582, %v3579
    %v3751 = vpack.c.b16 %v3586, %v3583
    %v3752 = vpack.c.b16 %v3587, %v3584
    %v3753 = vpack.c.b16 %v3588, %v3585
    %v3754 = vpack.c.b16 %v3592, %v3589
    %v3755 = vpack.c.b16 %v3593, %v3590
    %v3756 = vpack.c.b16 %v3594, %v3591
    %v3757 = vpack.c.b16 %v3598, %v3595
    %v3758 = vpack.c.b16 %v3599, %v3596
    %v3759 = vpack.c.b16 %v3600, %v3597
    %v3760 = vpack.c.b16 %v3604, %v3601
    %v3761 = vpack.c.b16 %v3605, %v3602
    %v3762 = vpack.c.b16 %v3606, %v3603
    %v3763 = vpack.c.b16 %v3610, %v3607
    %v3764 = vpack.c.b16 %v3611, %v3608
    %v3765 = vpack.c.b16 %v3612, %v3609
    %v3766 = vpack.c.b16 %v3616, %v3613
    %v3767 = vpack.c.b16 %v3617, %v3614
    %v3768 = vpack.c.b16 %v3618, %v3615
    %v3769 = vpack.c.b16 %v3622, %v3619
    %v3770 = vpack.c.b16 %v3623, %v3620
    %v3771 = vpack.c.b16 %v3624, %v3621
    %v3772 = vpack.c.b16 %v3628, %v3625
    %v3773 = vpack.c.b16 %v3629, %v3626
    %v3774 = vpack.c.b16 %v3630, %v3627
    %v3775 = vpack.c.b16 %v3634, %v3631
    %v3776 = vpack.c.b16 %v3635, %v3632
    %v3777 = vpack.c.b16 %v3636, %v3633
    %v3778 = vpack.c.b16 %v3640, %v3637
    %v3779 = vpack.c.b16 %v3641, %v3638
    %v3780 = vpack.c.b16 %v3642, %v3639
    %v3781 = vpack.c.b16 %v3646, %v3643
    %v3782 = vpack.c.b16 %v3647, %v3644
    %v3783 = vpack.c.b16 %v3648, %v3645
    %v3784 = vpack.c.b16 %v3652, %v3649
    %v3785 = vpack.c.b16 %v3653, %v3650
    %v3786 = vpack.c.b16 %v3654, %v3651
    %v3787 = vpack.c.b16 %v3658, %v3655
    %v3788 = vpack.c.b16 %v3659, %v3656
    %v3789 = vpack.c.b16 %v3660, %v3657
    %v3790 = vpack.c.b16 %v3664, %v3661
    %v3791 = vpack.c.b16 %v3665, %v3662
    %v3792 = vpack.c.b16 %v3666, %v3663
    %v3793 = vpack.c.b16 %v3670, %v3667
    %v3794 = vpack.c.b16 %v3671, %v3668
    %v3795 = vpack.c.b16 %v3672, %v3669
    %v3796 = vpack.c.b16 %v3676, %v3673
    %v3797 = vpack.c.b16 %v3677, %v3674
    %v3798 = vpack.c.b16 %v3678, %v3675
    %3919 = vmatprep.subr.bf16.mxu0 %v3680
    %3920 = vmatpush1.bf16.msra.mxu0 %v3679
    %3921 = vmatprep.subr.bf16.mxu0 %v3683
    %3922 = vmatpush1.bf16.msra.mxu0 %v3682
    %3923 = vmatprep.subr.bf16.mxu0 %v3686
    %3924 = vmatpush1.bf16.msra.mxu0 %v3685
    %3925 = vmatprep.subr.bf16.mxu0 %v3689
    %3926 = vmatpush1.bf16.msra.mxu0 %v3688
    %3927 = vmatprep.subr.bf16.mxu0 %v3692
    %3928 = vmatpush1.bf16.msra.mxu0 %v3691
    %3929 = vmatprep.subr.bf16.mxu0 %v3695
    %3930 = vmatpush1.bf16.msra.mxu0 %v3694
    %3931 = vmatprep.subr.bf16.mxu0 %v3698
    %3932 = vmatpush1.bf16.msra.mxu0 %v3697
    %3933 = vmatprep.subr.bf16.mxu0 %v3701
    %3934 = vmatpush1.bf16.msra.mxu0 %v3700
    %3935 = vmatprep.subr.bf16.mxu0 %v3704
    %3936 = vmatpush1.bf16.msra.mxu0 %v3703
    %3937 = vmatprep.subr.bf16.mxu0 %v3707
    %3938 = vmatpush1.bf16.msra.mxu0 %v3706
    %3939 = vmatprep.subr.bf16.mxu0 %v3710
    %3940 = vmatpush1.bf16.msra.mxu0 %v3709
    %3941 = vmatprep.subr.bf16.mxu0 %v3713
    %3942 = vmatpush1.bf16.msra.mxu0 %v3712
    %3943 = vmatprep.subr.bf16.mxu0 %v3716
    %3944 = vmatpush1.bf16.msra.mxu0 %v3715
    %3945 = vmatprep.subr.bf16.mxu0 %v3719
    %3946 = vmatpush1.bf16.msra.mxu0 %v3718
    %3947 = vmatprep.subr.bf16.mxu0 %v3722
    %3948 = vmatpush1.bf16.msra.mxu0 %v3721
    %3949 = vmatprep.subr.bf16.mxu0 %v3725
    %3950 = vmatpush1.bf16.msra.mxu0 %v3724
    %3951 = vmatprep.mubr.bf16.mxu0 %v3114
    %3952 = vmatmul.mubr.bf16.gmra.mrb[0].mxu0 %v3113
    %v3953 = vpop.f32.mrb[0].mxu0
    %v3954 = vadd.f32 0.0, %v3953
    %v3955 = vpop.f32.mrb[0].mxu0
    %v3956 = vadd.f32 0.0, %v3955
    %v3957 = vpop.f32.mrb[0].mxu0
    %v3958 = vadd.f32 0.0, %v3957
    %v3959 = vpop.f32.mrb[0].mxu0
    %v3960 = vadd.f32 0.0, %v3959
    %3961 = vdwg.mxu0
    %3962 = vmatprep.subr.bf16.mxu0 %v3728
    %3963 = vmatpush1.bf16.msra.mxu0 %v3727
    %3964 = vmatprep.subr.bf16.mxu0 %v3731
    %3965 = vmatpush1.bf16.msra.mxu0 %v3730
    %3966 = vmatprep.subr.bf16.mxu0 %v3734
    %3967 = vmatpush1.bf16.msra.mxu0 %v3733
    %3968 = vmatprep.subr.bf16.mxu0 %v3737
    %3969 = vmatpush1.bf16.msra.mxu0 %v3736
    %3970 = vmatprep.subr.bf16.mxu0 %v3740
    %3971 = vmatpush1.bf16.msra.mxu0 %v3739
    %3972 = vmatprep.subr.bf16.mxu0 %v3743
    %3973 = vmatpush1.bf16.msra.mxu0 %v3742
    %3974 = vmatprep.subr.bf16.mxu0 %v3746
    %3975 = vmatpush1.bf16.msra.mxu0 %v3745
    %3976 = vmatprep.subr.bf16.mxu0 %v3749
    %3977 = vmatpush1.bf16.msra.mxu0 %v3748
    %3978 = vmatprep.subr.bf16.mxu0 %v3752
    %3979 = vmatpush1.bf16.msra.mxu0 %v3751
    %3980 = vmatprep.subr.bf16.mxu0 %v3755
    %3981 = vmatpush1.bf16.msra.mxu0 %v3754
    %3982 = vmatprep.subr.bf16.mxu0 %v3758
    %3983 = vmatpush1.bf16.msra.mxu0 %v3757
    %3984 = vmatprep.subr.bf16.mxu0 %v3761
    %3985 = vmatpush1.bf16.msra.mxu0 %v3760
    %3986 = vmatprep.subr.bf16.mxu0 %v3764
    %3987 = vmatpush1.bf16.msra.mxu0 %v3763
    %3988 = vmatprep.subr.bf16.mxu0 %v3767
    %3989 = vmatpush1.bf16.msra.mxu0 %v3766
    %3990 = vmatprep.subr.bf16.mxu0 %v3770
    %3991 = vmatpush1.bf16.msra.mxu0 %v3769
    %3992 = vmatprep.subr.bf16.mxu0 %v3773
    %3993 = vmatpush1.bf16.msra.mxu0 %v3772
    %3994 = vmatprep.mubr.bf16.mxu0 %v3116
    %3995 = vmatmul.mubr.bf16.gmra.mrb[0].mxu0 %v3115
    %v3996 = vpop.f32.mrb[0].mxu0
    %v3997 = vadd.f32 %v3954, %v3996
    %v3998 = vpop.f32.mrb[0].mxu0
    %v3999 = vadd.f32 %v3956, %v3998
    %v4000 = vpop.f32.mrb[0].mxu0
    %v4001 = vadd.f32 %v3958, %v4000
    %v4002 = vpop.f32.mrb[0].mxu0
    %v4003 = vadd.f32 %v3960, %v4002
    %4004 = vdwg.mxu0
    %4005 = vmatprep.subr.bf16.mxu0 %v3776
    %4006 = vmatpush1.bf16.msra.mxu0 %v3775
    %4007 = vmatprep.subr.bf16.mxu0 %v3779
    %4008 = vmatpush1.bf16.msra.mxu0 %v3778
    %4009 = vmatprep.subr.bf16.mxu0 %v3782
    %4010 = vmatpush1.bf16.msra.mxu0 %v3781
    %4011 = vmatprep.subr.bf16.mxu0 %v3785
    %4012 = vmatpush1.bf16.msra.mxu0 %v3784
    %4013 = vmatprep.subr.bf16.mxu0 %v3788
    %4014 = vmatpush1.bf16.msra.mxu0 %v3787
    %4015 = vmatprep.subr.bf16.mxu0 %v3791
    %4016 = vmatpush1.bf16.msra.mxu0 %v3790
    %4017 = vmatprep.subr.bf16.mxu0 %v3794
    %4018 = vmatpush1.bf16.msra.mxu0 %v3793
    %4019 = vmatprep.subr.bf16.mxu0 %v3797
    %4020 = vmatpush1.bf16.msra.mxu0 %v3796
    %4021 = vmatprep.subr.bf16.mxu0 0
    %4022 = vmatpush1.bf16.msra.mxu0 0
    %4023 = vmatprep.subr.bf16.mxu0 0
    %4024 = vmatpush1.bf16.msra.mxu0 0
    %4025 = vmatprep.subr.bf16.mxu0 0
    %4026 = vmatpush1.bf16.msra.mxu0 0
    %4027 = vmatprep.subr.bf16.mxu0 0
    %4028 = vmatpush1.bf16.msra.mxu0 0
    %4029 = vmatprep.subr.bf16.mxu0 0
    %4030 = vmatpush1.bf16.msra.mxu0 0
    %4031 = vmatprep.subr.bf16.mxu0 0
    %4032 = vmatpush1.bf16.msra.mxu0 0
    %4033 = vmatprep.subr.bf16.mxu0 0
    %4034 = vmatpush1.bf16.msra.mxu0 0
    %4035 = vmatprep.subr.bf16.mxu0 0
    %4036 = vmatpush1.bf16.msra.mxu0 0
    %4037 = vmatprep.mubr.bf16.mxu0 0
    %4038 = vmatmul.mubr.bf16.gmra.mrb[0].mxu0 %v3117
    %v4039 = vpop.f32.mrb[0].mxu0
    %v4040 = vadd.f32 %v3997, %v4039
    %v4041 = vpop.f32.mrb[0].mxu0
    %v4042 = vadd.f32 %v3999, %v4041
    %v4043 = vpop.f32.mrb[0].mxu0
    %v4044 = vadd.f32 %v4001, %v4043
    %v4045 = vpop.f32.mrb[0].mxu0
    %v4046 = vadd.f32 %v4003, %v4045
    %4047 = vdwg.mxu0
    %4048 = vmatprep.subr.bf16.mxu0 0
    %4049 = vmatpush1.bf16.msra.mxu0 %v3681
    %4050 = vmatprep.subr.bf16.mxu0 0
    %4051 = vmatpush1.bf16.msra.mxu0 %v3684
    %4052 = vmatprep.subr.bf16.mxu0 0
    %4053 = vmatpush1.bf16.msra.mxu0 %v3687
    %4054 = vmatprep.subr.bf16.mxu0 0
    %4055 = vmatpush1.bf16.msra.mxu0 %v3690
    %4056 = vmatprep.subr.bf16.mxu0 0
    %4057 = vmatpush1.bf16.msra.mxu0 %v3693
    %4058 = vmatprep.subr.bf16.mxu0 0
    %4059 = vmatpush1.bf16.msra.mxu0 %v3696
    %4060 = vmatprep.subr.bf16.mxu0 0
    %4061 = vmatpush1.bf16.msra.mxu0 %v3699
    %4062 = vmatprep.subr.bf16.mxu0 0
    %4063 = vmatpush1.bf16.msra.mxu0 %v3702
    %4064 = vmatprep.subr.bf16.mxu0 0
    %4065 = vmatpush1.bf16.msra.mxu0 %v3705
    %4066 = vmatprep.subr.bf16.mxu0 0
    %4067 = vmatpush1.bf16.msra.mxu0 %v3708
    %4068 = vmatprep.subr.bf16.mxu0 0
    %4069 = vmatpush1.bf16.msra.mxu0 %v3711
    %4070 = vmatprep.subr.bf16.mxu0 0
    %4071 = vmatpush1.bf16.msra.mxu0 %v3714
    %4072 = vmatprep.subr.bf16.mxu0 0
    %4073 = vmatpush1.bf16.msra.mxu0 %v3717
    %4074 = vmatprep.subr.bf16.mxu0 0
    %4075 = vmatpush1.bf16.msra.mxu0 %v3720
    %4076 = vmatprep.subr.bf16.mxu0 0
    %4077 = vmatpush1.bf16.msra.mxu0 %v3723
    %4078 = vmatprep.subr.bf16.mxu0 0
    %4079 = vmatpush1.bf16.msra.mxu0 %v3726
    %4080 = vmatprep.mubr.bf16.mxu0 %v3114
    %4081 = vmatmul.mubr.bf16.gmra.mrb[0].mxu0 %v3113
    %v4082 = vpop.f32.mrb[0].mxu0
    %v4083 = vadd.f32 0.0, %v4082
    %v4084 = vpop.f32.mrb[0].mxu0
    %v4085 = vpop.f32.mrb[0].mxu0
    %v4086 = vadd.f32 0.0, %v4085
    %v4087 = vpop.f32.mrb[0].mxu0
    %4088 = vdwg.mxu0
    %4089 = vmatprep.subr.bf16.mxu0 0
    %4090 = vmatpush1.bf16.msra.mxu0 %v3729
    %4091 = vmatprep.subr.bf16.mxu0 0
    %4092 = vmatpush1.bf16.msra.mxu0 %v3732
    %4093 = vmatprep.subr.bf16.mxu0 0
    %4094 = vmatpush1.bf16.msra.mxu0 %v3735
    %4095 = vmatprep.subr.bf16.mxu0 0
    %4096 = vmatpush1.bf16.msra.mxu0 %v3738
    %4097 = vmatprep.subr.bf16.mxu0 0
    %4098 = vmatpush1.bf16.msra.mxu0 %v3741
    %4099 = vmatprep.subr.bf16.mxu0 0
    %4100 = vmatpush1.bf16.msra.mxu0 %v3744
    %4101 = vmatprep.subr.bf16.mxu0 0
    %4102 = vmatpush1.bf16.msra.mxu0 %v3747
    %4103 = vmatprep.subr.bf16.mxu0 0
    %4104 = vmatpush1.bf16.msra.mxu0 %v3750
    %4105 = vmatprep.subr.bf16.mxu0 0
    %4106 = vmatpush1.bf16.msra.mxu0 %v3753
    %4107 = vmatprep.subr.bf16.mxu0 0
    %4108 = vmatpush1.bf16.msra.mxu0 %v3756
    %4109 = vmatprep.subr.bf16.mxu0 0
    %4110 = vmatpush1.bf16.msra.mxu0 %v3759
    %4111 = vmatprep.subr.bf16.mxu0 0
    %4112 = vmatpush1.bf16.msra.mxu0 %v3762
    %4113 = vmatprep.subr.bf16.mxu0 0
    %4114 = vmatpush1.bf16.msra.mxu0 %v3765
    %4115 = vmatprep.subr.bf16.mxu0 0
    %4116 = vmatpush1.bf16.msra.mxu0 %v3768
    %4117 = vmatprep.subr.bf16.mxu0 0
    %4118 = vmatpush1.bf16.msra.mxu0 %v3771
    %4119 = vmatprep.subr.bf16.mxu0 0
    %4120 = vmatpush1.bf16.msra.mxu0 %v3774
    %4121 = vmatprep.mubr.bf16.mxu0 %v3116
    %4122 = vmatmul.mubr.bf16.gmra.mrb[0].mxu0 %v3115
    %v4123 = vpop.f32.mrb[0].mxu0
    %v4124 = vadd.f32 %v4083, %v4123
    %v4125 = vpop.f32.mrb[0].mxu0
    %v4126 = vpop.f32.mrb[0].mxu0
    %v4127 = vadd.f32 %v4086, %v4126
    %v4128 = vpop.f32.mrb[0].mxu0
    %4129 = vdwg.mxu0
    %4130 = vmatprep.subr.bf16.mxu0 0
    %4131 = vmatpush1.bf16.msra.mxu0 %v3777
    %4132 = vmatprep.subr.bf16.mxu0 0
    %4133 = vmatpush1.bf16.msra.mxu0 %v3780
    %4134 = vmatprep.subr.bf16.mxu0 0
    %4135 = vmatpush1.bf16.msra.mxu0 %v3783
    %4136 = vmatprep.subr.bf16.mxu0 0
    %4137 = vmatpush1.bf16.msra.mxu0 %v3786
    %4138 = vmatprep.subr.bf16.mxu0 0
    %4139 = vmatpush1.bf16.msra.mxu0 %v3789
    %4140 = vmatprep.subr.bf16.mxu0 0
    %4141 = vmatpush1.bf16.msra.mxu0 %v3792
    %4142 = vmatprep.subr.bf16.mxu0 0
    %4143 = vmatpush1.bf16.msra.mxu0 %v3795
    %4144 = vmatprep.subr.bf16.mxu0 0
    %4145 = vmatpush1.bf16.msra.mxu0 %v3798
    %4146 = vmatprep.subr.bf16.mxu0 0
    %4147 = vmatpush1.bf16.msra.mxu0 0
    %4148 = vmatprep.subr.bf16.mxu0 0
    %4149 = vmatpush1.bf16.msra.mxu0 0
    %4150 = vmatprep.subr.bf16.mxu0 0
    %4151 = vmatpush1.bf16.msra.mxu0 0
    %4152 = vmatprep.subr.bf16.mxu0 0
    %4153 = vmatpush1.bf16.msra.mxu0 0
    %4154 = vmatprep.subr.bf16.mxu0 0
    %4155 = vmatpush1.bf16.msra.mxu0 0
    %4156 = vmatprep.subr.bf16.mxu0 0
    %4157 = vmatpush1.bf16.msra.mxu0 0
    %4158 = vmatprep.subr.bf16.mxu0 0
    %4159 = vmatpush1.bf16.msra.mxu0 0
    %4160 = vmatprep.subr.bf16.mxu0 0
    %4161 = vmatpush1.bf16.msra.mxu0 0
    %4162 = vmatprep.mubr.bf16.mxu0 0
    %4163 = vmatmul.mubr.bf16.gmra.mrb[0].mxu0 %v3117
    %v4164 = vpop.f32.mrb[0].mxu0
    %v4165 = vadd.f32 %v4124, %v4164
    %v4166 = vpop.f32.mrb[0].mxu0
    %v4167 = vpop.f32.mrb[0].mxu0
    %v4168 = vadd.f32 %v4127, %v4167
    %v4169 = vpop.f32.mrb[0].mxu0
    %4170 = vdwg.mxu0
    %v4171 = vadd.f32 %v2505, %v4040
    %v4172 = vadd.f32 %v2508, %v4044
    %v4173 = vmul.f32 %v2062, %v4042
    %v4174 = vmul.f32 %v2067, %v4046
    %v4175 = vadd.f32 %v4171, %v4173
    %v4176 = vadd.f32 %v4172, %v4174
    %v4177 = vmul.f32 %v2076, %v4165
    %v4178 = vmul.f32 %v2081, %v4168
    %v4179 = vadd.f32 %v4175, %v4177
    %v4180 = vadd.f32 %v4176, %v4178
    %s4181 = scalar_lea.vmem %s11, 1
    %v4182 = vld [vmem:[%s4181] sm:$0x1]
    %v4184 = vlaneseq
    %v4185 = vshrl.u32 %v4184, 7
    %v4186 = vsub.s32 0, %v4185
    %v4187 = vrot.slane %v4182, %v4186
    %v4189 = vadd.f32 %v4179, %v4187
    %v4190 = vadd.f32 %v4180, %v4187
    %v4191 = vpack.c.bf16 %v4190, %v4189
    %s4192 = scalar_lea.vmem %s12, 64
    %v4193 = vld [vmem:[%s4192] sm:$0xf]
    %v4194 = vld [vmem:[%s4192 + $0x4] sm:$0xf]
    %v4195 = vld [vmem:[%s4192 + $0x8] sm:$0xf]
    %v4196 = vld [vmem:[%s4192 + $0xc] sm:$0xf]
    %v4197 = vld [vmem:[%s4192 + $0x10] sm:$0xf]
    %v4198 = vld [vmem:[%s4192 + $0x14] sm:$0xf]
    %v4199 = vld [vmem:[%s4192 + $0x18] sm:$0xf]
    %v4200 = vld [vmem:[%s4192 + $0x1c] sm:$0xf]
    %v4201 = vld [vmem:[%s4192 + $0x20] sm:$0xf]
    %v4202 = vld [vmem:[%s4192 + $0x24] sm:$0xf]
    %v4203 = vld [vmem:[%s4192 + $0x28] sm:$0xf]
    %v4204 = vld [vmem:[%s4192 + $0x2c] sm:$0xf]
    %v4205 = vld [vmem:[%s4192 + $0x30] sm:$0xf]
    %v4206 = vld [vmem:[%s4192 + $0x34] sm:$0xf]
    %v4207 = vld [vmem:[%s4192 + $0x38] sm:$0xf]
    %v4208 = vld [vmem:[%s4192 + $0x3c] sm:$0xf]
    %s4209 = scalar_lea.vmem %s13, 1
    %v4210 = vld [vmem:[%s4209] sm:$0x1]
    %v4212 = vlaneseq
    %v4213 = vshrl.u32 %v4212, 7
    %v4214 = vsub.s32 0, %v4213
    %v4215 = vrot.slane %v4210, %v4214
    %v4233 = vunpack.c.l.b16 %v4193
    %v4234 = vunpack.c.l.b16 %v4194
    %v4235 = vunpack.c.l.b16 %v4195
    %v4236 = vunpack.c.l.b16 %v4196
    %v4237 = vunpack.c.l.b16 %v4197
    %v4238 = vunpack.c.l.b16 %v4198
    %v4239 = vunpack.c.l.b16 %v4199
    %v4240 = vunpack.c.l.b16 %v4200
    %v4241 = vunpack.c.l.b16 %v4201
    %v4242 = vunpack.c.l.b16 %v4202
    %v4243 = vunpack.c.l.b16 %v4203
    %v4244 = vunpack.c.l.b16 %v4204
    %v4245 = vunpack.c.l.b16 %v4205
    %v4246 = vunpack.c.l.b16 %v4206
    %v4247 = vunpack.c.l.b16 %v4207
    %v4248 = vunpack.c.l.b16 %v4208
    %v4249 = vpack.c.b16 %v4234, %v4233
    %v4250 = vpack.c.b16 %v4236, %v4235
    %v4251 = vpack.c.b16 %v4238, %v4237
    %v4252 = vpack.c.b16 %v4240, %v4239
    %v4253 = vpack.c.b16 %v4242, %v4241
    %v4254 = vpack.c.b16 %v4244, %v4243
    %v4255 = vpack.c.b16 %v4246, %v4245
    %v4256 = vpack.c.b16 %v4248, %v4247
    %4265 = vmatprep.subr.bf16.mxu0 0
    %4266 = vmatpush1.bf16.msra.mxu0 %v4249
    %4267 = vmatprep.subr.bf16.mxu0 0
    %4268 = vmatpush1.bf16.msra.mxu0 %v4250
    %4269 = vmatprep.subr.bf16.mxu0 0
    %4270 = vmatpush1.bf16.msra.mxu0 %v4251
    %4271 = vmatprep.subr.bf16.mxu0 0
    %4272 = vmatpush1.bf16.msra.mxu0 %v4252
    %4273 = vmatprep.subr.bf16.mxu0 0
    %4274 = vmatpush1.bf16.msra.mxu0 %v4253
    %4275 = vmatprep.subr.bf16.mxu0 0
    %4276 = vmatpush1.bf16.msra.mxu0 %v4254
    %4277 = vmatprep.subr.bf16.mxu0 0
    %4278 = vmatpush1.bf16.msra.mxu0 %v4255
    %4279 = vmatprep.subr.bf16.mxu0 0
    %4280 = vmatpush1.bf16.msra.mxu0 %v4256
    %4281 = vmatprep.subr.bf16.mxu0 0
    %4282 = vmatpush1.bf16.msra.mxu0 0
    %4283 = vmatprep.subr.bf16.mxu0 0
    %4284 = vmatpush1.bf16.msra.mxu0 0
    %4285 = vmatprep.subr.bf16.mxu0 0
    %4286 = vmatpush1.bf16.msra.mxu0 0
    %4287 = vmatprep.subr.bf16.mxu0 0
    %4288 = vmatpush1.bf16.msra.mxu0 0
    %4289 = vmatprep.subr.bf16.mxu0 0
    %4290 = vmatpush1.bf16.msra.mxu0 0
    %4291 = vmatprep.subr.bf16.mxu0 0
    %4292 = vmatpush1.bf16.msra.mxu0 0
    %4293 = vmatprep.subr.bf16.mxu0 0
    %4294 = vmatpush1.bf16.msra.mxu0 0
    %4295 = vmatprep.subr.bf16.mxu0 0
    %4296 = vmatpush1.bf16.msra.mxu0 0
    %4297 = vmatprep.mubr.bf16.mxu0 0
    %4298 = vmatmul.mubr.bf16.gmra.mrb[0].mxu0 %v4191
    %v4299 = vpop.f32.mrb[0].mxu0
    %v4300 = vadd.f32 %v4215, %v4299
    %v4301 = vpop.f32.mrb[0].mxu0
    %v4302 = vpop.f32.mrb[0].mxu0
    %v4303 = vadd.f32 %v4215, %v4302
    %v4304 = vpop.f32.mrb[0].mxu0
    %4305 = vdwg.mxu0
    %v4306 = vmul.f32 %v4300, %v2212
    %v4307 = vmul.f32 %v4303, %v2217
    %v4308 = vadd.f32 %v4306, %v4307
    %v4309 = vrot.slane %v4308, 4
    %v4310 = vadd.f32 %v4308, %v4309
    %v4311 = vrot.slane %v4310, 2
    %v4312 = vadd.f32 %v4310, %v4311
    %v4313 = vrot.slane %v4312, 1
    %v4314 = vadd.f32 %v4312, %v4313
    %v4315 = vsub.f32 %v4300, %v4314
    %v4316 = vsub.f32 %v4303, %v4314
    %v4317 = vmul.f32 %v2212, %v4315
    %v4318 = vmul.f32 %v2217, %v4316
    %v4319 = vmul.f32 %v4317, %v4315
    %v4320 = vmul.f32 %v4318, %v4316
    %v4321 = vadd.f32 %v4319, %v4320
    %v4322 = vrot.slane %v4321, 4
    %v4323 = vadd.f32 %v4321, %v4322
    %v4324 = vrot.slane %v4323, 2
    %v4325 = vadd.f32 %v4323, %v4324
    %v4326 = vrot.slane %v4325, 1
    %v4327 = vadd.f32 %v4325, %v4326
    %v4328 = vadd.f32 %v4327, 1e-05
    %v4329 = vrsqrt.pop %v4328
    %v4330 = vmul.f32 %v4315, %v4329
    %v4331 = vmul.f32 %v4316, %v4329
    %s4332 = scalar_lea.vmem %s14, 1
    %v4333 = vld [vmem:[%s4332] sm:$0x1]
    %v4335 = vlaneseq
    %v4336 = vshrl.u32 %v4335, 7
    %v4337 = vsub.s32 0, %v4336
    %v4338 = vrot.slane %v4333, %v4337
    %v4340 = vmul.f32 %v4330, %v4338
    %v4341 = vmul.f32 %v4331, %v4338
    %s4342 = scalar_lea.vmem %s15, 1
    %v4343 = vld [vmem:[%s4342] sm:$0x1]
    %v4345 = vlaneseq
    %v4346 = vshrl.u32 %v4345, 7
    %v4347 = vsub.s32 0, %v4346
    %v4348 = vrot.slane %v4343, %v4347
    %v4350 = vadd.f32 %v4340, %v4348
    %v4351 = vadd.f32 %v4341, %v4348
    %v4352 = vmax.f32 %v4350, 0.0
    %v4353 = vmax.f32 %v4351, 0.0
    %v4354 = vld [vmem:[%s7] sm:$0x3]
    %v4356 = vsel %vm379, %v4354, 0
    %4358 = vmatprep.subr.mxu0 0.0
    %4359 = vmatpush1.msra.mxu0 %v4352
    %4360 = vmatprep.subr.mxu0 0.0
    %4361 = vmatpush1.msra.mxu0 %v4353
    %4362 = vmatprep.subr.mxu0 0.0
    %4363 = vmatpush1.msra.mxu0 0.0
    %4364 = vmatprep.subr.mxu0 0.0
    %4365 = vmatpush1.msra.mxu0 0.0
    %4366 = vmatprep.subr.mxu0 0.0
    %4367 = vmatpush1.msra.mxu0 0.0
    %4368 = vmatprep.subr.mxu0 0.0
    %4369 = vmatpush1.msra.mxu0 0.0
    %4370 = vmatprep.subr.mxu0 0.0
    %4371 = vmatpush1.msra.mxu0 0.0
    %4372 = vmatprep.subr.mxu0 0.0
    %4373 = vmatpush1.msra.mxu0 0.0
    %4374 = vmatprep.subr.mxu0 0.0
    %4375 = vmatpush1.msra.mxu0 0.0
    %4376 = vmatprep.subr.mxu0 0.0
    %4377 = vmatpush1.msra.mxu0 0.0
    %4378 = vmatprep.subr.mxu0 0.0
    %4379 = vmatpush1.msra.mxu0 0.0
    %4380 = vmatprep.subr.mxu0 0.0
    %4381 = vmatpush1.msra.mxu0 0.0
    %4382 = vmatprep.subr.mxu0 0.0
    %4383 = vmatpush1.msra.mxu0 0.0
    %4384 = vmatprep.subr.mxu0 0.0
    %4385 = vmatpush1.msra.mxu0 0.0
    %4386 = vmatprep.subr.mxu0 0.0
    %4387 = vmatpush1.msra.mxu0 0.0
    %4388 = vmatprep.subr.mxu0 0.0
    %4389 = vmatpush1.msra.mxu0 0.0
    %4390 = vmatprep.subr.mxu0 0.0
    %4391 = vmatpush1.msra.mxu0 0.0
    %4392 = vmatprep.subr.mxu0 0.0
    %4393 = vmatpush1.msra.mxu0 0.0
    %4394 = vmatprep.subr.mxu0 0.0
    %4395 = vmatpush1.msra.mxu0 0.0
    %4396 = vmatprep.subr.mxu0 0.0
    %4397 = vmatpush1.msra.mxu0 0.0
    %4398 = vmatprep.subr.mxu0 0.0
    %4399 = vmatpush1.msra.mxu0 0.0
    %4400 = vmatprep.subr.mxu0 0.0
    %4401 = vmatpush1.msra.mxu0 0.0
    %4402 = vmatprep.subr.mxu0 0.0
    %4403 = vmatpush1.msra.mxu0 0.0
    %4404 = vmatprep.subr.mxu0 0.0
    %4405 = vmatpush1.msra.mxu0 0.0
    %4406 = vmatprep.subr.mxu0 0.0
    %4407 = vmatpush1.msra.mxu0 0.0
    %4408 = vmatprep.subr.mxu0 0.0
    %4409 = vmatpush1.msra.mxu0 0.0
    %4410 = vmatprep.subr.mxu0 0.0
    %4411 = vmatpush1.msra.mxu0 0.0
    %4412 = vmatprep.subr.mxu0 0.0
    %4413 = vmatpush1.msra.mxu0 0.0
    %4414 = vmatprep.subr.mxu0 0.0
    %4415 = vmatpush1.msra.mxu0 0.0
    %4416 = vmatprep.subr.mxu0 0.0
    %4417 = vmatpush1.msra.mxu0 0.0
    %4418 = vmatprep.subr.mxu0 0.0
    %4419 = vmatpush1.msra.mxu0 0.0
    %4420 = vmatprep.subr.mxu0 0.0
    %4421 = vmatpush1.msra.mxu0 0.0
    %4422 = vmatprep.mubr.f32.mxu0 0.0
    %4423 = vmatmul.mubr.f32.gmra.mrb[0].mxu0 %v4356
    %v4424 = vpop.f32.mrb[0].mxu0
    %v4425 = vadd.f32 0.0, %v4424
    %v4426 = vpop.f32.mrb[0].mxu0
    %4427 = vdwg.mxu0
    %v4428 = vld [vmem:[%s16] sm:$0xff]
    %v4429 = vld [vmem:[%s16 + $0x8] sm:$0xff]
    %v4430 = vld [vmem:[%s16 + $0x10] sm:$0xff]
    %v4431 = vld [vmem:[%s16 + $0x18] sm:$0xff]
    %v4432 = vld [vmem:[%s16 + $0x20] sm:$0xff]
    %v4433 = vld [vmem:[%s16 + $0x28] sm:$0xff]
    %v4434 = vld [vmem:[%s16 + $0x30] sm:$0xff]
    %v4435 = vld [vmem:[%s16 + $0x38] sm:$0xff]
    %v4436 = vld [vmem:[%s16 + $0x40] sm:$0xff]
    %v4437 = vld [vmem:[%s16 + $0x48] sm:$0xff]
    %v4438 = vld [vmem:[%s16 + $0x50] sm:$0xff]
    %v4439 = vld [vmem:[%s16 + $0x58] sm:$0xff]
    %v4440 = vld [vmem:[%s16 + $0x60] sm:$0xff]
    %v4441 = vld [vmem:[%s16 + $0x68] sm:$0xff]
    %v4442 = vld [vmem:[%s16 + $0x70] sm:$0xff]
    %v4443 = vld [vmem:[%s16 + $0x78] sm:$0xff]
    %v4444 = vld [vmem:[#allocation4] sm:$0x1]
    %v4446 = vlaneseq
    %v4447 = vshrl.u32 %v4446, 7
    %v4448 = vsub.s32 0, %v4447
    %v4449 = vrot.slane %v4444, %v4448
    %4451 = vmatprep.subr.mxu0 0.0
    %4452 = vmatpush1.msra.mxu0 %v4428
    %4453 = vmatprep.subr.mxu0 0.0
    %4454 = vmatpush1.msra.mxu0 %v4429
    %4455 = vmatprep.subr.mxu0 0.0
    %4456 = vmatpush1.msra.mxu0 %v4430
    %4457 = vmatprep.subr.mxu0 0.0
    %4458 = vmatpush1.msra.mxu0 %v4431
    %4459 = vmatprep.subr.mxu0 0.0
    %4460 = vmatpush1.msra.mxu0 %v4432
    %4461 = vmatprep.subr.mxu0 0.0
    %4462 = vmatpush1.msra.mxu0 %v4433
    %4463 = vmatprep.subr.mxu0 0.0
    %4464 = vmatpush1.msra.mxu0 %v4434
    %4465 = vmatprep.subr.mxu0 0.0
    %4466 = vmatpush1.msra.mxu0 %v4435
    %4467 = vmatprep.subr.mxu0 0.0
    %4468 = vmatpush1.msra.mxu0 %v4436
    %4469 = vmatprep.subr.mxu0 0.0
    %4470 = vmatpush1.msra.mxu0 %v4437
    %4471 = vmatprep.subr.mxu0 0.0
    %4472 = vmatpush1.msra.mxu0 %v4438
    %4473 = vmatprep.subr.mxu0 0.0
    %4474 = vmatpush1.msra.mxu0 %v4439
    %4475 = vmatprep.subr.mxu0 0.0
    %4476 = vmatpush1.msra.mxu0 %v4440
    %4477 = vmatprep.subr.mxu0 0.0
    %4478 = vmatpush1.msra.mxu0 %v4441
    %4479 = vmatprep.subr.mxu0 0.0
    %4480 = vmatpush1.msra.mxu0 %v4442
    %4481 = vmatprep.subr.mxu0 0.0
    %4482 = vmatpush1.msra.mxu0 %v4443
    %4483 = vmatprep.subr.mxu0 0.0
    %4484 = vmatpush1.msra.mxu0 0.0
    %4485 = vmatprep.subr.mxu0 0.0
    %4486 = vmatpush1.msra.mxu0 0.0
    %4487 = vmatprep.subr.mxu0 0.0
    %4488 = vmatpush1.msra.mxu0 0.0
    %4489 = vmatprep.subr.mxu0 0.0
    %4490 = vmatpush1.msra.mxu0 0.0
    %4491 = vmatprep.subr.mxu0 0.0
    %4492 = vmatpush1.msra.mxu0 0.0
    %4493 = vmatprep.subr.mxu0 0.0
    %4494 = vmatpush1.msra.mxu0 0.0
    %4495 = vmatprep.subr.mxu0 0.0
    %4496 = vmatpush1.msra.mxu0 0.0
    %4497 = vmatprep.subr.mxu0 0.0
    %4498 = vmatpush1.msra.mxu0 0.0
    %4499 = vmatprep.subr.mxu0 0.0
    %4500 = vmatpush1.msra.mxu0 0.0
    %4501 = vmatprep.subr.mxu0 0.0
    %4502 = vmatpush1.msra.mxu0 0.0
    %4503 = vmatprep.subr.mxu0 0.0
    %4504 = vmatpush1.msra.mxu0 0.0
    %4505 = vmatprep.subr.mxu0 0.0
    %4506 = vmatpush1.msra.mxu0 0.0
    %4507 = vmatprep.subr.mxu0 0.0
    %4508 = vmatpush1.msra.mxu0 0.0
    %4509 = vmatprep.subr.mxu0 0.0
    %4510 = vmatpush1.msra.mxu0 0.0
    %4511 = vmatprep.subr.mxu0 0.0
    %4512 = vmatpush1.msra.mxu0 0.0
    %4513 = vmatprep.subr.mxu0 0.0
    %4514 = vmatpush1.msra.mxu0 0.0
    %4515 = vmatprep.mubr.f32.mxu0 0.0
    %4516 = vmatmul.mubr.f32.gmra.mrb[0].mxu0 %v4425
    %v4517 = vpop.f32.mrb[0].mxu0
    %v4518 = vadd.f32 %v4449, %v4517
    %v4519 = vpop.f32.mrb[0].mxu0
    %4520 = vdwg.mxu0
    %vm4521 = vcmask 1024
    %4522 = vst.msk [vmem:[%s18] sm:$0x3] %vm4521, %v4518
    // Predicated region
    $region82: #{tpu_custom_call.1} parent=1 // pred_check
      _
    $region83: #{tpu_custom_call.1} parent=1 // pred_check_branch
      %4524 = sbr.rel (0) target = $region85
    $region84: #{tpu_custom_call.1} parent=1 // pred_region
      _
    $region85: #{tpu_custom_call.1} parent=1 // pred_fallthru
      _
    // Predicated region
    $region86: #{tpu_custom_call.1} parent=1 // pred_check
      _
    $region87: #{tpu_custom_call.1} parent=1 // pred_check_branch
      %4526 = sbr.rel (0) target = $region89
    $region88: #{tpu_custom_call.1} parent=1 // pred_region
      _
    $region89: #{tpu_custom_call.1} parent=1 // pred_fallthru
      _
    %4527 = vsyncpa [#allocation6], 1
    %4528 = vsyncpa [#allocation8], 1

</llo_original>
